<compile_context>
chip_gen: v7x
topology: tpu7x:2x2x1
jax: 0.10.0
libtpu: 0.0.40
codegen_flags: <defaults>
</compile_context>

<pallas_src>
import functools

import jax
import jax.numpy as jnp
import numpy as np
from jax.experimental import pallas as pl
from jax.experimental.pallas import tpu as pltpu


# ----------------------------- Pallas kernel --------------------------------
def _nlsa_kernel(x_ref, wqkv_ref, bqkv_ref, wproj_ref, bproj_ref, rpb_ref, o_ref,
                 *, tile_b: int, seq: int, dim: int, num_heads: int, head_dim: int):
    # x_ref: (tile_b*seq, dim) bf16; weights are bf16, biases/rpb f32, grid-invariant blocks.
    M = tile_b * seq

    # Fused QKV projection for all windows in this tile (qk scale folded into Q columns).
    # Bias add in f32, then a single cast to bf16 -> halves the largest live intermediate.
    qkv = (jnp.dot(x_ref[...], wqkv_ref[...], preferred_element_type=jnp.float32)
           + bqkv_ref[...]).astype(jnp.bfloat16)                          # (M, 3C) bf16
    qkv3 = qkv.reshape(tile_b, seq, 3 * dim)                              # (b, N, 3C)

    # TODO(synk): at real Swin head counts, fuse this per-head loop into one batched
    # contraction with batch = tile_b*num_heads (single relayout instead of 3*H lane slices).
    o_heads = []
    for h in range(num_heads):
        qs = h * head_dim
        q_h = qkv3[:, :, qs:qs + head_dim]                                # (b, N, hd) bf16
        k_h = qkv3[:, :, dim + qs:dim + qs + head_dim]                    # (b, N, hd) bf16
        v_h = qkv3[:, :, 2 * dim + qs:2 * dim + qs + head_dim]            # (b, N, hd) bf16

        # Batched QK^T over the tile of windows; contraction over last dims (no .T).
        s = jnp.einsum('bqd,bkd->bqk', q_h, k_h,
                       preferred_element_type=jnp.float32)                # (b, N, N) f32
        s = s + rpb_ref[h]                                                # rel-pos bias

        # softmax along last axis, in f32
        s = s - jnp.max(s, axis=-1, keepdims=True)
        p = jnp.exp(s)
        p = p * pl.reciprocal(jnp.sum(p, axis=-1, keepdims=True), approx=True)

        # attention @ V, still batched over windows
        o_h = jnp.einsum('bqk,bkd->bqd', p.astype(jnp.bfloat16), v_h,
                         preferred_element_type=jnp.float32)              # (b, N, hd) f32
        o_heads.append(o_h.astype(jnp.bfloat16))

    # Head concat at lane offsets -> one fused (M, C) x (C, C) output projection (single
    # MXU push with K=C instead of num_heads fill-dominated K=head_dim matmuls).
    o_all = jnp.concatenate(o_heads, axis=-1).reshape(M, dim)             # (M, C) bf16
    out = jnp.dot(o_all, wproj_ref[...], preferred_element_type=jnp.float32) + bproj_ref[...]

    # TODO(synk): with C < 128 this store is lane-masked; a lane-dense (tile_b, N*C) output
    # layout (or bf16 output) would halve/clean the writeback -- measure the in-kernel
    # relayout cost before committing. Kept f32 (M, C) for forward-pass fidelity.
    o_ref[...] = out.astype(o_ref.dtype)


# --------------------------- sizing / heuristics -----------------------------
def _tpu_vmem_capacity_bytes() -> int:
    try:
        return int(pltpu.get_tpu_info().vmem_capacity_bytes)
    except Exception:
        return 64 * 1024 * 1024   # conservative (v7x per-TC size)


def _pick_tile_b(B_: int, N: int, C: int, num_heads: int) -> int:
    """Largest tile_b that (a) divides B_, (b) keeps >= 4 grid steps when possible so both
    TensorCores get >= 2 steps each (pipeline overlap), (c) fits a per-chip VMEM budget."""
    vmem_cap = _tpu_vmem_capacity_bytes()
    budget = vmem_cap // 2                                     # leave headroom for compiler
    # single-buffered weights / biases / rpb
    weights_bytes = C * 3 * C * 2 + 3 * C * 4 + C * C * 2 + C * 4 + num_heads * N * N * 4
    # per window: x bf16 (x2 bufs) + out f32 (x2 bufs) + qkv bf16 + o_all bf16 + out f32,
    # plus per-head score/prob tensors (f32 + bf16).
    per_window = N * C * (2 * 2 + 4 * 2 + 6 + 2 + 4) + num_heads * N * N * 6
    cap = max(1, (budget - weights_bytes) // max(1, per_window))

    divisors = [d for d in range(1, B_ + 1)
                if B_ % d == 0 and ((d * N) % 8 == 0 or d == B_)]
    if not divisors:
        return B_
    target_steps = 4 if B_ >= 4 else max(1, B_)
    cands = [d for d in divisors if d <= cap and B_ // d >= target_steps]
    if not cands:
        cands = [d for d in divisors if d <= cap] or [min(divisors)]
    return max(cands)


# ------------------------------- wrapper -------------------------------------
def nlsa_pallas(x, wqkv, bqkv, wproj, bproj, rpb, *, num_heads: int, scale: float,
                tile_b: int | None = None):
    B_, N, C = x.shape
    head_dim = C // num_heads

    if tile_b is None:
        tile_b = _pick_tile_b(B_, N, C, num_heads)
    assert B_ % tile_b == 0, "tile_b must divide B_"
    tile_rows = tile_b * N
    # TODO(synk): at real Swin sizes (N=49) pad N up to a multiple of 8 in the wrapper
    # (masked bias rows) so score tensors / rpb tile cleanly on (8,128) boundaries.

    # Fold the qk scale into the Q columns of the qkv projection (one-time constant fold);
    # weights go to bf16 (MXU-native, half the DMA/VMEM bytes), biases stay f32.
    col_scale = jnp.concatenate([jnp.full((C,), scale, jnp.float32),
                                 jnp.ones((2 * C,), jnp.float32)])
    wqkv_s = (wqkv * col_scale[None, :]).astype(jnp.bfloat16)
    bqkv_s = (bqkv * col_scale[None, :]).astype(jnp.float32)
    wproj_b = wproj.astype(jnp.bfloat16)

    x_flat = x.astype(jnp.bfloat16).reshape(B_ * N, C)

    kernel = functools.partial(_nlsa_kernel, tile_b=tile_b, seq=N, dim=C,
                               num_heads=num_heads, head_dim=head_dim)

    # advisory cost estimate for the XLA scheduler
    flops = B_ * (2 * N * C * (3 * C) + 4 * N * N * C + 2 * N * C * C)
    bytes_accessed = (B_ * N * C * (2 + 4)                       # x (bf16) + out (f32)
                      + C * 3 * C * 2 + C * C * 2                # bf16 weights
                      + 3 * C * 4 + C * 4 + num_heads * N * N * 4)
    cost = pl.CostEstimate(flops=int(flops),
                           transcendentals=int(B_ * num_heads * N * N),
                           bytes_accessed=int(bytes_accessed))

    vmem_cap = _tpu_vmem_capacity_bytes()
    vmem_limit = min(int(vmem_cap * 3 // 4), 128 * 1024 * 1024)  # above the 16/32 MiB default

    def run(use_buffered: bool):
        def const_spec(shape):
            idx_map = lambda b: (0,) * len(shape)   # noqa: E731  (grid-invariant block)
            if use_buffered:
                # single-buffer grid-invariant operands -> no pointless double-buffer VMEM
                return pl.BlockSpec(shape, idx_map, pipeline_mode=pl.Buffered(1))
            return pl.BlockSpec(shape, idx_map)

        call = pl.pallas_call(
            kernel,
            out_shape=jax.ShapeDtypeStruct((B_ * N, C), jnp.float32),
            grid=(B_ // tile_b,),
            in_specs=[
                pl.BlockSpec((tile_rows, C), lambda b: (b, 0)),   # x (flattened rows)
                const_spec((C, 3 * C)),                           # W_qkv (bf16)
                const_spec((1, 3 * C)),                           # b_qkv
                const_spec((C, C)),                               # W_proj (bf16)
                const_spec((1, C)),                               # b_proj
                const_spec((num_heads, N, N)),                    # relative position bias
            ],
            out_specs=pl.BlockSpec((tile_rows, C), lambda b: (b, 0)),
            compiler_params=pltpu.CompilerParams(
                dimension_semantics=("parallel",),
                vmem_limit_bytes=vmem_limit),
            cost_estimate=cost,
        )
        return jax.block_until_ready(call(x_flat, wqkv_s, bqkv_s, wproj_b, bproj, rpb))

    try:
        out_flat = run(use_buffered=True)
    except Exception:
        # pipeline_mode=pl.Buffered(1) unsupported on this jax/backend -> default buffering
        out_flat = run(use_buffered=False)

    return out_flat.reshape(B_, N, C)


# ------------------------ parameter / bias construction ----------------------
def make_relative_position_index(window_size):
    Wh, Ww = window_size
    coords_h = np.arange(Wh)
    coords_w = np.arange(Ww)
    coords = np.stack(np.meshgrid(coords_h, coords_w, indexing="ij"))    # (2, Wh, Ww)
    coords_flatten = coords.reshape(2, -1)                               # (2, N)
    relative_coords = coords_flatten[:, :, None] - coords_flatten[:, None, :]  # (2, N, N)
    relative_coords = relative_coords.transpose(1, 2, 0)                 # (N, N, 2)
    relative_coords[:, :, 0] += Wh - 1
    relative_coords[:, :, 1] += Ww - 1
    relative_coords[:, :, 0] *= 2 * Ww - 1
    return relative_coords.sum(-1)                                       # (N, N)


def init_params(key, dim, window_size, num_heads):
    Wh, Ww = window_size
    k1, k2, k3, k4, k5 = jax.random.split(key, 5)
    # deterministic synthetic init (not a checkpoint load)
    wqkv = jax.random.normal(k1, (dim, 3 * dim), jnp.float32) * 0.05
    bqkv = jax.random.normal(k2, (1, 3 * dim), jnp.float32) * 0.01
    wproj = jax.random.normal(k3, (dim, dim), jnp.float32) * 0.05
    bproj = jax.random.normal(k4, (1, dim), jnp.float32) * 0.01
    # relative_position_bias_table ~ trunc_normal(std=0.02); plain normal*0.02 is fine here
    table = jax.random.normal(k5, ((2 * Wh - 1) * (2 * Ww - 1), num_heads), jnp.float32) * 0.02
    rpi = jnp.asarray(make_relative_position_index(window_size))         # (N, N)
    N = Wh * Ww
    rpb = table[rpi.reshape(-1)].reshape(N, N, num_heads)                # (N, N, H)
    rpb = jnp.transpose(rpb, (2, 0, 1))                                  # (H, N, N)
    return wqkv, bqkv, wproj, bproj, rpb


# ------------------------------ JAX reference --------------------------------
def nlsa_ref(x, wqkv, bqkv, wproj, bproj, rpb, *, num_heads, scale):
    B_, N, C = x.shape
    hd = C // num_heads
    qkv = x @ wqkv + bqkv[0]                                   # (B_, N, 3C)
    qkv = qkv.reshape(B_, N, 3, num_heads, hd).transpose(2, 0, 3, 1, 4)
    q, k, v = qkv[0], qkv[1], qkv[2]                           # (B_, H, N, hd)
    attn = (q * scale) @ jnp.swapaxes(k, -2, -1)               # (B_, H, N, N)
    attn = attn + rpb[None]
    attn = jax.nn.softmax(attn, axis=-1)
    out = (attn @ v).transpose(0, 2, 1, 3).reshape(B_, N, C)
    return out @ wproj + bproj[0]


# ----------------------------------- main ------------------------------------
if __name__ == "__main__":
    dim = 32
    num_heads = 4
    window_size = (4, 4)
    N = window_size[0] * window_size[1]      # 16
    B_ = 8                                   # num_windows * batch
    head_dim = dim // num_heads
    scale = head_dim ** (-0.5)

    key = jax.random.PRNGKey(0)
    kx, kp = jax.random.split(key)
    x = jax.random.normal(kx, (B_, N, dim), jnp.float32)
    wqkv, bqkv, wproj, bproj, rpb = init_params(kp, dim, window_size, num_heads)

    out = nlsa_pallas(x, wqkv, bqkv, wproj, bproj, rpb,
                      num_heads=num_heads, scale=scale)
    out = jax.block_until_ready(out)

    ref = nlsa_ref(x, wqkv, bqkv, wproj, bproj, rpb, num_heads=num_heads, scale=scale)
    # bf16 matmul operands (x, W_qkv, W_proj, P, V) + approx reciprocal; accumulation and
    # softmax stay f32, so ~1e-2 relative error bound -> 3e-2 tolerance.
    assert jnp.allclose(out, ref, atol=3e-2, rtol=3e-2), "mismatch vs JAX reference"

    # TODO(synk): mask branch (mask is not None) not implemented; module is exercised with mask=None.
    print("KERNEL_OK")
</pallas_src>

<mosaic_0001>
module attributes {stable_mosaic.version = 11 : i64} {
  func.func @_nlsa_kernel(%arg0: i32, %arg1: memref<32x32xbf16, #tpu.memory_space<vmem>>, %arg2: memref<32x96xbf16, #tpu.memory_space<vmem>>, %arg3: memref<1x96xf32, #tpu.memory_space<vmem>>, %arg4: memref<32x32xbf16, #tpu.memory_space<vmem>>, %arg5: memref<1x32xf32, #tpu.memory_space<vmem>>, %arg6: memref<4x16x16xf32, #tpu.memory_space<vmem>>, %arg7: memref<32x32xf32, #tpu.memory_space<vmem>>) attributes {dimension_semantics = [#tpu.dimension_semantics<parallel>], iteration_bounds = array<i64: 4>, scalar_prefetch = 0 : i64, scratch_operands = 0 : i64, tpu.core_type = #tpu.core_type<tc>, window_params = [{transform_indices = @transform_0, window_bounds = array<i64: 32, 32>}, {pipeline_mode = #tpu.pipeline_mode<synchronous>, transform_indices = @transform_1, window_bounds = array<i64: 32, 96>}, {pipeline_mode = #tpu.pipeline_mode<synchronous>, transform_indices = @transform_2, window_bounds = array<i64: 1, 96>}, {pipeline_mode = #tpu.pipeline_mode<synchronous>, transform_indices = @transform_3, window_bounds = array<i64: 32, 32>}, {pipeline_mode = #tpu.pipeline_mode<synchronous>, transform_indices = @transform_4, window_bounds = array<i64: 1, 32>}, {pipeline_mode = #tpu.pipeline_mode<synchronous>, transform_indices = @transform_5, window_bounds = array<i64: 4, 16, 16>}, {transform_indices = @transform_6, window_bounds = array<i64: 32, 32>}]} {
    %c0 = arith.constant 0 : index
    %c0_0 = arith.constant 0 : index
    %0 = vector.load %arg1[%c0, %c0_0] : memref<32x32xbf16, #tpu.memory_space<vmem>>, vector<32x32xbf16>
    %c0_1 = arith.constant 0 : index
    %c0_2 = arith.constant 0 : index
    %1 = vector.load %arg2[%c0_1, %c0_2] : memref<32x96xbf16, #tpu.memory_space<vmem>>, vector<32x96xbf16>
    %cst = arith.constant dense<0.000000e+00> : vector<32x96xf32>
    %2 = tpu.matmul %0, %1, %cst {dimension_numbers = #tpu.dot_dimension_numbers<[1], [0], [0], [1], [0, 0, 1, 1], [], []>} : vector<32x32xbf16>, vector<32x96xbf16>, vector<32x96xf32> -> vector<32x96xf32>
    %c0_3 = arith.constant 0 : index
    %c0_4 = arith.constant 0 : index
    %3 = vector.load %arg3[%c0_3, %c0_4] : memref<1x96xf32, #tpu.memory_space<vmem>>, vector<1x96xf32>
    %4 = vector.broadcast %3 : vector<1x96xf32> to vector<32x96xf32>
    %5 = arith.addf %2, %4 : vector<32x96xf32>
    %6 = arith.truncf %5 : vector<32x96xf32> to vector<32x96xbf16>
    %7 = vector.shape_cast %6 : vector<32x96xbf16> to vector<2x16x96xbf16>
    %8 = vector.extract_strided_slice %7 {offsets = [0, 0, 0], sizes = [2, 16, 8], strides = [1, 1, 1]} : vector<2x16x96xbf16> to vector<2x16x8xbf16>
    %9 = vector.extract_strided_slice %7 {offsets = [0, 0, 32], sizes = [2, 16, 8], strides = [1, 1, 1]} : vector<2x16x96xbf16> to vector<2x16x8xbf16>
    %10 = vector.extract_strided_slice %7 {offsets = [0, 0, 64], sizes = [2, 16, 8], strides = [1, 1, 1]} : vector<2x16x96xbf16> to vector<2x16x8xbf16>
    "tpu.trace_start"() <{level = 10 : i32, message = "bqd,bkd->bqk"}> : () -> ()
    %cst_5 = arith.constant dense<0.000000e+00> : vector<2x16x16xf32>
    %11 = tpu.matmul %8, %9, %cst_5 {dimension_numbers = #tpu.dot_dimension_numbers<[2], [2], [1], [1], [0, 0, 0, 1, 1, 1], [0], [0]>} : vector<2x16x8xbf16>, vector<2x16x8xbf16>, vector<2x16x16xf32> -> vector<2x16x16xf32>
    "tpu.trace_stop"() : () -> ()
    %c0_6 = arith.constant 0 : index
    %c0_7 = arith.constant 0 : index
    %c0_8 = arith.constant 0 : index
    %12 = vector.load %arg6[%c0_6, %c0_7, %c0_8] : memref<4x16x16xf32, #tpu.memory_space<vmem>>, vector<1x16x16xf32>
    %13 = vector.shape_cast %12 : vector<1x16x16xf32> to vector<16x16xf32>
    %14 = vector.shape_cast %13 : vector<16x16xf32> to vector<1x16x16xf32>
    %15 = vector.broadcast %14 : vector<1x16x16xf32> to vector<2x16x16xf32>
    %16 = arith.addf %11, %15 : vector<2x16x16xf32>
    %cst_9 = arith.constant dense<0xFF800000> : vector<2x16xf32>
    %17 = vector.multi_reduction <maximumf>, %16, %cst_9 [2] : vector<2x16x16xf32> to vector<2x16xf32>
    %18 = vector.shape_cast %17 : vector<2x16xf32> to vector<2x16x1xf32>
    %19 = vector.broadcast %18 : vector<2x16x1xf32> to vector<2x16x16xf32>
    %20 = arith.subf %16, %19 : vector<2x16x16xf32>
    %21 = math.exp %20 : vector<2x16x16xf32>
    %cst_10 = arith.constant dense<0.000000e+00> : vector<2x16xf32>
    %22 = vector.multi_reduction <add>, %21, %cst_10 [2] : vector<2x16x16xf32> to vector<2x16xf32>
    %23 = vector.shape_cast %22 : vector<2x16xf32> to vector<2x16x1xf32>
    %24 = tpu.reciprocal %23 {approx = true} : vector<2x16x1xf32> -> vector<2x16x1xf32>
    %25 = vector.broadcast %24 : vector<2x16x1xf32> to vector<2x16x16xf32>
    %26 = arith.mulf %21, %25 : vector<2x16x16xf32>
    %27 = arith.truncf %26 : vector<2x16x16xf32> to vector<2x16x16xbf16>
    "tpu.trace_start"() <{level = 10 : i32, message = "bqk,bkd->bqd"}> : () -> ()
    %cst_11 = arith.constant dense<0.000000e+00> : vector<2x16x8xf32>
    %28 = tpu.matmul %27, %10, %cst_11 {dimension_numbers = #tpu.dot_dimension_numbers<[2], [1], [1], [2], [0, 0, 0, 1, 1, 2], [0], [0]>} : vector<2x16x16xbf16>, vector<2x16x8xbf16>, vector<2x16x8xf32> -> vector<2x16x8xf32>
    "tpu.trace_stop"() : () -> ()
    %29 = arith.truncf %28 : vector<2x16x8xf32> to vector<2x16x8xbf16>
    %30 = vector.extract_strided_slice %7 {offsets = [0, 0, 8], sizes = [2, 16, 8], strides = [1, 1, 1]} : vector<2x16x96xbf16> to vector<2x16x8xbf16>
    %31 = vector.extract_strided_slice %7 {offsets = [0, 0, 40], sizes = [2, 16, 8], strides = [1, 1, 1]} : vector<2x16x96xbf16> to vector<2x16x8xbf16>
    %32 = vector.extract_strided_slice %7 {offsets = [0, 0, 72], sizes = [2, 16, 8], strides = [1, 1, 1]} : vector<2x16x96xbf16> to vector<2x16x8xbf16>
    "tpu.trace_start"() <{level = 10 : i32, message = "bqd,bkd->bqk"}> : () -> ()
    %cst_12 = arith.constant dense<0.000000e+00> : vector<2x16x16xf32>
    %33 = tpu.matmul %30, %31, %cst_12 {dimension_numbers = #tpu.dot_dimension_numbers<[2], [2], [1], [1], [0, 0, 0, 1, 1, 1], [0], [0]>} : vector<2x16x8xbf16>, vector<2x16x8xbf16>, vector<2x16x16xf32> -> vector<2x16x16xf32>
    "tpu.trace_stop"() : () -> ()
    %c1 = arith.constant 1 : index
    %c0_13 = arith.constant 0 : index
    %c0_14 = arith.constant 0 : index
    %34 = vector.load %arg6[%c1, %c0_13, %c0_14] : memref<4x16x16xf32, #tpu.memory_space<vmem>>, vector<1x16x16xf32>
    %35 = vector.shape_cast %34 : vector<1x16x16xf32> to vector<16x16xf32>
    %36 = vector.shape_cast %35 : vector<16x16xf32> to vector<1x16x16xf32>
    %37 = vector.broadcast %36 : vector<1x16x16xf32> to vector<2x16x16xf32>
    %38 = arith.addf %33, %37 : vector<2x16x16xf32>
    %cst_15 = arith.constant dense<0xFF800000> : vector<2x16xf32>
    %39 = vector.multi_reduction <maximumf>, %38, %cst_15 [2] : vector<2x16x16xf32> to vector<2x16xf32>
    %40 = vector.shape_cast %39 : vector<2x16xf32> to vector<2x16x1xf32>
    %41 = vector.broadcast %40 : vector<2x16x1xf32> to vector<2x16x16xf32>
    %42 = arith.subf %38, %41 : vector<2x16x16xf32>
    %43 = math.exp %42 : vector<2x16x16xf32>
    %cst_16 = arith.constant dense<0.000000e+00> : vector<2x16xf32>
    %44 = vector.multi_reduction <add>, %43, %cst_16 [2] : vector<2x16x16xf32> to vector<2x16xf32>
    %45 = vector.shape_cast %44 : vector<2x16xf32> to vector<2x16x1xf32>
    %46 = tpu.reciprocal %45 {approx = true} : vector<2x16x1xf32> -> vector<2x16x1xf32>
    %47 = vector.broadcast %46 : vector<2x16x1xf32> to vector<2x16x16xf32>
    %48 = arith.mulf %43, %47 : vector<2x16x16xf32>
    %49 = arith.truncf %48 : vector<2x16x16xf32> to vector<2x16x16xbf16>
    "tpu.trace_start"() <{level = 10 : i32, message = "bqk,bkd->bqd"}> : () -> ()
    %cst_17 = arith.constant dense<0.000000e+00> : vector<2x16x8xf32>
    %50 = tpu.matmul %49, %32, %cst_17 {dimension_numbers = #tpu.dot_dimension_numbers<[2], [1], [1], [2], [0, 0, 0, 1, 1, 2], [0], [0]>} : vector<2x16x16xbf16>, vector<2x16x8xbf16>, vector<2x16x8xf32> -> vector<2x16x8xf32>
    "tpu.trace_stop"() : () -> ()
    %51 = arith.truncf %50 : vector<2x16x8xf32> to vector<2x16x8xbf16>
    %52 = vector.extract_strided_slice %7 {offsets = [0, 0, 16], sizes = [2, 16, 8], strides = [1, 1, 1]} : vector<2x16x96xbf16> to vector<2x16x8xbf16>
    %53 = vector.extract_strided_slice %7 {offsets = [0, 0, 48], sizes = [2, 16, 8], strides = [1, 1, 1]} : vector<2x16x96xbf16> to vector<2x16x8xbf16>
    %54 = vector.extract_strided_slice %7 {offsets = [0, 0, 80], sizes = [2, 16, 8], strides = [1, 1, 1]} : vector<2x16x96xbf16> to vector<2x16x8xbf16>
    "tpu.trace_start"() <{level = 10 : i32, message = "bqd,bkd->bqk"}> : () -> ()
    %cst_18 = arith.constant dense<0.000000e+00> : vector<2x16x16xf32>
    %55 = tpu.matmul %52, %53, %cst_18 {dimension_numbers = #tpu.dot_dimension_numbers<[2], [2], [1], [1], [0, 0, 0, 1, 1, 1], [0], [0]>} : vector<2x16x8xbf16>, vector<2x16x8xbf16>, vector<2x16x16xf32> -> vector<2x16x16xf32>
    "tpu.trace_stop"() : () -> ()
    %c2 = arith.constant 2 : index
    %c0_19 = arith.constant 0 : index
    %c0_20 = arith.constant 0 : index
    %56 = vector.load %arg6[%c2, %c0_19, %c0_20] : memref<4x16x16xf32, #tpu.memory_space<vmem>>, vector<1x16x16xf32>
    %57 = vector.shape_cast %56 : vector<1x16x16xf32> to vector<16x16xf32>
    %58 = vector.shape_cast %57 : vector<16x16xf32> to vector<1x16x16xf32>
    %59 = vector.broadcast %58 : vector<1x16x16xf32> to vector<2x16x16xf32>
    %60 = arith.addf %55, %59 : vector<2x16x16xf32>
    %cst_21 = arith.constant dense<0xFF800000> : vector<2x16xf32>
    %61 = vector.multi_reduction <maximumf>, %60, %cst_21 [2] : vector<2x16x16xf32> to vector<2x16xf32>
    %62 = vector.shape_cast %61 : vector<2x16xf32> to vector<2x16x1xf32>
    %63 = vector.broadcast %62 : vector<2x16x1xf32> to vector<2x16x16xf32>
    %64 = arith.subf %60, %63 : vector<2x16x16xf32>
    %65 = math.exp %64 : vector<2x16x16xf32>
    %cst_22 = arith.constant dense<0.000000e+00> : vector<2x16xf32>
    %66 = vector.multi_reduction <add>, %65, %cst_22 [2] : vector<2x16x16xf32> to vector<2x16xf32>
    %67 = vector.shape_cast %66 : vector<2x16xf32> to vector<2x16x1xf32>
    %68 = tpu.reciprocal %67 {approx = true} : vector<2x16x1xf32> -> vector<2x16x1xf32>
    %69 = vector.broadcast %68 : vector<2x16x1xf32> to vector<2x16x16xf32>
    %70 = arith.mulf %65, %69 : vector<2x16x16xf32>
    %71 = arith.truncf %70 : vector<2x16x16xf32> to vector<2x16x16xbf16>
    "tpu.trace_start"() <{level = 10 : i32, message = "bqk,bkd->bqd"}> : () -> ()
    %cst_23 = arith.constant dense<0.000000e+00> : vector<2x16x8xf32>
    %72 = tpu.matmul %71, %54, %cst_23 {dimension_numbers = #tpu.dot_dimension_numbers<[2], [1], [1], [2], [0, 0, 0, 1, 1, 2], [0], [0]>} : vector<2x16x16xbf16>, vector<2x16x8xbf16>, vector<2x16x8xf32> -> vector<2x16x8xf32>
    "tpu.trace_stop"() : () -> ()
    %73 = arith.truncf %72 : vector<2x16x8xf32> to vector<2x16x8xbf16>
    %74 = vector.extract_strided_slice %7 {offsets = [0, 0, 24], sizes = [2, 16, 8], strides = [1, 1, 1]} : vector<2x16x96xbf16> to vector<2x16x8xbf16>
    %75 = vector.extract_strided_slice %7 {offsets = [0, 0, 56], sizes = [2, 16, 8], strides = [1, 1, 1]} : vector<2x16x96xbf16> to vector<2x16x8xbf16>
    %76 = vector.extract_strided_slice %7 {offsets = [0, 0, 88], sizes = [2, 16, 8], strides = [1, 1, 1]} : vector<2x16x96xbf16> to vector<2x16x8xbf16>
    "tpu.trace_start"() <{level = 10 : i32, message = "bqd,bkd->bqk"}> : () -> ()
    %cst_24 = arith.constant dense<0.000000e+00> : vector<2x16x16xf32>
    %77 = tpu.matmul %74, %75, %cst_24 {dimension_numbers = #tpu.dot_dimension_numbers<[2], [2], [1], [1], [0, 0, 0, 1, 1, 1], [0], [0]>} : vector<2x16x8xbf16>, vector<2x16x8xbf16>, vector<2x16x16xf32> -> vector<2x16x16xf32>
    "tpu.trace_stop"() : () -> ()
    %c3 = arith.constant 3 : index
    %c0_25 = arith.constant 0 : index
    %c0_26 = arith.constant 0 : index
    %78 = vector.load %arg6[%c3, %c0_25, %c0_26] : memref<4x16x16xf32, #tpu.memory_space<vmem>>, vector<1x16x16xf32>
    %79 = vector.shape_cast %78 : vector<1x16x16xf32> to vector<16x16xf32>
    %80 = vector.shape_cast %79 : vector<16x16xf32> to vector<1x16x16xf32>
    %81 = vector.broadcast %80 : vector<1x16x16xf32> to vector<2x16x16xf32>
    %82 = arith.addf %77, %81 : vector<2x16x16xf32>
    %cst_27 = arith.constant dense<0xFF800000> : vector<2x16xf32>
    %83 = vector.multi_reduction <maximumf>, %82, %cst_27 [2] : vector<2x16x16xf32> to vector<2x16xf32>
    %84 = vector.shape_cast %83 : vector<2x16xf32> to vector<2x16x1xf32>
    %85 = vector.broadcast %84 : vector<2x16x1xf32> to vector<2x16x16xf32>
    %86 = arith.subf %82, %85 : vector<2x16x16xf32>
    %87 = math.exp %86 : vector<2x16x16xf32>
    %cst_28 = arith.constant dense<0.000000e+00> : vector<2x16xf32>
    %88 = vector.multi_reduction <add>, %87, %cst_28 [2] : vector<2x16x16xf32> to vector<2x16xf32>
    %89 = vector.shape_cast %88 : vector<2x16xf32> to vector<2x16x1xf32>
    %90 = tpu.reciprocal %89 {approx = true} : vector<2x16x1xf32> -> vector<2x16x1xf32>
    %91 = vector.broadcast %90 : vector<2x16x1xf32> to vector<2x16x16xf32>
    %92 = arith.mulf %87, %91 : vector<2x16x16xf32>
    %93 = arith.truncf %92 : vector<2x16x16xf32> to vector<2x16x16xbf16>
    "tpu.trace_start"() <{level = 10 : i32, message = "bqk,bkd->bqd"}> : () -> ()
    %cst_29 = arith.constant dense<0.000000e+00> : vector<2x16x8xf32>
    %94 = tpu.matmul %93, %76, %cst_29 {dimension_numbers = #tpu.dot_dimension_numbers<[2], [1], [1], [2], [0, 0, 0, 1, 1, 2], [0], [0]>} : vector<2x16x16xbf16>, vector<2x16x8xbf16>, vector<2x16x8xf32> -> vector<2x16x8xf32>
    "tpu.trace_stop"() : () -> ()
    %95 = arith.truncf %94 : vector<2x16x8xf32> to vector<2x16x8xbf16>
    %96 = tpu.concatenate %29, %51, %73, %95 in 2 : vector<2x16x8xbf16>, vector<2x16x8xbf16>, vector<2x16x8xbf16>, vector<2x16x8xbf16> -> vector<2x16x32xbf16>
    %97 = vector.shape_cast %96 : vector<2x16x32xbf16> to vector<32x32xbf16>
    %c0_30 = arith.constant 0 : index
    %c0_31 = arith.constant 0 : index
    %98 = vector.load %arg4[%c0_30, %c0_31] : memref<32x32xbf16, #tpu.memory_space<vmem>>, vector<32x32xbf16>
    %cst_32 = arith.constant dense<0.000000e+00> : vector<32x32xf32>
    %99 = tpu.matmul %97, %98, %cst_32 {dimension_numbers = #tpu.dot_dimension_numbers<[1], [0], [0], [1], [0, 0, 1, 1], [], []>} : vector<32x32xbf16>, vector<32x32xbf16>, vector<32x32xf32> -> vector<32x32xf32>
    %c0_33 = arith.constant 0 : index
    %c0_34 = arith.constant 0 : index
    %100 = vector.load %arg5[%c0_33, %c0_34] : memref<1x32xf32, #tpu.memory_space<vmem>>, vector<1x32xf32>
    %101 = vector.broadcast %100 : vector<1x32xf32> to vector<32x32xf32>
    %102 = arith.addf %99, %101 : vector<32x32xf32>
    %c0_35 = arith.constant 0 : index
    %c0_36 = arith.constant 0 : index
    %103 = vector.load %arg7[%c0_35, %c0_36] : memref<32x32xf32, #tpu.memory_space<vmem>>, vector<32x32xf32>
    tpu.vector_store %arg7[%c0_35, %c0_36], %102 {strides = array<i32>} : memref<32x32xf32, #tpu.memory_space<vmem>>, vector<32x32xf32>,
    return
  }
  func.func @transform_0(%arg0: i32) -> (i32, i32) {
    %c0_i32 = arith.constant 0 : i32
    %c0_i32_0 = arith.constant 0 : i32
    return %arg0, %c0_i32 : i32, i32
  }
  func.func @transform_1(%arg0: i32) -> (i32, i32) {
    %c0_i32 = arith.constant 0 : i32
    %c0_i32_0 = arith.constant 0 : i32
    %c0_i32_1 = arith.constant 0 : i32
    return %c0_i32, %c0_i32_0 : i32, i32
  }
  func.func @transform_2(%arg0: i32) -> (i32, i32) {
    %c0_i32 = arith.constant 0 : i32
    %c0_i32_0 = arith.constant 0 : i32
    %c0_i32_1 = arith.constant 0 : i32
    return %c0_i32, %c0_i32_0 : i32, i32
  }
  func.func @transform_3(%arg0: i32) -> (i32, i32) {
    %c0_i32 = arith.constant 0 : i32
    %c0_i32_0 = arith.constant 0 : i32
    %c0_i32_1 = arith.constant 0 : i32
    return %c0_i32, %c0_i32_0 : i32, i32
  }
  func.func @transform_4(%arg0: i32) -> (i32, i32) {
    %c0_i32 = arith.constant 0 : i32
    %c0_i32_0 = arith.constant 0 : i32
    %c0_i32_1 = arith.constant 0 : i32
    return %c0_i32, %c0_i32_0 : i32, i32
  }
  func.func @transform_5(%arg0: i32) -> (i32, i32, i32) {
    %c0_i32 = arith.constant 0 : i32
    %c0_i32_0 = arith.constant 0 : i32
    %c0_i32_1 = arith.constant 0 : i32
    %c0_i32_2 = arith.constant 0 : i32
    return %c0_i32, %c0_i32_0, %c0_i32_1 : i32, i32, i32
  }
  func.func @transform_6(%arg0: i32) -> (i32, i32) {
    %c0_i32 = arith.constant 0 : i32
    %c0_i32_0 = arith.constant 0 : i32
    return %arg0, %c0_i32 : i32, i32
  }
}

module attributes {stable_mosaic.version = 11 : i64} {
  func.func @_nlsa_kernel(%arg0: i32, %arg1: memref<32x32xbf16, #tpu.memory_space<vmem>>, %arg2: memref<32x96xbf16, #tpu.memory_space<vmem>>, %arg3: memref<1x96xf32, #tpu.memory_space<vmem>>, %arg4: memref<32x32xbf16, #tpu.memory_space<vmem>>, %arg5: memref<1x32xf32, #tpu.memory_space<vmem>>, %arg6: memref<4x16x16xf32, #tpu.memory_space<vmem>>, %arg7: memref<32x32xf32, #tpu.memory_space<vmem>>) attributes {dimension_semantics = [#tpu.dimension_semantics<parallel>], iteration_bounds = array<i64: 4>, scalar_prefetch = 0 : i64, scratch_operands = 0 : i64, tpu.core_type = #tpu.core_type<tc>, window_params = [{transform_indices = @transform_0, window_bounds = array<i64: 32, 32>}, {pipeline_mode = #tpu.pipeline_mode<synchronous>, transform_indices = @transform_1, window_bounds = array<i64: 32, 96>}, {pipeline_mode = #tpu.pipeline_mode<synchronous>, transform_indices = @transform_2, window_bounds = array<i64: 1, 96>}, {pipeline_mode = #tpu.pipeline_mode<synchronous>, transform_indices = @transform_3, window_bounds = array<i64: 32, 32>}, {pipeline_mode = #tpu.pipeline_mode<synchronous>, transform_indices = @transform_4, window_bounds = array<i64: 1, 32>}, {pipeline_mode = #tpu.pipeline_mode<synchronous>, transform_indices = @transform_5, window_bounds = array<i64: 4, 16, 16>}, {transform_indices = @transform_6, window_bounds = array<i64: 32, 32>}]} {
    %c0 = arith.constant 0 : index
    %c0_0 = arith.constant 0 : index
    %0 = vector.load %arg1[%c0, %c0_0] : memref<32x32xbf16, #tpu.memory_space<vmem>>, vector<32x32xbf16>
    %c0_1 = arith.constant 0 : index
    %c0_2 = arith.constant 0 : index
    %1 = vector.load %arg2[%c0_1, %c0_2] : memref<32x96xbf16, #tpu.memory_space<vmem>>, vector<32x96xbf16>
    %cst = arith.constant dense<0.000000e+00> : vector<32x96xf32>
    %2 = tpu.matmul %0, %1, %cst {dimension_numbers = #tpu.dot_dimension_numbers<[1], [0], [0], [1], [0, 0, 1, 1], [], []>} : vector<32x32xbf16>, vector<32x96xbf16>, vector<32x96xf32> -> vector<32x96xf32>
    %c0_3 = arith.constant 0 : index
    %c0_4 = arith.constant 0 : index
    %3 = vector.load %arg3[%c0_3, %c0_4] : memref<1x96xf32, #tpu.memory_space<vmem>>, vector<1x96xf32>
    %4 = vector.broadcast %3 : vector<1x96xf32> to vector<32x96xf32>
    %5 = arith.addf %2, %4 : vector<32x96xf32>
    %6 = arith.truncf %5 : vector<32x96xf32> to vector<32x96xbf16>
    %7 = vector.shape_cast %6 : vector<32x96xbf16> to vector<2x16x96xbf16>
    %8 = vector.extract_strided_slice %7 {offsets = [0, 0, 0], sizes = [2, 16, 8], strides = [1, 1, 1]} : vector<2x16x96xbf16> to vector<2x16x8xbf16>
    %9 = vector.extract_strided_slice %7 {offsets = [0, 0, 32], sizes = [2, 16, 8], strides = [1, 1, 1]} : vector<2x16x96xbf16> to vector<2x16x8xbf16>
    %10 = vector.extract_strided_slice %7 {offsets = [0, 0, 64], sizes = [2, 16, 8], strides = [1, 1, 1]} : vector<2x16x96xbf16> to vector<2x16x8xbf16>
    "tpu.trace_start"() <{level = 10 : i32, message = "bqd,bkd->bqk"}> : () -> ()
    %cst_5 = arith.constant dense<0.000000e+00> : vector<2x16x16xf32>
    %11 = tpu.matmul %8, %9, %cst_5 {dimension_numbers = #tpu.dot_dimension_numbers<[2], [2], [1], [1], [0, 0, 0, 1, 1, 1], [0], [0]>} : vector<2x16x8xbf16>, vector<2x16x8xbf16>, vector<2x16x16xf32> -> vector<2x16x16xf32>
    "tpu.trace_stop"() : () -> ()
    %c0_6 = arith.constant 0 : index
    %c0_7 = arith.constant 0 : index
    %c0_8 = arith.constant 0 : index
    %12 = vector.load %arg6[%c0_6, %c0_7, %c0_8] : memref<4x16x16xf32, #tpu.memory_space<vmem>>, vector<1x16x16xf32>
    %13 = vector.shape_cast %12 : vector<1x16x16xf32> to vector<16x16xf32>
    %14 = vector.shape_cast %13 : vector<16x16xf32> to vector<1x16x16xf32>
    %15 = vector.broadcast %14 : vector<1x16x16xf32> to vector<2x16x16xf32>
    %16 = arith.addf %11, %15 : vector<2x16x16xf32>
    %cst_9 = arith.constant dense<0xFF800000> : vector<2x16xf32>
    %17 = vector.multi_reduction <maximumf>, %16, %cst_9 [2] : vector<2x16x16xf32> to vector<2x16xf32>
    %18 = vector.shape_cast %17 : vector<2x16xf32> to vector<2x16x1xf32>
    %19 = vector.broadcast %18 : vector<2x16x1xf32> to vector<2x16x16xf32>
    %20 = arith.subf %16, %19 : vector<2x16x16xf32>
    %21 = math.exp %20 : vector<2x16x16xf32>
    %cst_10 = arith.constant dense<0.000000e+00> : vector<2x16xf32>
    %22 = vector.multi_reduction <add>, %21, %cst_10 [2] : vector<2x16x16xf32> to vector<2x16xf32>
    %23 = vector.shape_cast %22 : vector<2x16xf32> to vector<2x16x1xf32>
    %24 = tpu.reciprocal %23 {approx = true} : vector<2x16x1xf32> -> vector<2x16x1xf32>
    %25 = vector.broadcast %24 : vector<2x16x1xf32> to vector<2x16x16xf32>
    %26 = arith.mulf %21, %25 : vector<2x16x16xf32>
    %27 = arith.truncf %26 : vector<2x16x16xf32> to vector<2x16x16xbf16>
    "tpu.trace_start"() <{level = 10 : i32, message = "bqk,bkd->bqd"}> : () -> ()
    %cst_11 = arith.constant dense<0.000000e+00> : vector<2x16x8xf32>
    %28 = tpu.matmul %27, %10, %cst_11 {dimension_numbers = #tpu.dot_dimension_numbers<[2], [1], [1], [2], [0, 0, 0, 1, 1, 2], [0], [0]>} : vector<2x16x16xbf16>, vector<2x16x8xbf16>, vector<2x16x8xf32> -> vector<2x16x8xf32>
    "tpu.trace_stop"() : () -> ()
    %29 = arith.truncf %28 : vector<2x16x8xf32> to vector<2x16x8xbf16>
    %30 = vector.extract_strided_slice %7 {offsets = [0, 0, 8], sizes = [2, 16, 8], strides = [1, 1, 1]} : vector<2x16x96xbf16> to vector<2x16x8xbf16>
    %31 = vector.extract_strided_slice %7 {offsets = [0, 0, 40], sizes = [2, 16, 8], strides = [1, 1, 1]} : vector<2x16x96xbf16> to vector<2x16x8xbf16>
    %32 = vector.extract_strided_slice %7 {offsets = [0, 0, 72], sizes = [2, 16, 8], strides = [1, 1, 1]} : vector<2x16x96xbf16> to vector<2x16x8xbf16>
    "tpu.trace_start"() <{level = 10 : i32, message = "bqd,bkd->bqk"}> : () -> ()
    %cst_12 = arith.constant dense<0.000000e+00> : vector<2x16x16xf32>
    %33 = tpu.matmul %30, %31, %cst_12 {dimension_numbers = #tpu.dot_dimension_numbers<[2], [2], [1], [1], [0, 0, 0, 1, 1, 1], [0], [0]>} : vector<2x16x8xbf16>, vector<2x16x8xbf16>, vector<2x16x16xf32> -> vector<2x16x16xf32>
    "tpu.trace_stop"() : () -> ()
    %c1 = arith.constant 1 : index
    %c0_13 = arith.constant 0 : index
    %c0_14 = arith.constant 0 : index
    %34 = vector.load %arg6[%c1, %c0_13, %c0_14] : memref<4x16x16xf32, #tpu.memory_space<vmem>>, vector<1x16x16xf32>
    %35 = vector.shape_cast %34 : vector<1x16x16xf32> to vector<16x16xf32>
    %36 = vector.shape_cast %35 : vector<16x16xf32> to vector<1x16x16xf32>
    %37 = vector.broadcast %36 : vector<1x16x16xf32> to vector<2x16x16xf32>
    %38 = arith.addf %33, %37 : vector<2x16x16xf32>
    %cst_15 = arith.constant dense<0xFF800000> : vector<2x16xf32>
    %39 = vector.multi_reduction <maximumf>, %38, %cst_15 [2] : vector<2x16x16xf32> to vector<2x16xf32>
    %40 = vector.shape_cast %39 : vector<2x16xf32> to vector<2x16x1xf32>
    %41 = vector.broadcast %40 : vector<2x16x1xf32> to vector<2x16x16xf32>
    %42 = arith.subf %38, %41 : vector<2x16x16xf32>
    %43 = math.exp %42 : vector<2x16x16xf32>
    %cst_16 = arith.constant dense<0.000000e+00> : vector<2x16xf32>
    %44 = vector.multi_reduction <add>, %43, %cst_16 [2] : vector<2x16x16xf32> to vector<2x16xf32>
    %45 = vector.shape_cast %44 : vector<2x16xf32> to vector<2x16x1xf32>
    %46 = tpu.reciprocal %45 {approx = true} : vector<2x16x1xf32> -> vector<2x16x1xf32>
    %47 = vector.broadcast %46 : vector<2x16x1xf32> to vector<2x16x16xf32>
    %48 = arith.mulf %43, %47 : vector<2x16x16xf32>
    %49 = arith.truncf %48 : vector<2x16x16xf32> to vector<2x16x16xbf16>
    "tpu.trace_start"() <{level = 10 : i32, message = "bqk,bkd->bqd"}> : () -> ()
    %cst_17 = arith.constant dense<0.000000e+00> : vector<2x16x8xf32>
    %50 = tpu.matmul %49, %32, %cst_17 {dimension_numbers = #tpu.dot_dimension_numbers<[2], [1], [1], [2], [0, 0, 0, 1, 1, 2], [0], [0]>} : vector<2x16x16xbf16>, vector<2x16x8xbf16>, vector<2x16x8xf32> -> vector<2x16x8xf32>
    "tpu.trace_stop"() : () -> ()
    %51 = arith.truncf %50 : vector<2x16x8xf32> to vector<2x16x8xbf16>
    %52 = vector.extract_strided_slice %7 {offsets = [0, 0, 16], sizes = [2, 16, 8], strides = [1, 1, 1]} : vector<2x16x96xbf16> to vector<2x16x8xbf16>
    %53 = vector.extract_strided_slice %7 {offsets = [0, 0, 48], sizes = [2, 16, 8], strides = [1, 1, 1]} : vector<2x16x96xbf16> to vector<2x16x8xbf16>
    %54 = vector.extract_strided_slice %7 {offsets = [0, 0, 80], sizes = [2, 16, 8], strides = [1, 1, 1]} : vector<2x16x96xbf16> to vector<2x16x8xbf16>
    "tpu.trace_start"() <{level = 10 : i32, message = "bqd,bkd->bqk"}> : () -> ()
    %cst_18 = arith.constant dense<0.000000e+00> : vector<2x16x16xf32>
    %55 = tpu.matmul %52, %53, %cst_18 {dimension_numbers = #tpu.dot_dimension_numbers<[2], [2], [1], [1], [0, 0, 0, 1, 1, 1], [0], [0]>} : vector<2x16x8xbf16>, vector<2x16x8xbf16>, vector<2x16x16xf32> -> vector<2x16x16xf32>
    "tpu.trace_stop"() : () -> ()
    %c2 = arith.constant 2 : index
    %c0_19 = arith.constant 0 : index
    %c0_20 = arith.constant 0 : index
    %56 = vector.load %arg6[%c2, %c0_19, %c0_20] : memref<4x16x16xf32, #tpu.memory_space<vmem>>, vector<1x16x16xf32>
    %57 = vector.shape_cast %56 : vector<1x16x16xf32> to vector<16x16xf32>
    %58 = vector.shape_cast %57 : vector<16x16xf32> to vector<1x16x16xf32>
    %59 = vector.broadcast %58 : vector<1x16x16xf32> to vector<2x16x16xf32>
    %60 = arith.addf %55, %59 : vector<2x16x16xf32>
    %cst_21 = arith.constant dense<0xFF800000> : vector<2x16xf32>
    %61 = vector.multi_reduction <maximumf>, %60, %cst_21 [2] : vector<2x16x16xf32> to vector<2x16xf32>
    %62 = vector.shape_cast %61 : vector<2x16xf32> to vector<2x16x1xf32>
    %63 = vector.broadcast %62 : vector<2x16x1xf32> to vector<2x16x16xf32>
    %64 = arith.subf %60, %63 : vector<2x16x16xf32>
    %65 = math.exp %64 : vector<2x16x16xf32>
    %cst_22 = arith.constant dense<0.000000e+00> : vector<2x16xf32>
    %66 = vector.multi_reduction <add>, %65, %cst_22 [2] : vector<2x16x16xf32> to vector<2x16xf32>
    %67 = vector.shape_cast %66 : vector<2x16xf32> to vector<2x16x1xf32>
    %68 = tpu.reciprocal %67 {approx = true} : vector<2x16x1xf32> -> vector<2x16x1xf32>
    %69 = vector.broadcast %68 : vector<2x16x1xf32> to vector<2x16x16xf32>
    %70 = arith.mulf %65, %69 : vector<2x16x16xf32>
    %71 = arith.truncf %70 : vector<2x16x16xf32> to vector<2x16x16xbf16>
    "tpu.trace_start"() <{level = 10 : i32, message = "bqk,bkd->bqd"}> : () -> ()
    %cst_23 = arith.constant dense<0.000000e+00> : vector<2x16x8xf32>
    %72 = tpu.matmul %71, %54, %cst_23 {dimension_numbers = #tpu.dot_dimension_numbers<[2], [1], [1], [2], [0, 0, 0, 1, 1, 2], [0], [0]>} : vector<2x16x16xbf16>, vector<2x16x8xbf16>, vector<2x16x8xf32> -> vector<2x16x8xf32>
    "tpu.trace_stop"() : () -> ()
    %73 = arith.truncf %72 : vector<2x16x8xf32> to vector<2x16x8xbf16>
    %74 = vector.extract_strided_slice %7 {offsets = [0, 0, 24], sizes = [2, 16, 8], strides = [1, 1, 1]} : vector<2x16x96xbf16> to vector<2x16x8xbf16>
    %75 = vector.extract_strided_slice %7 {offsets = [0, 0, 56], sizes = [2, 16, 8], strides = [1, 1, 1]} : vector<2x16x96xbf16> to vector<2x16x8xbf16>
    %76 = vector.extract_strided_slice %7 {offsets = [0, 0, 88], sizes = [2, 16, 8], strides = [1, 1, 1]} : vector<2x16x96xbf16> to vector<2x16x8xbf16>
    "tpu.trace_start"() <{level = 10 : i32, message = "bqd,bkd->bqk"}> : () -> ()
    %cst_24 = arith.constant dense<0.000000e+00> : vector<2x16x16xf32>
    %77 = tpu.matmul %74, %75, %cst_24 {dimension_numbers = #tpu.dot_dimension_numbers<[2], [2], [1], [1], [0, 0, 0, 1, 1, 1], [0], [0]>} : vector<2x16x8xbf16>, vector<2x16x8xbf16>, vector<2x16x16xf32> -> vector<2x16x16xf32>
    "tpu.trace_stop"() : () -> ()
    %c3 = arith.constant 3 : index
    %c0_25 = arith.constant 0 : index
    %c0_26 = arith.constant 0 : index
    %78 = vector.load %arg6[%c3, %c0_25, %c0_26] : memref<4x16x16xf32, #tpu.memory_space<vmem>>, vector<1x16x16xf32>
    %79 = vector.shape_cast %78 : vector<1x16x16xf32> to vector<16x16xf32>
    %80 = vector.shape_cast %79 : vector<16x16xf32> to vector<1x16x16xf32>
    %81 = vector.broadcast %80 : vector<1x16x16xf32> to vector<2x16x16xf32>
    %82 = arith.addf %77, %81 : vector<2x16x16xf32>
    %cst_27 = arith.constant dense<0xFF800000> : vector<2x16xf32>
    %83 = vector.multi_reduction <maximumf>, %82, %cst_27 [2] : vector<2x16x16xf32> to vector<2x16xf32>
    %84 = vector.shape_cast %83 : vector<2x16xf32> to vector<2x16x1xf32>
    %85 = vector.broadcast %84 : vector<2x16x1xf32> to vector<2x16x16xf32>
    %86 = arith.subf %82, %85 : vector<2x16x16xf32>
    %87 = math.exp %86 : vector<2x16x16xf32>
    %cst_28 = arith.constant dense<0.000000e+00> : vector<2x16xf32>
    %88 = vector.multi_reduction <add>, %87, %cst_28 [2] : vector<2x16x16xf32> to vector<2x16xf32>
    %89 = vector.shape_cast %88 : vector<2x16xf32> to vector<2x16x1xf32>
    %90 = tpu.reciprocal %89 {approx = true} : vector<2x16x1xf32> -> vector<2x16x1xf32>
    %91 = vector.broadcast %90 : vector<2x16x1xf32> to vector<2x16x16xf32>
    %92 = arith.mulf %87, %91 : vector<2x16x16xf32>
    %93 = arith.truncf %92 : vector<2x16x16xf32> to vector<2x16x16xbf16>
    "tpu.trace_start"() <{level = 10 : i32, message = "bqk,bkd->bqd"}> : () -> ()
    %cst_29 = arith.constant dense<0.000000e+00> : vector<2x16x8xf32>
    %94 = tpu.matmul %93, %76, %cst_29 {dimension_numbers = #tpu.dot_dimension_numbers<[2], [1], [1], [2], [0, 0, 0, 1, 1, 2], [0], [0]>} : vector<2x16x16xbf16>, vector<2x16x8xbf16>, vector<2x16x8xf32> -> vector<2x16x8xf32>
    "tpu.trace_stop"() : () -> ()
    %95 = arith.truncf %94 : vector<2x16x8xf32> to vector<2x16x8xbf16>
    %96 = tpu.concatenate %29, %51, %73, %95 in 2 : vector<2x16x8xbf16>, vector<2x16x8xbf16>, vector<2x16x8xbf16>, vector<2x16x8xbf16> -> vector<2x16x32xbf16>
    %97 = vector.shape_cast %96 : vector<2x16x32xbf16> to vector<32x32xbf16>
    %c0_30 = arith.constant 0 : index
    %c0_31 = arith.constant 0 : index
    %98 = vector.load %arg4[%c0_30, %c0_31] : memref<32x32xbf16, #tpu.memory_space<vmem>>, vector<32x32xbf16>
    %cst_32 = arith.constant dense<0.000000e+00> : vector<32x32xf32>
    %99 = tpu.matmul %97, %98, %cst_32 {dimension_numbers = #tpu.dot_dimension_numbers<[1], [0], [0], [1], [0, 0, 1, 1], [], []>} : vector<32x32xbf16>, vector<32x32xbf16>, vector<32x32xf32> -> vector<32x32xf32>
    %c0_33 = arith.constant 0 : index
    %c0_34 = arith.constant 0 : index
    %100 = vector.load %arg5[%c0_33, %c0_34] : memref<1x32xf32, #tpu.memory_space<vmem>>, vector<1x32xf32>
    %101 = vector.broadcast %100 : vector<1x32xf32> to vector<32x32xf32>
    %102 = arith.addf %99, %101 : vector<32x32xf32>
    %c0_35 = arith.constant 0 : index
    %c0_36 = arith.constant 0 : index
    %103 = vector.load %arg7[%c0_35, %c0_36] : memref<32x32xf32, #tpu.memory_space<vmem>>, vector<32x32xf32>
    tpu.vector_store %arg7[%c0_35, %c0_36], %102 {strides = array<i32>} : memref<32x32xf32, #tpu.memory_space<vmem>>, vector<32x32xf32>,
    return
  }
  func.func @transform_0(%arg0: i32) -> (i32, i32) {
    %c0_i32 = arith.constant 0 : i32
    %c0_i32_0 = arith.constant 0 : i32
    return %arg0, %c0_i32 : i32, i32
  }
  func.func @transform_1(%arg0: i32) -> (i32, i32) {
    %c0_i32 = arith.constant 0 : i32
    %c0_i32_0 = arith.constant 0 : i32
    %c0_i32_1 = arith.constant 0 : i32
    return %c0_i32, %c0_i32_0 : i32, i32
  }
  func.func @transform_2(%arg0: i32) -> (i32, i32) {
    %c0_i32 = arith.constant 0 : i32
    %c0_i32_0 = arith.constant 0 : i32
    %c0_i32_1 = arith.constant 0 : i32
    return %c0_i32, %c0_i32_0 : i32, i32
  }
  func.func @transform_3(%arg0: i32) -> (i32, i32) {
    %c0_i32 = arith.constant 0 : i32
    %c0_i32_0 = arith.constant 0 : i32
    %c0_i32_1 = arith.constant 0 : i32
    return %c0_i32, %c0_i32_0 : i32, i32
  }
  func.func @transform_4(%arg0: i32) -> (i32, i32) {
    %c0_i32 = arith.constant 0 : i32
    %c0_i32_0 = arith.constant 0 : i32
    %c0_i32_1 = arith.constant 0 : i32
    return %c0_i32, %c0_i32_0 : i32, i32
  }
  func.func @transform_5(%arg0: i32) -> (i32, i32, i32) {
    %c0_i32 = arith.constant 0 : i32
    %c0_i32_0 = arith.constant 0 : i32
    %c0_i32_1 = arith.constant 0 : i32
    %c0_i32_2 = arith.constant 0 : i32
    return %c0_i32, %c0_i32_0, %c0_i32_1 : i32, i32, i32
  }
  func.func @transform_6(%arg0: i32) -> (i32, i32) {
    %c0_i32 = arith.constant 0 : i32
    %c0_i32_0 = arith.constant 0 : i32
    return %arg0, %c0_i32 : i32, i32
  }
}

</mosaic_0001>

<llo_original>
// kernel: tpu_custom_call.1
$region0: #{tpu_custom_call.1}
  #allocation0 [shape = 'u32[]', space=smem, size = 0x4, offset = 0x4, fixed_abs, tag = 'smem constant byte address 0x4 - core index']
  #allocation1 [shape = 'u32[144,128]{1,0:T(1,128)}', space=vmem, size = 0x12000, scoped, tag = 'internal scratch']
  %s0 = inlined_call_operand.vmem [shape: bf16[128,32], index: 0, kind: input, shape index: {}]
  %s1 = inlined_call_operand.vmem [shape: bf16[32,96], index: 1, kind: input, shape index: {}]
  %s2 = inlined_call_operand.vmem [shape: f32[1,96], index: 2, kind: input, shape index: {}]
  %s3 = inlined_call_operand.vmem [shape: bf16[32,32], index: 3, kind: input, shape index: {}]
  %s4 = inlined_call_operand.vmem [shape: f32[1,32], index: 4, kind: input, shape index: {}]
  %s5 = inlined_call_operand.vmem [shape: f32[4,16,16], index: 5, kind: input, shape index: {}]
  %s6 = inlined_call_operand.vmem [shape: f32[128,32], index: 6, kind: output, shape index: {}]
  %s7 = sld [smem:[#allocation0]]
  $region57: #{tpu_custom_call.1} parent=0
    _
  %s9 = ssub.s32 1, %s7
  %s10 = scalar_select 0, %s9, %s7
  loop: start=0, step=1, limit=6
  $region2: #{tpu_custom_call.1} parent=0 // loop_pre_header
    _
  $region3: #{tpu_custom_call.1} parent=0 // loop_header
    %s12 = sphi 0, %s16
    %p13 = scmp.ge.s32.totalorder %s12, 6
    %s22 = sphi 0, %s24
    %s25 = sphi 0, %s22
    %s26 = sphi 0, %s25
    %s42 = sphi 0, %s26
    %s46 = sphi 0, %s46
    %s48 = sphi 0, %s46
    %s49 = sphi 0, %s48
    %s63 = sphi 0, %s49
    %s67 = sphi 0, %s67
    %s69 = sphi 0, %s67
    %s70 = sphi 0, %s69
    %s84 = sphi 0, %s70
    %s88 = sphi 0, %s88
    %s90 = sphi 0, %s88
    %s91 = sphi 0, %s90
    %s105 = sphi 0, %s91
    %s109 = sphi 0, %s109
    %s111 = sphi 0, %s109
    %s112 = sphi 0, %s111
    %s126 = sphi 0, %s112
    %s130 = sphi 0, %s130
    %s132 = sphi 0, %s130
    %s133 = sphi 0, %s132
    %s147 = sphi 0, %s133
    %s153 = sphi 0, %s155
    %s156 = sphi 0, %s153
    %s157 = sphi 0, %s156
    %s173 = sphi 0, %s157
  $region4: #{tpu_custom_call.1} parent=0 // loop_header_branch
    %15 = sbr.rel (%p13) target = $region8
  $region5: #{tpu_custom_call.1} parent=0 // loop_body
    %s17 = ssub.s32 %s12, 1
    %s18 = ssub.s32 %s12, 2
    %s19 = sadd.s32 %s12, 1
    %s20 = ssub.s32 %s12, %s19
    %p21 = scmp.eq.s32.totalorder %s20, 0
    %s23 = sadd.s32 %s22, 1
    %s24 = scalar_select %p21, %s22, %s23
    %p27 = pneg %p21
    %p28 = scmp.eq.s32.totalorder %s12, 3
    %p29 = por %p27, %p28
    %p30 = scmp.ne.s32.totalorder %s22, %s25
    %p31 = scmp.eq.s32.totalorder %s12, 0
    %p32 = por %p30, %p31
    %p33 = scmp.ne.s32.totalorder %s22, %s25
    %p34 = scmp.eq.s32.totalorder %s17, 3
    %p35 = por %p33, %p34
    %p36 = scmp.ne.s32.totalorder %s25, %s26
    %p37 = scmp.eq.s32.totalorder %s17, 0
    %p38 = por %p36, %p37
    %p39 = scmp.ne.s32.totalorder %s25, %s26
    %p40 = scmp.eq.s32.totalorder %s18, 3
    %p41 = por %p39, %p40
    %p43 = scmp.ne.s32.totalorder %s26, %s42
    %p44 = scmp.eq.s32.totalorder %s18, 0
    %p45 = por %p43, %p44
    %s47 = sadd.s32 %s46, 1
    %p50 = scmp.eq.s32.totalorder %s12, 3
    %p51 = scmp.ne.s32.totalorder %s46, %s48
    %p52 = scmp.eq.s32.totalorder %s12, 0
    %p53 = por %p51, %p52
    %p54 = scmp.ne.s32.totalorder %s46, %s48
    %p55 = scmp.eq.s32.totalorder %s17, 3
    %p56 = por %p54, %p55
    %p57 = scmp.ne.s32.totalorder %s48, %s49
    %p58 = scmp.eq.s32.totalorder %s17, 0
    %p59 = por %p57, %p58
    %p60 = scmp.ne.s32.totalorder %s48, %s49
    %p61 = scmp.eq.s32.totalorder %s18, 3
    %p62 = por %p60, %p61
    %p64 = scmp.ne.s32.totalorder %s49, %s63
    %p65 = scmp.eq.s32.totalorder %s18, 0
    %p66 = por %p64, %p65
    %s68 = sadd.s32 %s67, 1
    %p71 = scmp.eq.s32.totalorder %s12, 3
    %p72 = scmp.ne.s32.totalorder %s67, %s69
    %p73 = scmp.eq.s32.totalorder %s12, 0
    %p74 = por %p72, %p73
    %p75 = scmp.ne.s32.totalorder %s67, %s69
    %p76 = scmp.eq.s32.totalorder %s17, 3
    %p77 = por %p75, %p76
    %p78 = scmp.ne.s32.totalorder %s69, %s70
    %p79 = scmp.eq.s32.totalorder %s17, 0
    %p80 = por %p78, %p79
    %p81 = scmp.ne.s32.totalorder %s69, %s70
    %p82 = scmp.eq.s32.totalorder %s18, 3
    %p83 = por %p81, %p82
    %p85 = scmp.ne.s32.totalorder %s70, %s84
    %p86 = scmp.eq.s32.totalorder %s18, 0
    %p87 = por %p85, %p86
    %s89 = sadd.s32 %s88, 1
    %p92 = scmp.eq.s32.totalorder %s12, 3
    %p93 = scmp.ne.s32.totalorder %s88, %s90
    %p94 = scmp.eq.s32.totalorder %s12, 0
    %p95 = por %p93, %p94
    %p96 = scmp.ne.s32.totalorder %s88, %s90
    %p97 = scmp.eq.s32.totalorder %s17, 3
    %p98 = por %p96, %p97
    %p99 = scmp.ne.s32.totalorder %s90, %s91
    %p100 = scmp.eq.s32.totalorder %s17, 0
    %p101 = por %p99, %p100
    %p102 = scmp.ne.s32.totalorder %s90, %s91
    %p103 = scmp.eq.s32.totalorder %s18, 3
    %p104 = por %p102, %p103
    %p106 = scmp.ne.s32.totalorder %s91, %s105
    %p107 = scmp.eq.s32.totalorder %s18, 0
    %p108 = por %p106, %p107
    %s110 = sadd.s32 %s109, 1
    %p113 = scmp.eq.s32.totalorder %s12, 3
    %p114 = scmp.ne.s32.totalorder %s109, %s111
    %p115 = scmp.eq.s32.totalorder %s12, 0
    %p116 = por %p114, %p115
    %p117 = scmp.ne.s32.totalorder %s109, %s111
    %p118 = scmp.eq.s32.totalorder %s17, 3
    %p119 = por %p117, %p118
    %p120 = scmp.ne.s32.totalorder %s111, %s112
    %p121 = scmp.eq.s32.totalorder %s17, 0
    %p122 = por %p120, %p121
    %p123 = scmp.ne.s32.totalorder %s111, %s112
    %p124 = scmp.eq.s32.totalorder %s18, 3
    %p125 = por %p123, %p124
    %p127 = scmp.ne.s32.totalorder %s112, %s126
    %p128 = scmp.eq.s32.totalorder %s18, 0
    %p129 = por %p127, %p128
    %s131 = sadd.s32 %s130, 1
    %p134 = scmp.eq.s32.totalorder %s12, 3
    %p135 = scmp.ne.s32.totalorder %s130, %s132
    %p136 = scmp.eq.s32.totalorder %s12, 0
    %p137 = por %p135, %p136
    %p138 = scmp.ne.s32.totalorder %s130, %s132
    %p139 = scmp.eq.s32.totalorder %s17, 3
    %p140 = por %p138, %p139
    %p141 = scmp.ne.s32.totalorder %s132, %s133
    %p142 = scmp.eq.s32.totalorder %s17, 0
    %p143 = por %p141, %p142
    %p144 = scmp.ne.s32.totalorder %s132, %s133
    %p145 = scmp.eq.s32.totalorder %s18, 3
    %p146 = por %p144, %p145
    %p148 = scmp.ne.s32.totalorder %s133, %s147
    %p149 = scmp.eq.s32.totalorder %s18, 0
    %p150 = por %p148, %p149
    %s151 = ssub.s32 %s12, %s19
    %p152 = scmp.eq.s32.totalorder %s151, 0
    %s154 = sadd.s32 %s153, 1
    %s155 = scalar_select %p152, %s153, %s154
    %p158 = pneg %p152
    %p159 = scmp.eq.s32.totalorder %s12, 3
    %p160 = por %p158, %p159
    %p161 = scmp.ne.s32.totalorder %s153, %s156
    %p162 = scmp.eq.s32.totalorder %s12, 0
    %p163 = por %p161, %p162
    %p164 = scmp.ne.s32.totalorder %s153, %s156
    %p165 = scmp.eq.s32.totalorder %s17, 3
    %p166 = por %p164, %p165
    %p167 = scmp.ne.s32.totalorder %s156, %s157
    %p168 = scmp.eq.s32.totalorder %s17, 0
    %p169 = por %p167, %p168
    %p170 = scmp.ne.s32.totalorder %s156, %s157
    %p171 = scmp.eq.s32.totalorder %s18, 3
    %p172 = por %p170, %p171
    %p174 = scmp.ne.s32.totalorder %s157, %s173
    %p175 = scmp.eq.s32.totalorder %s18, 0
    %p176 = por %p174, %p175
    %p177 = scmp.le.s32.totalorder 1, %s12
    %p178 = scmp.lt.s32.totalorder %s12, 5
    %p179 = pnand %p177, %p178
    %p180 = pneg %p179
    // Predicated region
    $region9: #{tpu_custom_call.1} parent=5 // pred_check
      _
    $region10: #{tpu_custom_call.1} parent=5 // pred_check_branch
      %182 = sbr.rel (%p179) target = $region12
    $region11: #{tpu_custom_call.1} parent=5 // pred_region
      %s183 = ssub.s32 %s12, 1
      // Predicated region
      $region13: #{tpu_custom_call.1} parent=11 // pred_check
        %p184 = pneg %p59
      $region14: #{tpu_custom_call.1} parent=11 // pred_check_branch
        %186 = sbr.rel (%p184) target = $region16
      $region15: #{tpu_custom_call.1} parent=11 // pred_region
        _
      $region16: #{tpu_custom_call.1} parent=11 // pred_fallthru
        _
      // Predicated region
      $region17: #{tpu_custom_call.1} parent=11 // pred_check
        %p187 = pneg %p80
      $region18: #{tpu_custom_call.1} parent=11 // pred_check_branch
        %189 = sbr.rel (%p187) target = $region20
      $region19: #{tpu_custom_call.1} parent=11 // pred_region
        _
      $region20: #{tpu_custom_call.1} parent=11 // pred_fallthru
        _
      // Predicated region
      $region21: #{tpu_custom_call.1} parent=11 // pred_check
        %p190 = pneg %p101
      $region22: #{tpu_custom_call.1} parent=11 // pred_check_branch
        %192 = sbr.rel (%p190) target = $region24
      $region23: #{tpu_custom_call.1} parent=11 // pred_region
        _
      $region24: #{tpu_custom_call.1} parent=11 // pred_fallthru
        _
      // Predicated region
      $region25: #{tpu_custom_call.1} parent=11 // pred_check
        %p193 = pneg %p122
      $region26: #{tpu_custom_call.1} parent=11 // pred_check_branch
        %195 = sbr.rel (%p193) target = $region28
      $region27: #{tpu_custom_call.1} parent=11 // pred_region
        _
      $region28: #{tpu_custom_call.1} parent=11 // pred_fallthru
        _
      // Predicated region
      $region29: #{tpu_custom_call.1} parent=11 // pred_check
        %p196 = pneg %p143
      $region30: #{tpu_custom_call.1} parent=11 // pred_check_branch
        %198 = sbr.rel (%p196) target = $region32
      $region31: #{tpu_custom_call.1} parent=11 // pred_region
        _
      $region32: #{tpu_custom_call.1} parent=11 // pred_fallthru
        _
    $region12: #{tpu_custom_call.1} parent=5 // pred_fallthru
      _
    %p199 = scmp.lt.s32.totalorder %s12, 4
    // Predicated region
    $region33: #{tpu_custom_call.1} parent=5 // pred_check
      %p200 = pneg %p199
    $region34: #{tpu_custom_call.1} parent=5 // pred_check_branch
      %202 = sbr.rel (%p200) target = $region36
    $region35: #{tpu_custom_call.1} parent=5 // pred_region
      // Predicated region
      $region37: #{tpu_custom_call.1} parent=35 // pred_check
        %p203 = pneg %p32
      $region38: #{tpu_custom_call.1} parent=35 // pred_check_branch
        %205 = sbr.rel (%p203) target = $region40
      $region39: #{tpu_custom_call.1} parent=35 // pred_region
        %s206 = smul.u32 4, %s12
        %p207 = scmp.lt.s32.totalorder %s206, 15
        %s208 = scalar_select %p207, %s206, 15
        %s209 = smul.addr %s208, 4
        %s210 = scalar_lea.vmem %s0, %s209
        %s211 = smul.u32 4, %s12
      $region40: #{tpu_custom_call.1} parent=35 // pred_fallthru
        _
    $region36: #{tpu_custom_call.1} parent=5 // pred_fallthru
      _
    %p212 = scmp.le.s32.totalorder 1, %s12
    %p213 = scmp.lt.s32.totalorder %s12, 5
    %p214 = pnand %p212, %p213
    %p215 = pneg %p214
    // Predicated region
    $region41: #{tpu_custom_call.1} parent=5 // pred_check
      _
    $region42: #{tpu_custom_call.1} parent=5 // pred_check_branch
      %217 = sbr.rel (%p214) target = $region44
    $region43: #{tpu_custom_call.1} parent=5 // pred_region
      %s218 = ssub.s32 %s12, 1
      %s219 = smul.u32 4, %s17
      %p220 = scmp.lt.s32.totalorder %s219, 15
      %s221 = scalar_select %p220, %s219, 15
      %s222 = smul.addr %s221, 4
      %s223 = scalar_lea.vmem %s0, %s222
      %p224 = pneg %p38
      %p225 = pneg %p35
      %p226 = pneg %p59
      %p227 = pneg %p56
      %p228 = pneg %p80
      %p229 = pneg %p77
      %p230 = pneg %p101
      %p231 = pneg %p98
      %p232 = pneg %p122
      %p233 = pneg %p119
      %p234 = pneg %p143
      %p235 = pneg %p140
      %p236 = pneg %p169
      %p237 = pneg %p166
      %s238 = smul.u32 4, %s17
      %p239 = scmp.lt.s32.totalorder %s238, 15
      %s240 = scalar_select %p239, %s238, 15
      %s241 = smul.addr %s240, 8
      %s242 = scalar_lea.vmem %s6, %s241
      %s243 = smul.u32 4, %s17
      %p244 = scmp.lt.s32.totalorder %s243, 15
      %s245 = scalar_select %p244, %s243, 15
      %s246 = smul.addr %s245, 4
      %s247 = scalar_lea.vmem %s0, %s246
      %s248 = smul.u32 4, %s17
      %s249 = smul.u32 4, %s17
      %p250 = scmp.lt.s32.totalorder %s249, 15
      %s251 = scalar_select %p250, %s249, 15
      %s252 = smul.addr %s251, 8
      %s253 = scalar_lea.vmem %s6, %s252
      %s254 = smul.u32 4, %s17
      %v256 = vld [vmem:[%s247] sm:$0xf]
      %v257 = vld [vmem:[%s247 + $0x4] sm:$0xf]
      %v258 = vld [vmem:[%s247 + $0x8] sm:$0xf]
      %v259 = vld [vmem:[%s247 + $0xc] sm:$0xf]
      %v260 = vld [vmem:[%s1] sm:$0xf]
      %v261 = vld [vmem:[%s1 + $0x4] sm:$0xf]
      %v262 = vld [vmem:[%s1 + $0x8] sm:$0xf]
      %v263 = vld [vmem:[%s1 + $0xc] sm:$0xf]
      %v264 = vld [vmem:[%s2] sm:$0x1]
      %v266 = vlaneseq
      %v267 = vshrl.u32 %v266, 7
      %v268 = vsub.s32 0, %v267
      %v269 = vrot.slane %v264, %v268
      %v275 = vunpack.c.l.b16 %v256
      %v276 = vunpack.c.l.b16 %v257
      %v277 = vunpack.c.l.b16 %v258
      %v278 = vunpack.c.l.b16 %v259
      %v279 = vpack.c.b16 %v276, %v275
      %v280 = vpack.c.b16 %v278, %v277
      %v285 = vunpack.c.l.b16 %v260
      %v286 = vunpack.c.l.b16 %v261
      %v287 = vunpack.c.l.b16 %v262
      %v288 = vunpack.c.l.b16 %v263
      %v289 = vpack.c.b16 %v286, %v285
      %v290 = vpack.c.b16 %v288, %v287
      %vm293 = vcmask 261120
      %v295 = vsel %vm293, %v279, 0
      %v298 = vsel %vm293, %v280, 0
      %300 = vmatprep.subr.bf16.mxu0 0
      %301 = vmatpush1.bf16.msra.mxu0 %v289
      %302 = vmatprep.subr.bf16.mxu0 0
      %303 = vmatpush1.bf16.msra.mxu0 %v290
      %304 = vmatprep.subr.bf16.mxu0 0
      %305 = vmatpush1.bf16.msra.mxu0 0
      %306 = vmatprep.subr.bf16.mxu0 0
      %307 = vmatpush1.bf16.msra.mxu0 0
      %308 = vmatprep.subr.bf16.mxu0 0
      %309 = vmatpush1.bf16.msra.mxu0 0
      %310 = vmatprep.subr.bf16.mxu0 0
      %311 = vmatpush1.bf16.msra.mxu0 0
      %312 = vmatprep.subr.bf16.mxu0 0
      %313 = vmatpush1.bf16.msra.mxu0 0
      %314 = vmatprep.subr.bf16.mxu0 0
      %315 = vmatpush1.bf16.msra.mxu0 0
      %316 = vmatprep.subr.bf16.mxu0 0
      %317 = vmatpush1.bf16.msra.mxu0 0
      %318 = vmatprep.subr.bf16.mxu0 0
      %319 = vmatpush1.bf16.msra.mxu0 0
      %320 = vmatprep.subr.bf16.mxu0 0
      %321 = vmatpush1.bf16.msra.mxu0 0
      %322 = vmatprep.subr.bf16.mxu0 0
      %323 = vmatpush1.bf16.msra.mxu0 0
      %324 = vmatprep.subr.bf16.mxu0 0
      %325 = vmatpush1.bf16.msra.mxu0 0
      %326 = vmatprep.subr.bf16.mxu0 0
      %327 = vmatpush1.bf16.msra.mxu0 0
      %328 = vmatprep.subr.bf16.mxu0 0
      %329 = vmatpush1.bf16.msra.mxu0 0
      %330 = vmatprep.subr.bf16.mxu0 0
      %331 = vmatpush1.bf16.msra.mxu0 0
      %332 = vmatprep.mubr.bf16.mxu0 0
      %333 = vmatmul.mubr.bf16.gmra.mrb[0].mxu0 %v295
      %v334 = vpop.f32.mrb[0].mxu0
      %v335 = vadd.f32 %v269, %v334
      %v336 = vpop.f32.mrb[0].mxu0
      %v337 = vpop.f32.mrb[0].mxu0
      %v338 = vadd.f32 %v269, %v337
      %v339 = vpop.f32.mrb[0].mxu0
      %340 = vmatprep.mubr.bf16.mxu0 0
      %341 = vmatmul.mubr.bf16.gmra.mrb[0].mxu0 %v298
      %v342 = vpop.f32.mrb[0].mxu0
      %v343 = vadd.f32 %v269, %v342
      %v344 = vpop.f32.mrb[0].mxu0
      %v345 = vpop.f32.mrb[0].mxu0
      %v346 = vadd.f32 %v269, %v345
      %v347 = vpop.f32.mrb[0].mxu0
      %348 = vdwg.mxu0
      %v349 = vpack.c.bf16 %v338, %v335
      %v350 = vpack.c.bf16 %v346, %v343
      %v351 = vld [vmem:[%s5] sm:$0xff]
      %v352 = vld [vmem:[%s5 + $0x8] sm:$0xff]
      %354 = vrot.lane.b32.xlu0 %v349, 96
      %v355 = vpop.permute.xlu0 %354
      %vm356 = vcmask 64512
      %v358 = vsel %vm356, %v349, 0
      %v361 = vsel %vm356, %v355, 0
      %363 = vmatprep.subr.bf16.mxu0 0
      %364 = vmatpush1.bf16.xpose.msra.mxu0 %v361
      %365 = vmatprep.subr.bf16.mxu0 0
      %366 = vmatpush1.bf16.xpose.msra.mxu0 0
      %367 = vmatprep.subr.bf16.mxu0 0
      %368 = vmatpush1.bf16.xpose.msra.mxu0 0
      %369 = vmatprep.subr.bf16.mxu0 0
      %370 = vmatpush1.bf16.xpose.msra.mxu0 0
      %371 = vmatprep.subr.bf16.mxu0 0
      %372 = vmatpush1.bf16.xpose.msra.mxu0 0
      %373 = vmatprep.subr.bf16.mxu0 0
      %374 = vmatpush1.bf16.xpose.msra.mxu0 0
      %375 = vmatprep.subr.bf16.mxu0 0
      %376 = vmatpush1.bf16.xpose.msra.mxu0 0
      %377 = vmatprep.subr.bf16.mxu0 0
      %378 = vmatpush1.bf16.xpose.msra.mxu0 0
      %379 = vmatprep.subr.bf16.mxu0 0
      %380 = vmatpush1.bf16.xpose.msra.mxu0 0
      %381 = vmatprep.subr.bf16.mxu0 0
      %382 = vmatpush1.bf16.xpose.msra.mxu0 0
      %383 = vmatprep.subr.bf16.mxu0 0
      %384 = vmatpush1.bf16.xpose.msra.mxu0 0
      %385 = vmatprep.subr.bf16.mxu0 0
      %386 = vmatpush1.bf16.xpose.msra.mxu0 0
      %387 = vmatprep.subr.bf16.mxu0 0
      %388 = vmatpush1.bf16.xpose.msra.mxu0 0
      %389 = vmatprep.subr.bf16.mxu0 0
      %390 = vmatpush1.bf16.xpose.msra.mxu0 0
      %391 = vmatprep.subr.bf16.mxu0 0
      %392 = vmatpush1.bf16.xpose.msra.mxu0 0
      %393 = vmatprep.subr.bf16.mxu0 0
      %394 = vmatpush1.bf16.xpose.msra.mxu0 0
      %395 = vmatprep.mubr.bf16.mxu0 0
      %396 = vmatmul.mubr.bf16.gmra.mrb[0].mxu0 %v358
      %v397 = vpop.f32.mrb[0].mxu0
      %v398 = vadd.f32 %v351, %v397
      %v399 = vpop.f32.mrb[0].mxu0
      %v400 = vpop.f32.mrb[0].mxu0
      %v401 = vadd.f32 %v352, %v400
      %v402 = vpop.f32.mrb[0].mxu0
      %403 = vdwg.mxu0
      %405 = vrot.lane.b32.xlu0 %v350, 96
      %v406 = vpop.permute.xlu0 %405
      %v408 = vsel %vm356, %v350, 0
      %v411 = vsel %vm356, %v406, 0
      %413 = vmatprep.subr.bf16.mxu0 0
      %414 = vmatpush1.bf16.xpose.msra.mxu0 %v411
      %415 = vmatprep.subr.bf16.mxu0 0
      %416 = vmatpush1.bf16.xpose.msra.mxu0 0
      %417 = vmatprep.subr.bf16.mxu0 0
      %418 = vmatpush1.bf16.xpose.msra.mxu0 0
      %419 = vmatprep.subr.bf16.mxu0 0
      %420 = vmatpush1.bf16.xpose.msra.mxu0 0
      %421 = vmatprep.subr.bf16.mxu0 0
      %422 = vmatpush1.bf16.xpose.msra.mxu0 0
      %423 = vmatprep.subr.bf16.mxu0 0
      %424 = vmatpush1.bf16.xpose.msra.mxu0 0
      %425 = vmatprep.subr.bf16.mxu0 0
      %426 = vmatpush1.bf16.xpose.msra.mxu0 0
      %427 = vmatprep.subr.bf16.mxu0 0
      %428 = vmatpush1.bf16.xpose.msra.mxu0 0
      %429 = vmatprep.subr.bf16.mxu0 0
      %430 = vmatpush1.bf16.xpose.msra.mxu0 0
      %431 = vmatprep.subr.bf16.mxu0 0
      %432 = vmatpush1.bf16.xpose.msra.mxu0 0
      %433 = vmatprep.subr.bf16.mxu0 0
      %434 = vmatpush1.bf16.xpose.msra.mxu0 0
      %435 = vmatprep.subr.bf16.mxu0 0
      %436 = vmatpush1.bf16.xpose.msra.mxu0 0
      %437 = vmatprep.subr.bf16.mxu0 0
      %438 = vmatpush1.bf16.xpose.msra.mxu0 0
      %439 = vmatprep.subr.bf16.mxu0 0
      %440 = vmatpush1.bf16.xpose.msra.mxu0 0
      %441 = vmatprep.subr.bf16.mxu0 0
      %442 = vmatpush1.bf16.xpose.msra.mxu0 0
      %443 = vmatprep.subr.bf16.mxu0 0
      %444 = vmatpush1.bf16.xpose.msra.mxu0 0
      %445 = vmatprep.mubr.bf16.mxu0 0
      %446 = vmatmul.mubr.bf16.gmra.mrb[0].mxu0 %v408
      %v447 = vpop.f32.mrb[0].mxu0
      %v448 = vadd.f32 %v351, %v447
      %v449 = vpop.f32.mrb[0].mxu0
      %v450 = vpop.f32.mrb[0].mxu0
      %v451 = vadd.f32 %v352, %v450
      %v452 = vpop.f32.mrb[0].mxu0
      %453 = vdwg.mxu0
      %vm454 = vcmask 130048
      %v455 = vsel %vm454, %v398, -inf
      %456 = vmax.xlane.f32.xlu0 %v455
      %v457 = vpop.xlane.xlu0 %456
      %v458 = vsel %vm454, %v401, -inf
      %459 = vmax.xlane.f32.xlu0 %v458
      %v460 = vpop.xlane.xlu0 %459
      %v461 = vsel %vm454, %v448, -inf
      %462 = vmax.xlane.f32.xlu0 %v461
      %v463 = vpop.xlane.xlu0 %462
      %v464 = vsel %vm454, %v451, -inf
      %465 = vmax.xlane.f32.xlu0 %v464
      %v466 = vpop.xlane.xlu0 %465
      %v467 = vsub.f32 %v398, %v457
      %v468 = vsub.f32 %v401, %v460
      %v469 = vsub.f32 %v448, %v463
      %v470 = vsub.f32 %v451, %v466
      %v471 = vmul.f32 %v467, 1.442695
      %v472 = vpow.pop %v471
      %v473 = vmul.f32 %v468, 1.442695
      %v474 = vpow.pop %v473
      %v475 = vmul.f32 %v469, 1.442695
      %v476 = vpow.pop %v475
      %v477 = vmul.f32 %v470, 1.442695
      %v478 = vpow.pop %v477
      %v479 = vsel %vm454, %v472, 0.0
      %480 = vadd.xlane.f32.xlu0 %v479
      %v481 = vpop.xlane.xlu0 %480
      %v482 = vsel %vm454, %v474, 0.0
      %483 = vadd.xlane.f32.xlu0 %v482
      %v484 = vpop.xlane.xlu0 %483
      %v485 = vsel %vm454, %v476, 0.0
      %486 = vadd.xlane.f32.xlu0 %v485
      %v487 = vpop.xlane.xlu0 %486
      %v488 = vsel %vm454, %v478, 0.0
      %489 = vadd.xlane.f32.xlu0 %v488
      %v490 = vpop.xlane.xlu0 %489
      %v491 = vrcp.pop %v481
      %v492 = vrcp.pop %v484
      %v493 = vrcp.pop %v487
      %v494 = vrcp.pop %v490
      %v495 = vmul.f32 %v472, %v491
      %v496 = vmul.f32 %v474, %v492
      %v497 = vmul.f32 %v476, %v493
      %v498 = vmul.f32 %v478, %v494
      %v499 = vpack.c.bf16 %v496, %v495
      %v500 = vpack.c.bf16 %v498, %v497
      %501 = vrot.lane.b32.xlu0 %v349, 64
      %v502 = vpop.permute.xlu0 %501
      %v505 = vsel %vm454, %v499, 0
      %507 = vmatprep.subr.bf16.mxu0 0
      %508 = vmatpush1.bf16.msra.mxu0 %v502
      %509 = vmatprep.subr.bf16.mxu0 0
      %510 = vmatpush1.bf16.msra.mxu0 0
      %511 = vmatprep.subr.bf16.mxu0 0
      %512 = vmatpush1.bf16.msra.mxu0 0
      %513 = vmatprep.subr.bf16.mxu0 0
      %514 = vmatpush1.bf16.msra.mxu0 0
      %515 = vmatprep.subr.bf16.mxu0 0
      %516 = vmatpush1.bf16.msra.mxu0 0
      %517 = vmatprep.subr.bf16.mxu0 0
      %518 = vmatpush1.bf16.msra.mxu0 0
      %519 = vmatprep.subr.bf16.mxu0 0
      %520 = vmatpush1.bf16.msra.mxu0 0
      %521 = vmatprep.subr.bf16.mxu0 0
      %522 = vmatpush1.bf16.msra.mxu0 0
      %523 = vmatprep.subr.bf16.mxu0 0
      %524 = vmatpush1.bf16.msra.mxu0 0
      %525 = vmatprep.subr.bf16.mxu0 0
      %526 = vmatpush1.bf16.msra.mxu0 0
      %527 = vmatprep.subr.bf16.mxu0 0
      %528 = vmatpush1.bf16.msra.mxu0 0
      %529 = vmatprep.subr.bf16.mxu0 0
      %530 = vmatpush1.bf16.msra.mxu0 0
      %531 = vmatprep.subr.bf16.mxu0 0
      %532 = vmatpush1.bf16.msra.mxu0 0
      %533 = vmatprep.subr.bf16.mxu0 0
      %534 = vmatpush1.bf16.msra.mxu0 0
      %535 = vmatprep.subr.bf16.mxu0 0
      %536 = vmatpush1.bf16.msra.mxu0 0
      %537 = vmatprep.subr.bf16.mxu0 0
      %538 = vmatpush1.bf16.msra.mxu0 0
      %539 = vmatprep.mubr.bf16.mxu0 0
      %540 = vmatmul.mubr.bf16.gmra.mrb[0].mxu0 %v505
      %v541 = vpop.f32.mrb[0].mxu0
      %v542 = vadd.f32 0.0, %v541
      %v543 = vpop.f32.mrb[0].mxu0
      %v544 = vpop.f32.mrb[0].mxu0
      %v545 = vadd.f32 0.0, %v544
      %v546 = vpop.f32.mrb[0].mxu0
      %547 = vdwg.mxu0
      %548 = vrot.lane.b32.xlu0 %v350, 64
      %v549 = vpop.permute.xlu0 %548
      %v552 = vsel %vm454, %v500, 0
      %554 = vmatprep.subr.bf16.mxu0 0
      %555 = vmatpush1.bf16.msra.mxu0 %v549
      %556 = vmatprep.subr.bf16.mxu0 0
      %557 = vmatpush1.bf16.msra.mxu0 0
      %558 = vmatprep.subr.bf16.mxu0 0
      %559 = vmatpush1.bf16.msra.mxu0 0
      %560 = vmatprep.subr.bf16.mxu0 0
      %561 = vmatpush1.bf16.msra.mxu0 0
      %562 = vmatprep.subr.bf16.mxu0 0
      %563 = vmatpush1.bf16.msra.mxu0 0
      %564 = vmatprep.subr.bf16.mxu0 0
      %565 = vmatpush1.bf16.msra.mxu0 0
      %566 = vmatprep.subr.bf16.mxu0 0
      %567 = vmatpush1.bf16.msra.mxu0 0
      %568 = vmatprep.subr.bf16.mxu0 0
      %569 = vmatpush1.bf16.msra.mxu0 0
      %570 = vmatprep.subr.bf16.mxu0 0
      %571 = vmatpush1.bf16.msra.mxu0 0
      %572 = vmatprep.subr.bf16.mxu0 0
      %573 = vmatpush1.bf16.msra.mxu0 0
      %574 = vmatprep.subr.bf16.mxu0 0
      %575 = vmatpush1.bf16.msra.mxu0 0
      %576 = vmatprep.subr.bf16.mxu0 0
      %577 = vmatpush1.bf16.msra.mxu0 0
      %578 = vmatprep.subr.bf16.mxu0 0
      %579 = vmatpush1.bf16.msra.mxu0 0
      %580 = vmatprep.subr.bf16.mxu0 0
      %581 = vmatpush1.bf16.msra.mxu0 0
      %582 = vmatprep.subr.bf16.mxu0 0
      %583 = vmatpush1.bf16.msra.mxu0 0
      %584 = vmatprep.subr.bf16.mxu0 0
      %585 = vmatpush1.bf16.msra.mxu0 0
      %586 = vmatprep.mubr.bf16.mxu0 0
      %587 = vmatmul.mubr.bf16.gmra.mrb[0].mxu0 %v552
      %v588 = vpop.f32.mrb[0].mxu0
      %v589 = vadd.f32 0.0, %v588
      %v590 = vpop.f32.mrb[0].mxu0
      %v591 = vpop.f32.mrb[0].mxu0
      %v592 = vadd.f32 0.0, %v591
      %v593 = vpop.f32.mrb[0].mxu0
      %594 = vdwg.mxu0
      %v595 = vpack.c.bf16 %v545, %v542
      %v596 = vpack.c.bf16 %v592, %v589
      %s597 = scalar_lea.vmem %s5, 16
      %v598 = vld [vmem:[%s597] sm:$0xff]
      %v599 = vld [vmem:[%s597 + $0x8] sm:$0xff]
      %600 = vrot.lane.b32.xlu0 %v349, 120
      %v601 = vpop.permute.xlu0 %600
      %602 = vrot.lane.b32.xlu0 %v349, 88
      %v603 = vpop.permute.xlu0 %602
      %v605 = vsel %vm356, %v601, 0
      %v608 = vsel %vm356, %v603, 0
      %610 = vmatprep.subr.bf16.mxu0 0
      %611 = vmatpush1.bf16.xpose.msra.mxu0 %v608
      %612 = vmatprep.subr.bf16.mxu0 0
      %613 = vmatpush1.bf16.xpose.msra.mxu0 0
      %614 = vmatprep.subr.bf16.mxu0 0
      %615 = vmatpush1.bf16.xpose.msra.mxu0 0
      %616 = vmatprep.subr.bf16.mxu0 0
      %617 = vmatpush1.bf16.xpose.msra.mxu0 0
      %618 = vmatprep.subr.bf16.mxu0 0
      %619 = vmatpush1.bf16.xpose.msra.mxu0 0
      %620 = vmatprep.subr.bf16.mxu0 0
      %621 = vmatpush1.bf16.xpose.msra.mxu0 0
      %622 = vmatprep.subr.bf16.mxu0 0
      %623 = vmatpush1.bf16.xpose.msra.mxu0 0
      %624 = vmatprep.subr.bf16.mxu0 0
      %625 = vmatpush1.bf16.xpose.msra.mxu0 0
      %626 = vmatprep.subr.bf16.mxu0 0
      %627 = vmatpush1.bf16.xpose.msra.mxu0 0
      %628 = vmatprep.subr.bf16.mxu0 0
      %629 = vmatpush1.bf16.xpose.msra.mxu0 0
      %630 = vmatprep.subr.bf16.mxu0 0
      %631 = vmatpush1.bf16.xpose.msra.mxu0 0
      %632 = vmatprep.subr.bf16.mxu0 0
      %633 = vmatpush1.bf16.xpose.msra.mxu0 0
      %634 = vmatprep.subr.bf16.mxu0 0
      %635 = vmatpush1.bf16.xpose.msra.mxu0 0
      %636 = vmatprep.subr.bf16.mxu0 0
      %637 = vmatpush1.bf16.xpose.msra.mxu0 0
      %638 = vmatprep.subr.bf16.mxu0 0
      %639 = vmatpush1.bf16.xpose.msra.mxu0 0
      %640 = vmatprep.subr.bf16.mxu0 0
      %641 = vmatpush1.bf16.xpose.msra.mxu0 0
      %642 = vmatprep.mubr.bf16.mxu0 0
      %643 = vmatmul.mubr.bf16.gmra.mrb[0].mxu0 %v605
      %v644 = vpop.f32.mrb[0].mxu0
      %v645 = vadd.f32 %v598, %v644
      %v646 = vpop.f32.mrb[0].mxu0
      %v647 = vpop.f32.mrb[0].mxu0
      %v648 = vadd.f32 %v599, %v647
      %v649 = vpop.f32.mrb[0].mxu0
      %650 = vdwg.mxu0
      %651 = vrot.lane.b32.xlu0 %v350, 120
      %v652 = vpop.permute.xlu0 %651
      %653 = vrot.lane.b32.xlu0 %v350, 88
      %v654 = vpop.permute.xlu0 %653
      %v656 = vsel %vm356, %v652, 0
      %v659 = vsel %vm356, %v654, 0
      %661 = vmatprep.subr.bf16.mxu0 0
      %662 = vmatpush1.bf16.xpose.msra.mxu0 %v659
      %663 = vmatprep.subr.bf16.mxu0 0
      %664 = vmatpush1.bf16.xpose.msra.mxu0 0
      %665 = vmatprep.subr.bf16.mxu0 0
      %666 = vmatpush1.bf16.xpose.msra.mxu0 0
      %667 = vmatprep.subr.bf16.mxu0 0
      %668 = vmatpush1.bf16.xpose.msra.mxu0 0
      %669 = vmatprep.subr.bf16.mxu0 0
      %670 = vmatpush1.bf16.xpose.msra.mxu0 0
      %671 = vmatprep.subr.bf16.mxu0 0
      %672 = vmatpush1.bf16.xpose.msra.mxu0 0
      %673 = vmatprep.subr.bf16.mxu0 0
      %674 = vmatpush1.bf16.xpose.msra.mxu0 0
      %675 = vmatprep.subr.bf16.mxu0 0
      %676 = vmatpush1.bf16.xpose.msra.mxu0 0
      %677 = vmatprep.subr.bf16.mxu0 0
      %678 = vmatpush1.bf16.xpose.msra.mxu0 0
      %679 = vmatprep.subr.bf16.mxu0 0
      %680 = vmatpush1.bf16.xpose.msra.mxu0 0
      %681 = vmatprep.subr.bf16.mxu0 0
      %682 = vmatpush1.bf16.xpose.msra.mxu0 0
      %683 = vmatprep.subr.bf16.mxu0 0
      %684 = vmatpush1.bf16.xpose.msra.mxu0 0
      %685 = vmatprep.subr.bf16.mxu0 0
      %686 = vmatpush1.bf16.xpose.msra.mxu0 0
      %687 = vmatprep.subr.bf16.mxu0 0
      %688 = vmatpush1.bf16.xpose.msra.mxu0 0
      %689 = vmatprep.subr.bf16.mxu0 0
      %690 = vmatpush1.bf16.xpose.msra.mxu0 0
      %691 = vmatprep.subr.bf16.mxu0 0
      %692 = vmatpush1.bf16.xpose.msra.mxu0 0
      %693 = vmatprep.mubr.bf16.mxu0 0
      %694 = vmatmul.mubr.bf16.gmra.mrb[0].mxu0 %v656
      %v695 = vpop.f32.mrb[0].mxu0
      %v696 = vadd.f32 %v598, %v695
      %v697 = vpop.f32.mrb[0].mxu0
      %v698 = vpop.f32.mrb[0].mxu0
      %v699 = vadd.f32 %v599, %v698
      %v700 = vpop.f32.mrb[0].mxu0
      %701 = vdwg.mxu0
      %v702 = vsel %vm454, %v645, -inf
      %703 = vmax.xlane.f32.xlu0 %v702
      %v704 = vpop.xlane.xlu0 %703
      %v705 = vsel %vm454, %v648, -inf
      %706 = vmax.xlane.f32.xlu0 %v705
      %v707 = vpop.xlane.xlu0 %706
      %v708 = vsel %vm454, %v696, -inf
      %709 = vmax.xlane.f32.xlu0 %v708
      %v710 = vpop.xlane.xlu0 %709
      %v711 = vsel %vm454, %v699, -inf
      %712 = vmax.xlane.f32.xlu0 %v711
      %v713 = vpop.xlane.xlu0 %712
      %v714 = vsub.f32 %v645, %v704
      %v715 = vsub.f32 %v648, %v707
      %v716 = vsub.f32 %v696, %v710
      %v717 = vsub.f32 %v699, %v713
      %v718 = vmul.f32 %v714, 1.442695
      %v719 = vpow.pop %v718
      %v720 = vmul.f32 %v715, 1.442695
      %v721 = vpow.pop %v720
      %v722 = vmul.f32 %v716, 1.442695
      %v723 = vpow.pop %v722
      %v724 = vmul.f32 %v717, 1.442695
      %v725 = vpow.pop %v724
      %v726 = vsel %vm454, %v719, 0.0
      %727 = vadd.xlane.f32.xlu0 %v726
      %v728 = vpop.xlane.xlu0 %727
      %v729 = vsel %vm454, %v721, 0.0
      %730 = vadd.xlane.f32.xlu0 %v729
      %v731 = vpop.xlane.xlu0 %730
      %v732 = vsel %vm454, %v723, 0.0
      %733 = vadd.xlane.f32.xlu0 %v732
      %v734 = vpop.xlane.xlu0 %733
      %v735 = vsel %vm454, %v725, 0.0
      %736 = vadd.xlane.f32.xlu0 %v735
      %v737 = vpop.xlane.xlu0 %736
      %v738 = vrcp.pop %v728
      %v739 = vrcp.pop %v731
      %v740 = vrcp.pop %v734
      %v741 = vrcp.pop %v737
      %v742 = vmul.f32 %v719, %v738
      %v743 = vmul.f32 %v721, %v739
      %v744 = vmul.f32 %v723, %v740
      %v745 = vmul.f32 %v725, %v741
      %v746 = vpack.c.bf16 %v743, %v742
      %v747 = vpack.c.bf16 %v745, %v744
      %748 = vrot.lane.b32.xlu0 %v349, 56
      %v749 = vpop.permute.xlu0 %748
      %v752 = vsel %vm454, %v746, 0
      %754 = vmatprep.subr.bf16.mxu0 0
      %755 = vmatpush1.bf16.msra.mxu0 %v749
      %756 = vmatprep.subr.bf16.mxu0 0
      %757 = vmatpush1.bf16.msra.mxu0 0
      %758 = vmatprep.subr.bf16.mxu0 0
      %759 = vmatpush1.bf16.msra.mxu0 0
      %760 = vmatprep.subr.bf16.mxu0 0
      %761 = vmatpush1.bf16.msra.mxu0 0
      %762 = vmatprep.subr.bf16.mxu0 0
      %763 = vmatpush1.bf16.msra.mxu0 0
      %764 = vmatprep.subr.bf16.mxu0 0
      %765 = vmatpush1.bf16.msra.mxu0 0
      %766 = vmatprep.subr.bf16.mxu0 0
      %767 = vmatpush1.bf16.msra.mxu0 0
      %768 = vmatprep.subr.bf16.mxu0 0
      %769 = vmatpush1.bf16.msra.mxu0 0
      %770 = vmatprep.subr.bf16.mxu0 0
      %771 = vmatpush1.bf16.msra.mxu0 0
      %772 = vmatprep.subr.bf16.mxu0 0
      %773 = vmatpush1.bf16.msra.mxu0 0
      %774 = vmatprep.subr.bf16.mxu0 0
      %775 = vmatpush1.bf16.msra.mxu0 0
      %776 = vmatprep.subr.bf16.mxu0 0
      %777 = vmatpush1.bf16.msra.mxu0 0
      %778 = vmatprep.subr.bf16.mxu0 0
      %779 = vmatpush1.bf16.msra.mxu0 0
      %780 = vmatprep.subr.bf16.mxu0 0
      %781 = vmatpush1.bf16.msra.mxu0 0
      %782 = vmatprep.subr.bf16.mxu0 0
      %783 = vmatpush1.bf16.msra.mxu0 0
      %784 = vmatprep.subr.bf16.mxu0 0
      %785 = vmatpush1.bf16.msra.mxu0 0
      %786 = vmatprep.mubr.bf16.mxu0 0
      %787 = vmatmul.mubr.bf16.gmra.mrb[0].mxu0 %v752
      %v788 = vpop.f32.mrb[0].mxu0
      %v789 = vadd.f32 0.0, %v788
      %v790 = vpop.f32.mrb[0].mxu0
      %v791 = vpop.f32.mrb[0].mxu0
      %v792 = vadd.f32 0.0, %v791
      %v793 = vpop.f32.mrb[0].mxu0
      %794 = vdwg.mxu0
      %795 = vrot.lane.b32.xlu0 %v350, 56
      %v796 = vpop.permute.xlu0 %795
      %v799 = vsel %vm454, %v747, 0
      %801 = vmatprep.subr.bf16.mxu0 0
      %802 = vmatpush1.bf16.msra.mxu0 %v796
      %803 = vmatprep.subr.bf16.mxu0 0
      %804 = vmatpush1.bf16.msra.mxu0 0
      %805 = vmatprep.subr.bf16.mxu0 0
      %806 = vmatpush1.bf16.msra.mxu0 0
      %807 = vmatprep.subr.bf16.mxu0 0
      %808 = vmatpush1.bf16.msra.mxu0 0
      %809 = vmatprep.subr.bf16.mxu0 0
      %810 = vmatpush1.bf16.msra.mxu0 0
      %811 = vmatprep.subr.bf16.mxu0 0
      %812 = vmatpush1.bf16.msra.mxu0 0
      %813 = vmatprep.subr.bf16.mxu0 0
      %814 = vmatpush1.bf16.msra.mxu0 0
      %815 = vmatprep.subr.bf16.mxu0 0
      %816 = vmatpush1.bf16.msra.mxu0 0
      %817 = vmatprep.subr.bf16.mxu0 0
      %818 = vmatpush1.bf16.msra.mxu0 0
      %819 = vmatprep.subr.bf16.mxu0 0
      %820 = vmatpush1.bf16.msra.mxu0 0
      %821 = vmatprep.subr.bf16.mxu0 0
      %822 = vmatpush1.bf16.msra.mxu0 0
      %823 = vmatprep.subr.bf16.mxu0 0
      %824 = vmatpush1.bf16.msra.mxu0 0
      %825 = vmatprep.subr.bf16.mxu0 0
      %826 = vmatpush1.bf16.msra.mxu0 0
      %827 = vmatprep.subr.bf16.mxu0 0
      %828 = vmatpush1.bf16.msra.mxu0 0
      %829 = vmatprep.subr.bf16.mxu0 0
      %830 = vmatpush1.bf16.msra.mxu0 0
      %831 = vmatprep.subr.bf16.mxu0 0
      %832 = vmatpush1.bf16.msra.mxu0 0
      %833 = vmatprep.mubr.bf16.mxu0 0
      %834 = vmatmul.mubr.bf16.gmra.mrb[0].mxu0 %v799
      %v835 = vpop.f32.mrb[0].mxu0
      %v836 = vadd.f32 0.0, %v835
      %v837 = vpop.f32.mrb[0].mxu0
      %v838 = vpop.f32.mrb[0].mxu0
      %v839 = vadd.f32 0.0, %v838
      %v840 = vpop.f32.mrb[0].mxu0
      %841 = vdwg.mxu0
      %v842 = vpack.c.bf16 %v792, %v789
      %v843 = vpack.c.bf16 %v839, %v836
      %s844 = scalar_lea.vmem %s5, 32
      %v845 = vld [vmem:[%s844] sm:$0xff]
      %v846 = vld [vmem:[%s844 + $0x8] sm:$0xff]
      %847 = vrot.lane.b32.xlu0 %v349, 112
      %v848 = vpop.permute.xlu0 %847
      %849 = vrot.lane.b32.xlu0 %v349, 80
      %v850 = vpop.permute.xlu0 %849
      %v852 = vsel %vm356, %v848, 0
      %v855 = vsel %vm356, %v850, 0
      %857 = vmatprep.subr.bf16.mxu0 0
      %858 = vmatpush1.bf16.xpose.msra.mxu0 %v855
      %859 = vmatprep.subr.bf16.mxu0 0
      %860 = vmatpush1.bf16.xpose.msra.mxu0 0
      %861 = vmatprep.subr.bf16.mxu0 0
      %862 = vmatpush1.bf16.xpose.msra.mxu0 0
      %863 = vmatprep.subr.bf16.mxu0 0
      %864 = vmatpush1.bf16.xpose.msra.mxu0 0
      %865 = vmatprep.subr.bf16.mxu0 0
      %866 = vmatpush1.bf16.xpose.msra.mxu0 0
      %867 = vmatprep.subr.bf16.mxu0 0
      %868 = vmatpush1.bf16.xpose.msra.mxu0 0
      %869 = vmatprep.subr.bf16.mxu0 0
      %870 = vmatpush1.bf16.xpose.msra.mxu0 0
      %871 = vmatprep.subr.bf16.mxu0 0
      %872 = vmatpush1.bf16.xpose.msra.mxu0 0
      %873 = vmatprep.subr.bf16.mxu0 0
      %874 = vmatpush1.bf16.xpose.msra.mxu0 0
      %875 = vmatprep.subr.bf16.mxu0 0
      %876 = vmatpush1.bf16.xpose.msra.mxu0 0
      %877 = vmatprep.subr.bf16.mxu0 0
      %878 = vmatpush1.bf16.xpose.msra.mxu0 0
      %879 = vmatprep.subr.bf16.mxu0 0
      %880 = vmatpush1.bf16.xpose.msra.mxu0 0
      %881 = vmatprep.subr.bf16.mxu0 0
      %882 = vmatpush1.bf16.xpose.msra.mxu0 0
      %883 = vmatprep.subr.bf16.mxu0 0
      %884 = vmatpush1.bf16.xpose.msra.mxu0 0
      %885 = vmatprep.subr.bf16.mxu0 0
      %886 = vmatpush1.bf16.xpose.msra.mxu0 0
      %887 = vmatprep.subr.bf16.mxu0 0
      %888 = vmatpush1.bf16.xpose.msra.mxu0 0
      %889 = vmatprep.mubr.bf16.mxu0 0
      %890 = vmatmul.mubr.bf16.gmra.mrb[0].mxu0 %v852
      %v891 = vpop.f32.mrb[0].mxu0
      %v892 = vadd.f32 %v845, %v891
      %v893 = vpop.f32.mrb[0].mxu0
      %v894 = vpop.f32.mrb[0].mxu0
      %v895 = vadd.f32 %v846, %v894
      %v896 = vpop.f32.mrb[0].mxu0
      %897 = vdwg.mxu0
      %898 = vrot.lane.b32.xlu0 %v350, 112
      %v899 = vpop.permute.xlu0 %898
      %900 = vrot.lane.b32.xlu0 %v350, 80
      %v901 = vpop.permute.xlu0 %900
      %v903 = vsel %vm356, %v899, 0
      %v906 = vsel %vm356, %v901, 0
      %908 = vmatprep.subr.bf16.mxu0 0
      %909 = vmatpush1.bf16.xpose.msra.mxu0 %v906
      %910 = vmatprep.subr.bf16.mxu0 0
      %911 = vmatpush1.bf16.xpose.msra.mxu0 0
      %912 = vmatprep.subr.bf16.mxu0 0
      %913 = vmatpush1.bf16.xpose.msra.mxu0 0
      %914 = vmatprep.subr.bf16.mxu0 0
      %915 = vmatpush1.bf16.xpose.msra.mxu0 0
      %916 = vmatprep.subr.bf16.mxu0 0
      %917 = vmatpush1.bf16.xpose.msra.mxu0 0
      %918 = vmatprep.subr.bf16.mxu0 0
      %919 = vmatpush1.bf16.xpose.msra.mxu0 0
      %920 = vmatprep.subr.bf16.mxu0 0
      %921 = vmatpush1.bf16.xpose.msra.mxu0 0
      %922 = vmatprep.subr.bf16.mxu0 0
      %923 = vmatpush1.bf16.xpose.msra.mxu0 0
      %924 = vmatprep.subr.bf16.mxu0 0
      %925 = vmatpush1.bf16.xpose.msra.mxu0 0
      %926 = vmatprep.subr.bf16.mxu0 0
      %927 = vmatpush1.bf16.xpose.msra.mxu0 0
      %928 = vmatprep.subr.bf16.mxu0 0
      %929 = vmatpush1.bf16.xpose.msra.mxu0 0
      %930 = vmatprep.subr.bf16.mxu0 0
      %931 = vmatpush1.bf16.xpose.msra.mxu0 0
      %932 = vmatprep.subr.bf16.mxu0 0
      %933 = vmatpush1.bf16.xpose.msra.mxu0 0
      %934 = vmatprep.subr.bf16.mxu0 0
      %935 = vmatpush1.bf16.xpose.msra.mxu0 0
      %936 = vmatprep.subr.bf16.mxu0 0
      %937 = vmatpush1.bf16.xpose.msra.mxu0 0
      %938 = vmatprep.subr.bf16.mxu0 0
      %939 = vmatpush1.bf16.xpose.msra.mxu0 0
      %940 = vmatprep.mubr.bf16.mxu0 0
      %941 = vmatmul.mubr.bf16.gmra.mrb[0].mxu0 %v903
      %v942 = vpop.f32.mrb[0].mxu0
      %v943 = vadd.f32 %v845, %v942
      %v944 = vpop.f32.mrb[0].mxu0
      %v945 = vpop.f32.mrb[0].mxu0
      %v946 = vadd.f32 %v846, %v945
      %v947 = vpop.f32.mrb[0].mxu0
      %948 = vdwg.mxu0
      %v949 = vsel %vm454, %v892, -inf
      %950 = vmax.xlane.f32.xlu0 %v949
      %v951 = vpop.xlane.xlu0 %950
      %v952 = vsel %vm454, %v895, -inf
      %953 = vmax.xlane.f32.xlu0 %v952
      %v954 = vpop.xlane.xlu0 %953
      %v955 = vsel %vm454, %v943, -inf
      %956 = vmax.xlane.f32.xlu0 %v955
      %v957 = vpop.xlane.xlu0 %956
      %v958 = vsel %vm454, %v946, -inf
      %959 = vmax.xlane.f32.xlu0 %v958
      %v960 = vpop.xlane.xlu0 %959
      %v961 = vsub.f32 %v892, %v951
      %v962 = vsub.f32 %v895, %v954
      %v963 = vsub.f32 %v943, %v957
      %v964 = vsub.f32 %v946, %v960
      %v965 = vmul.f32 %v961, 1.442695
      %v966 = vpow.pop %v965
      %v967 = vmul.f32 %v962, 1.442695
      %v968 = vpow.pop %v967
      %v969 = vmul.f32 %v963, 1.442695
      %v970 = vpow.pop %v969
      %v971 = vmul.f32 %v964, 1.442695
      %v972 = vpow.pop %v971
      %v973 = vsel %vm454, %v966, 0.0
      %974 = vadd.xlane.f32.xlu0 %v973
      %v975 = vpop.xlane.xlu0 %974
      %v976 = vsel %vm454, %v968, 0.0
      %977 = vadd.xlane.f32.xlu0 %v976
      %v978 = vpop.xlane.xlu0 %977
      %v979 = vsel %vm454, %v970, 0.0
      %980 = vadd.xlane.f32.xlu0 %v979
      %v981 = vpop.xlane.xlu0 %980
      %v982 = vsel %vm454, %v972, 0.0
      %983 = vadd.xlane.f32.xlu0 %v982
      %v984 = vpop.xlane.xlu0 %983
      %v985 = vrcp.pop %v975
      %v986 = vrcp.pop %v978
      %v987 = vrcp.pop %v981
      %v988 = vrcp.pop %v984
      %v989 = vmul.f32 %v966, %v985
      %v990 = vmul.f32 %v968, %v986
      %v991 = vmul.f32 %v970, %v987
      %v992 = vmul.f32 %v972, %v988
      %v993 = vpack.c.bf16 %v990, %v989
      %v994 = vpack.c.bf16 %v992, %v991
      %995 = vrot.lane.b32.xlu0 %v349, 48
      %v996 = vpop.permute.xlu0 %995
      %v999 = vsel %vm454, %v993, 0
      %1001 = vmatprep.subr.bf16.mxu0 0
      %1002 = vmatpush1.bf16.msra.mxu0 %v996
      %1003 = vmatprep.subr.bf16.mxu0 0
      %1004 = vmatpush1.bf16.msra.mxu0 0
      %1005 = vmatprep.subr.bf16.mxu0 0
      %1006 = vmatpush1.bf16.msra.mxu0 0
      %1007 = vmatprep.subr.bf16.mxu0 0
      %1008 = vmatpush1.bf16.msra.mxu0 0
      %1009 = vmatprep.subr.bf16.mxu0 0
      %1010 = vmatpush1.bf16.msra.mxu0 0
      %1011 = vmatprep.subr.bf16.mxu0 0
      %1012 = vmatpush1.bf16.msra.mxu0 0
      %1013 = vmatprep.subr.bf16.mxu0 0
      %1014 = vmatpush1.bf16.msra.mxu0 0
      %1015 = vmatprep.subr.bf16.mxu0 0
      %1016 = vmatpush1.bf16.msra.mxu0 0
      %1017 = vmatprep.subr.bf16.mxu0 0
      %1018 = vmatpush1.bf16.msra.mxu0 0
      %1019 = vmatprep.subr.bf16.mxu0 0
      %1020 = vmatpush1.bf16.msra.mxu0 0
      %1021 = vmatprep.subr.bf16.mxu0 0
      %1022 = vmatpush1.bf16.msra.mxu0 0
      %1023 = vmatprep.subr.bf16.mxu0 0
      %1024 = vmatpush1.bf16.msra.mxu0 0
      %1025 = vmatprep.subr.bf16.mxu0 0
      %1026 = vmatpush1.bf16.msra.mxu0 0
      %1027 = vmatprep.subr.bf16.mxu0 0
      %1028 = vmatpush1.bf16.msra.mxu0 0
      %1029 = vmatprep.subr.bf16.mxu0 0
      %1030 = vmatpush1.bf16.msra.mxu0 0
      %1031 = vmatprep.subr.bf16.mxu0 0
      %1032 = vmatpush1.bf16.msra.mxu0 0
      %1033 = vmatprep.mubr.bf16.mxu0 0
      %1034 = vmatmul.mubr.bf16.gmra.mrb[0].mxu0 %v999
      %v1035 = vpop.f32.mrb[0].mxu0
      %v1036 = vadd.f32 0.0, %v1035
      %v1037 = vpop.f32.mrb[0].mxu0
      %v1038 = vpop.f32.mrb[0].mxu0
      %v1039 = vadd.f32 0.0, %v1038
      %v1040 = vpop.f32.mrb[0].mxu0
      %1041 = vdwg.mxu0
      %1042 = vrot.lane.b32.xlu0 %v350, 48
      %v1043 = vpop.permute.xlu0 %1042
      %v1046 = vsel %vm454, %v994, 0
      %1048 = vmatprep.subr.bf16.mxu0 0
      %1049 = vmatpush1.bf16.msra.mxu0 %v1043
      %1050 = vmatprep.subr.bf16.mxu0 0
      %1051 = vmatpush1.bf16.msra.mxu0 0
      %1052 = vmatprep.subr.bf16.mxu0 0
      %1053 = vmatpush1.bf16.msra.mxu0 0
      %1054 = vmatprep.subr.bf16.mxu0 0
      %1055 = vmatpush1.bf16.msra.mxu0 0
      %1056 = vmatprep.subr.bf16.mxu0 0
      %1057 = vmatpush1.bf16.msra.mxu0 0
      %1058 = vmatprep.subr.bf16.mxu0 0
      %1059 = vmatpush1.bf16.msra.mxu0 0
      %1060 = vmatprep.subr.bf16.mxu0 0
      %1061 = vmatpush1.bf16.msra.mxu0 0
      %1062 = vmatprep.subr.bf16.mxu0 0
      %1063 = vmatpush1.bf16.msra.mxu0 0
      %1064 = vmatprep.subr.bf16.mxu0 0
      %1065 = vmatpush1.bf16.msra.mxu0 0
      %1066 = vmatprep.subr.bf16.mxu0 0
      %1067 = vmatpush1.bf16.msra.mxu0 0
      %1068 = vmatprep.subr.bf16.mxu0 0
      %1069 = vmatpush1.bf16.msra.mxu0 0
      %1070 = vmatprep.subr.bf16.mxu0 0
      %1071 = vmatpush1.bf16.msra.mxu0 0
      %1072 = vmatprep.subr.bf16.mxu0 0
      %1073 = vmatpush1.bf16.msra.mxu0 0
      %1074 = vmatprep.subr.bf16.mxu0 0
      %1075 = vmatpush1.bf16.msra.mxu0 0
      %1076 = vmatprep.subr.bf16.mxu0 0
      %1077 = vmatpush1.bf16.msra.mxu0 0
      %1078 = vmatprep.subr.bf16.mxu0 0
      %1079 = vmatpush1.bf16.msra.mxu0 0
      %1080 = vmatprep.mubr.bf16.mxu0 0
      %1081 = vmatmul.mubr.bf16.gmra.mrb[0].mxu0 %v1046
      %v1082 = vpop.f32.mrb[0].mxu0
      %v1083 = vadd.f32 0.0, %v1082
      %v1084 = vpop.f32.mrb[0].mxu0
      %v1085 = vpop.f32.mrb[0].mxu0
      %v1086 = vadd.f32 0.0, %v1085
      %v1087 = vpop.f32.mrb[0].mxu0
      %1088 = vdwg.mxu0
      %v1089 = vpack.c.bf16 %v1039, %v1036
      %v1090 = vpack.c.bf16 %v1086, %v1083
      %s1091 = scalar_lea.vmem %s5, 48
      %v1092 = vld [vmem:[%s1091] sm:$0xff]
      %v1093 = vld [vmem:[%s1091 + $0x8] sm:$0xff]
      %1094 = vrot.lane.b32.xlu0 %v349, 104
      %v1095 = vpop.permute.xlu0 %1094
      %1096 = vrot.lane.b32.xlu0 %v349, 72
      %v1097 = vpop.permute.xlu0 %1096
      %v1099 = vsel %vm356, %v1095, 0
      %v1102 = vsel %vm356, %v1097, 0
      %1104 = vmatprep.subr.bf16.mxu0 0
      %1105 = vmatpush1.bf16.xpose.msra.mxu0 %v1102
      %1106 = vmatprep.subr.bf16.mxu0 0
      %1107 = vmatpush1.bf16.xpose.msra.mxu0 0
      %1108 = vmatprep.subr.bf16.mxu0 0
      %1109 = vmatpush1.bf16.xpose.msra.mxu0 0
      %1110 = vmatprep.subr.bf16.mxu0 0
      %1111 = vmatpush1.bf16.xpose.msra.mxu0 0
      %1112 = vmatprep.subr.bf16.mxu0 0
      %1113 = vmatpush1.bf16.xpose.msra.mxu0 0
      %1114 = vmatprep.subr.bf16.mxu0 0
      %1115 = vmatpush1.bf16.xpose.msra.mxu0 0
      %1116 = vmatprep.subr.bf16.mxu0 0
      %1117 = vmatpush1.bf16.xpose.msra.mxu0 0
      %1118 = vmatprep.subr.bf16.mxu0 0
      %1119 = vmatpush1.bf16.xpose.msra.mxu0 0
      %1120 = vmatprep.subr.bf16.mxu0 0
      %1121 = vmatpush1.bf16.xpose.msra.mxu0 0
      %1122 = vmatprep.subr.bf16.mxu0 0
      %1123 = vmatpush1.bf16.xpose.msra.mxu0 0
      %1124 = vmatprep.subr.bf16.mxu0 0
      %1125 = vmatpush1.bf16.xpose.msra.mxu0 0
      %1126 = vmatprep.subr.bf16.mxu0 0
      %1127 = vmatpush1.bf16.xpose.msra.mxu0 0
      %1128 = vmatprep.subr.bf16.mxu0 0
      %1129 = vmatpush1.bf16.xpose.msra.mxu0 0
      %1130 = vmatprep.subr.bf16.mxu0 0
      %1131 = vmatpush1.bf16.xpose.msra.mxu0 0
      %1132 = vmatprep.subr.bf16.mxu0 0
      %1133 = vmatpush1.bf16.xpose.msra.mxu0 0
      %1134 = vmatprep.subr.bf16.mxu0 0
      %1135 = vmatpush1.bf16.xpose.msra.mxu0 0
      %1136 = vmatprep.mubr.bf16.mxu0 0
      %1137 = vmatmul.mubr.bf16.gmra.mrb[0].mxu0 %v1099
      %v1138 = vpop.f32.mrb[0].mxu0
      %v1139 = vadd.f32 %v1092, %v1138
      %v1140 = vpop.f32.mrb[0].mxu0
      %v1141 = vpop.f32.mrb[0].mxu0
      %v1142 = vadd.f32 %v1093, %v1141
      %v1143 = vpop.f32.mrb[0].mxu0
      %1144 = vdwg.mxu0
      %1145 = vrot.lane.b32.xlu0 %v350, 104
      %v1146 = vpop.permute.xlu0 %1145
      %1147 = vrot.lane.b32.xlu0 %v350, 72
      %v1148 = vpop.permute.xlu0 %1147
      %v1150 = vsel %vm356, %v1146, 0
      %v1153 = vsel %vm356, %v1148, 0
      %1155 = vmatprep.subr.bf16.mxu0 0
      %1156 = vmatpush1.bf16.xpose.msra.mxu0 %v1153
      %1157 = vmatprep.subr.bf16.mxu0 0
      %1158 = vmatpush1.bf16.xpose.msra.mxu0 0
      %1159 = vmatprep.subr.bf16.mxu0 0
      %1160 = vmatpush1.bf16.xpose.msra.mxu0 0
      %1161 = vmatprep.subr.bf16.mxu0 0
      %1162 = vmatpush1.bf16.xpose.msra.mxu0 0
      %1163 = vmatprep.subr.bf16.mxu0 0
      %1164 = vmatpush1.bf16.xpose.msra.mxu0 0
      %1165 = vmatprep.subr.bf16.mxu0 0
      %1166 = vmatpush1.bf16.xpose.msra.mxu0 0
      %1167 = vmatprep.subr.bf16.mxu0 0
      %1168 = vmatpush1.bf16.xpose.msra.mxu0 0
      %1169 = vmatprep.subr.bf16.mxu0 0
      %1170 = vmatpush1.bf16.xpose.msra.mxu0 0
      %1171 = vmatprep.subr.bf16.mxu0 0
      %1172 = vmatpush1.bf16.xpose.msra.mxu0 0
      %1173 = vmatprep.subr.bf16.mxu0 0
      %1174 = vmatpush1.bf16.xpose.msra.mxu0 0
      %1175 = vmatprep.subr.bf16.mxu0 0
      %1176 = vmatpush1.bf16.xpose.msra.mxu0 0
      %1177 = vmatprep.subr.bf16.mxu0 0
      %1178 = vmatpush1.bf16.xpose.msra.mxu0 0
      %1179 = vmatprep.subr.bf16.mxu0 0
      %1180 = vmatpush1.bf16.xpose.msra.mxu0 0
      %1181 = vmatprep.subr.bf16.mxu0 0
      %1182 = vmatpush1.bf16.xpose.msra.mxu0 0
      %1183 = vmatprep.subr.bf16.mxu0 0
      %1184 = vmatpush1.bf16.xpose.msra.mxu0 0
      %1185 = vmatprep.subr.bf16.mxu0 0
      %1186 = vmatpush1.bf16.xpose.msra.mxu0 0
      %1187 = vmatprep.mubr.bf16.mxu0 0
      %1188 = vmatmul.mubr.bf16.gmra.mrb[0].mxu0 %v1150
      %v1189 = vpop.f32.mrb[0].mxu0
      %v1190 = vadd.f32 %v1092, %v1189
      %v1191 = vpop.f32.mrb[0].mxu0
      %v1192 = vpop.f32.mrb[0].mxu0
      %v1193 = vadd.f32 %v1093, %v1192
      %v1194 = vpop.f32.mrb[0].mxu0
      %1195 = vdwg.mxu0
      %v1196 = vsel %vm454, %v1139, -inf
      %1197 = vmax.xlane.f32.xlu0 %v1196
      %v1198 = vpop.xlane.xlu0 %1197
      %v1199 = vsel %vm454, %v1142, -inf
      %1200 = vmax.xlane.f32.xlu0 %v1199
      %v1201 = vpop.xlane.xlu0 %1200
      %v1202 = vsel %vm454, %v1190, -inf
      %1203 = vmax.xlane.f32.xlu0 %v1202
      %v1204 = vpop.xlane.xlu0 %1203
      %v1205 = vsel %vm454, %v1193, -inf
      %1206 = vmax.xlane.f32.xlu0 %v1205
      %v1207 = vpop.xlane.xlu0 %1206
      %v1208 = vsub.f32 %v1139, %v1198
      %v1209 = vsub.f32 %v1142, %v1201
      %v1210 = vsub.f32 %v1190, %v1204
      %v1211 = vsub.f32 %v1193, %v1207
      %v1212 = vmul.f32 %v1208, 1.442695
      %v1213 = vpow.pop %v1212
      %v1214 = vmul.f32 %v1209, 1.442695
      %v1215 = vpow.pop %v1214
      %v1216 = vmul.f32 %v1210, 1.442695
      %v1217 = vpow.pop %v1216
      %v1218 = vmul.f32 %v1211, 1.442695
      %v1219 = vpow.pop %v1218
      %v1220 = vsel %vm454, %v1213, 0.0
      %1221 = vadd.xlane.f32.xlu0 %v1220
      %v1222 = vpop.xlane.xlu0 %1221
      %v1223 = vsel %vm454, %v1215, 0.0
      %1224 = vadd.xlane.f32.xlu0 %v1223
      %v1225 = vpop.xlane.xlu0 %1224
      %v1226 = vsel %vm454, %v1217, 0.0
      %1227 = vadd.xlane.f32.xlu0 %v1226
      %v1228 = vpop.xlane.xlu0 %1227
      %v1229 = vsel %vm454, %v1219, 0.0
      %1230 = vadd.xlane.f32.xlu0 %v1229
      %v1231 = vpop.xlane.xlu0 %1230
      %v1232 = vrcp.pop %v1222
      %v1233 = vrcp.pop %v1225
      %v1234 = vrcp.pop %v1228
      %v1235 = vrcp.pop %v1231
      %v1236 = vmul.f32 %v1213, %v1232
      %v1237 = vmul.f32 %v1215, %v1233
      %v1238 = vmul.f32 %v1217, %v1234
      %v1239 = vmul.f32 %v1219, %v1235
      %v1240 = vpack.c.bf16 %v1237, %v1236
      %v1241 = vpack.c.bf16 %v1239, %v1238
      %1242 = vrot.lane.b32.xlu0 %v349, 40
      %v1243 = vpop.permute.xlu0 %1242
      %v1246 = vsel %vm454, %v1240, 0
      %1248 = vmatprep.subr.bf16.mxu0 0
      %1249 = vmatpush1.bf16.msra.mxu0 %v1243
      %1250 = vmatprep.subr.bf16.mxu0 0
      %1251 = vmatpush1.bf16.msra.mxu0 0
      %1252 = vmatprep.subr.bf16.mxu0 0
      %1253 = vmatpush1.bf16.msra.mxu0 0
      %1254 = vmatprep.subr.bf16.mxu0 0
      %1255 = vmatpush1.bf16.msra.mxu0 0
      %1256 = vmatprep.subr.bf16.mxu0 0
      %1257 = vmatpush1.bf16.msra.mxu0 0
      %1258 = vmatprep.subr.bf16.mxu0 0
      %1259 = vmatpush1.bf16.msra.mxu0 0
      %1260 = vmatprep.subr.bf16.mxu0 0
      %1261 = vmatpush1.bf16.msra.mxu0 0
      %1262 = vmatprep.subr.bf16.mxu0 0
      %1263 = vmatpush1.bf16.msra.mxu0 0
      %1264 = vmatprep.subr.bf16.mxu0 0
      %1265 = vmatpush1.bf16.msra.mxu0 0
      %1266 = vmatprep.subr.bf16.mxu0 0
      %1267 = vmatpush1.bf16.msra.mxu0 0
      %1268 = vmatprep.subr.bf16.mxu0 0
      %1269 = vmatpush1.bf16.msra.mxu0 0
      %1270 = vmatprep.subr.bf16.mxu0 0
      %1271 = vmatpush1.bf16.msra.mxu0 0
      %1272 = vmatprep.subr.bf16.mxu0 0
      %1273 = vmatpush1.bf16.msra.mxu0 0
      %1274 = vmatprep.subr.bf16.mxu0 0
      %1275 = vmatpush1.bf16.msra.mxu0 0
      %1276 = vmatprep.subr.bf16.mxu0 0
      %1277 = vmatpush1.bf16.msra.mxu0 0
      %1278 = vmatprep.subr.bf16.mxu0 0
      %1279 = vmatpush1.bf16.msra.mxu0 0
      %1280 = vmatprep.mubr.bf16.mxu0 0
      %1281 = vmatmul.mubr.bf16.gmra.mrb[0].mxu0 %v1246
      %v1282 = vpop.f32.mrb[0].mxu0
      %v1283 = vadd.f32 0.0, %v1282
      %v1284 = vpop.f32.mrb[0].mxu0
      %v1285 = vpop.f32.mrb[0].mxu0
      %v1286 = vadd.f32 0.0, %v1285
      %v1287 = vpop.f32.mrb[0].mxu0
      %1288 = vdwg.mxu0
      %1289 = vrot.lane.b32.xlu0 %v350, 40
      %v1290 = vpop.permute.xlu0 %1289
      %v1293 = vsel %vm454, %v1241, 0
      %1295 = vmatprep.subr.bf16.mxu0 0
      %1296 = vmatpush1.bf16.msra.mxu0 %v1290
      %1297 = vmatprep.subr.bf16.mxu0 0
      %1298 = vmatpush1.bf16.msra.mxu0 0
      %1299 = vmatprep.subr.bf16.mxu0 0
      %1300 = vmatpush1.bf16.msra.mxu0 0
      %1301 = vmatprep.subr.bf16.mxu0 0
      %1302 = vmatpush1.bf16.msra.mxu0 0
      %1303 = vmatprep.subr.bf16.mxu0 0
      %1304 = vmatpush1.bf16.msra.mxu0 0
      %1305 = vmatprep.subr.bf16.mxu0 0
      %1306 = vmatpush1.bf16.msra.mxu0 0
      %1307 = vmatprep.subr.bf16.mxu0 0
      %1308 = vmatpush1.bf16.msra.mxu0 0
      %1309 = vmatprep.subr.bf16.mxu0 0
      %1310 = vmatpush1.bf16.msra.mxu0 0
      %1311 = vmatprep.subr.bf16.mxu0 0
      %1312 = vmatpush1.bf16.msra.mxu0 0
      %1313 = vmatprep.subr.bf16.mxu0 0
      %1314 = vmatpush1.bf16.msra.mxu0 0
      %1315 = vmatprep.subr.bf16.mxu0 0
      %1316 = vmatpush1.bf16.msra.mxu0 0
      %1317 = vmatprep.subr.bf16.mxu0 0
      %1318 = vmatpush1.bf16.msra.mxu0 0
      %1319 = vmatprep.subr.bf16.mxu0 0
      %1320 = vmatpush1.bf16.msra.mxu0 0
      %1321 = vmatprep.subr.bf16.mxu0 0
      %1322 = vmatpush1.bf16.msra.mxu0 0
      %1323 = vmatprep.subr.bf16.mxu0 0
      %1324 = vmatpush1.bf16.msra.mxu0 0
      %1325 = vmatprep.subr.bf16.mxu0 0
      %1326 = vmatpush1.bf16.msra.mxu0 0
      %1327 = vmatprep.mubr.bf16.mxu0 0
      %1328 = vmatmul.mubr.bf16.gmra.mrb[0].mxu0 %v1293
      %v1329 = vpop.f32.mrb[0].mxu0
      %v1330 = vadd.f32 0.0, %v1329
      %v1331 = vpop.f32.mrb[0].mxu0
      %v1332 = vpop.f32.mrb[0].mxu0
      %v1333 = vadd.f32 0.0, %v1332
      %v1334 = vpop.f32.mrb[0].mxu0
      %1335 = vdwg.mxu0
      %v1336 = vpack.c.bf16 %v1286, %v1283
      %v1337 = vpack.c.bf16 %v1333, %v1330
      %1340 = vrot.lane.b32.xlu0 %v842, 8
      %v1341 = vpop.permute.xlu0 %1340
      %1342 = vrot.lane.b32.xlu0 %v843, 8
      %v1343 = vpop.permute.xlu0 %1342
      %1346 = vrot.lane.b32.xlu0 %v1089, 16
      %v1347 = vpop.permute.xlu0 %1346
      %1348 = vrot.lane.b32.xlu0 %v1090, 16
      %v1349 = vpop.permute.xlu0 %1348
      %1352 = vrot.lane.b32.xlu0 %v1336, 24
      %v1353 = vpop.permute.xlu0 %1352
      %1354 = vrot.lane.b32.xlu0 %v1337, 24
      %v1355 = vpop.permute.xlu0 %1354
      %v1358 = vsel %vm356, %v595, %v1341
      %v1361 = vsel %vm356, %v596, %v1343
      %v1363 = vsel %vm454, %v1358, %v1347
      %v1365 = vsel %vm454, %v1361, %v1349
      %vm1366 = vcmask 195584
      %v1368 = vsel %vm1366, %v1363, %v1353
      %v1370 = vsel %vm1366, %v1365, %v1355
      %v1371 = vld [vmem:[%s3] sm:$0xf]
      %v1372 = vld [vmem:[%s3 + $0x4] sm:$0xf]
      %v1373 = vld [vmem:[%s3 + $0x8] sm:$0xf]
      %v1374 = vld [vmem:[%s3 + $0xc] sm:$0xf]
      %v1375 = vld [vmem:[%s4] sm:$0x1]
      %v1377 = vlaneseq
      %v1378 = vshrl.u32 %v1377, 7
      %v1379 = vsub.s32 0, %v1378
      %v1380 = vrot.slane %v1375, %v1379
      %v1386 = vunpack.c.l.b16 %v1371
      %v1387 = vunpack.c.l.b16 %v1372
      %v1388 = vunpack.c.l.b16 %v1373
      %v1389 = vunpack.c.l.b16 %v1374
      %v1390 = vpack.c.b16 %v1387, %v1386
      %v1391 = vpack.c.b16 %v1389, %v1388
      %v1394 = vsel %vm293, %v1368, 0
      %v1396 = vsel %vm293, %v1370, 0
      %1398 = vmatprep.subr.bf16.mxu0 0
      %1399 = vmatpush1.bf16.msra.mxu0 %v1390
      %1400 = vmatprep.subr.bf16.mxu0 0
      %1401 = vmatpush1.bf16.msra.mxu0 %v1391
      %1402 = vmatprep.subr.bf16.mxu0 0
      %1403 = vmatpush1.bf16.msra.mxu0 0
      %1404 = vmatprep.subr.bf16.mxu0 0
      %1405 = vmatpush1.bf16.msra.mxu0 0
      %1406 = vmatprep.subr.bf16.mxu0 0
      %1407 = vmatpush1.bf16.msra.mxu0 0
      %1408 = vmatprep.subr.bf16.mxu0 0
      %1409 = vmatpush1.bf16.msra.mxu0 0
      %1410 = vmatprep.subr.bf16.mxu0 0
      %1411 = vmatpush1.bf16.msra.mxu0 0
      %1412 = vmatprep.subr.bf16.mxu0 0
      %1413 = vmatpush1.bf16.msra.mxu0 0
      %1414 = vmatprep.subr.bf16.mxu0 0
      %1415 = vmatpush1.bf16.msra.mxu0 0
      %1416 = vmatprep.subr.bf16.mxu0 0
      %1417 = vmatpush1.bf16.msra.mxu0 0
      %1418 = vmatprep.subr.bf16.mxu0 0
      %1419 = vmatpush1.bf16.msra.mxu0 0
      %1420 = vmatprep.subr.bf16.mxu0 0
      %1421 = vmatpush1.bf16.msra.mxu0 0
      %1422 = vmatprep.subr.bf16.mxu0 0
      %1423 = vmatpush1.bf16.msra.mxu0 0
      %1424 = vmatprep.subr.bf16.mxu0 0
      %1425 = vmatpush1.bf16.msra.mxu0 0
      %1426 = vmatprep.subr.bf16.mxu0 0
      %1427 = vmatpush1.bf16.msra.mxu0 0
      %1428 = vmatprep.subr.bf16.mxu0 0
      %1429 = vmatpush1.bf16.msra.mxu0 0
      %1430 = vmatprep.mubr.bf16.mxu0 0
      %1431 = vmatmul.mubr.bf16.gmra.mrb[0].mxu0 %v1394
      %v1432 = vpop.f32.mrb[0].mxu0
      %v1433 = vadd.f32 %v1380, %v1432
      %v1434 = vpop.f32.mrb[0].mxu0
      %v1435 = vpop.f32.mrb[0].mxu0
      %v1436 = vadd.f32 %v1380, %v1435
      %v1437 = vpop.f32.mrb[0].mxu0
      %1438 = vmatprep.mubr.bf16.mxu0 0
      %1439 = vmatmul.mubr.bf16.gmra.mrb[0].mxu0 %v1396
      %v1440 = vpop.f32.mrb[0].mxu0
      %v1441 = vadd.f32 %v1380, %v1440
      %v1442 = vpop.f32.mrb[0].mxu0
      %v1443 = vpop.f32.mrb[0].mxu0
      %v1444 = vadd.f32 %v1380, %v1443
      %v1445 = vpop.f32.mrb[0].mxu0
      %1446 = vdwg.mxu0
      %1447 = vst.msk [vmem:[%s253] sm:$0xff] %vm293, %v1433
      %1448 = vst.msk [vmem:[%s253 + $0x8] sm:$0xff] %vm293, %v1436
      %1449 = vst.msk [vmem:[%s253 + $0x10] sm:$0xff] %vm293, %v1441
      %1450 = vst.msk [vmem:[%s253 + $0x18] sm:$0xff] %vm293, %v1444
      %s1451 = smul.u32 4, %s17
      %p1452 = scmp.lt.s32.totalorder %s1451, 15
      %s1453 = scalar_select %p1452, %s1451, 15
      %s1454 = smul.addr %s1453, 8
      %s1455 = scalar_lea.vmem %s6, %s1454
      // Predicated region
      $region45: #{tpu_custom_call.1} parent=43 // pred_check
        %p1456 = pneg %p166
      $region46: #{tpu_custom_call.1} parent=43 // pred_check_branch
        %1458 = sbr.rel (%p1456) target = $region48
      $region47: #{tpu_custom_call.1} parent=43 // pred_region
        %s1459 = smul.u32 4, %s17
      $region48: #{tpu_custom_call.1} parent=43 // pred_fallthru
        _
    $region44: #{tpu_custom_call.1} parent=5 // pred_fallthru
      _
    %p1460 = scmp.le.s32.totalorder 2, %s12
    // Predicated region
    $region49: #{tpu_custom_call.1} parent=5 // pred_check
      %p1461 = pneg %p1460
    $region50: #{tpu_custom_call.1} parent=5 // pred_check_branch
      %1463 = sbr.rel (%p1461) target = $region52
    $region51: #{tpu_custom_call.1} parent=5 // pred_region
      %s1464 = ssub.s32 %s12, 2
      // Predicated region
      $region53: #{tpu_custom_call.1} parent=51 // pred_check
        %p1465 = pneg %p172
      $region54: #{tpu_custom_call.1} parent=51 // pred_check_branch
        %1467 = sbr.rel (%p1465) target = $region56
      $region55: #{tpu_custom_call.1} parent=51 // pred_region
        %s1468 = smul.u32 4, %s18
        %p1469 = scmp.lt.s32.totalorder %s1468, 15
        %s1470 = scalar_select %p1469, %s1468, 15
        %s1471 = smul.addr %s1470, 8
        %s1472 = scalar_lea.vmem %s6, %s1471
      $region56: #{tpu_custom_call.1} parent=51 // pred_fallthru
        _
    $region52: #{tpu_custom_call.1} parent=5 // pred_fallthru
      _
  $region6: #{tpu_custom_call.1} parent=0 // loop_footer
    %s16 = sadd.s32 1, %s12
  $region7: #{tpu_custom_call.1} parent=0 // loop_footer_branch
    %11 = sbr.rel target = $region3
  $region8: #{tpu_custom_call.1} parent=0 // loop_exit
    _

// kernel: tpu_custom_call.1
$region0: #{tpu_custom_call.1}
  #allocation0 [shape = 'u32[]', space=smem, size = 0x4, offset = 0x4, fixed_abs, tag = 'smem constant byte address 0x4 - core index']
  #allocation1 [shape = 'u32[144,128]{1,0:T(1,128)}', space=vmem, size = 0x12000, scoped, tag = 'internal scratch']
  %s0 = inlined_call_operand.vmem [shape: bf16[128,32], index: 0, kind: input, shape index: {}]
  %s1 = inlined_call_operand.vmem [shape: bf16[32,96], index: 1, kind: input, shape index: {}]
  %s2 = inlined_call_operand.vmem [shape: f32[1,96], index: 2, kind: input, shape index: {}]
  %s3 = inlined_call_operand.vmem [shape: bf16[32,32], index: 3, kind: input, shape index: {}]
  %s4 = inlined_call_operand.vmem [shape: f32[1,32], index: 4, kind: input, shape index: {}]
  %s5 = inlined_call_operand.vmem [shape: f32[4,16,16], index: 5, kind: input, shape index: {}]
  %s6 = inlined_call_operand.vmem [shape: f32[128,32], index: 6, kind: output, shape index: {}]
  %s7 = sld [smem:[#allocation0]]
  $region57: #{tpu_custom_call.1} parent=0
    _
  %s9 = ssub.s32 1, %s7
  %s10 = scalar_select 0, %s9, %s7
  loop: start=0, step=1, limit=6
  $region2: #{tpu_custom_call.1} parent=0 // loop_pre_header
    _
  $region3: #{tpu_custom_call.1} parent=0 // loop_header
    %s12 = sphi 0, %s16
    %p13 = scmp.ge.s32.totalorder %s12, 6
    %s22 = sphi 0, %s24
    %s25 = sphi 0, %s22
    %s26 = sphi 0, %s25
    %s42 = sphi 0, %s26
    %s46 = sphi 0, %s46
    %s48 = sphi 0, %s46
    %s49 = sphi 0, %s48
    %s63 = sphi 0, %s49
    %s67 = sphi 0, %s67
    %s69 = sphi 0, %s67
    %s70 = sphi 0, %s69
    %s84 = sphi 0, %s70
    %s88 = sphi 0, %s88
    %s90 = sphi 0, %s88
    %s91 = sphi 0, %s90
    %s105 = sphi 0, %s91
    %s109 = sphi 0, %s109
    %s111 = sphi 0, %s109
    %s112 = sphi 0, %s111
    %s126 = sphi 0, %s112
    %s130 = sphi 0, %s130
    %s132 = sphi 0, %s130
    %s133 = sphi 0, %s132
    %s147 = sphi 0, %s133
    %s153 = sphi 0, %s155
    %s156 = sphi 0, %s153
    %s157 = sphi 0, %s156
    %s173 = sphi 0, %s157
  $region4: #{tpu_custom_call.1} parent=0 // loop_header_branch
    %15 = sbr.rel (%p13) target = $region8
  $region5: #{tpu_custom_call.1} parent=0 // loop_body
    %s17 = ssub.s32 %s12, 1
    %s18 = ssub.s32 %s12, 2
    %s19 = sadd.s32 %s12, 1
    %s20 = ssub.s32 %s12, %s19
    %p21 = scmp.eq.s32.totalorder %s20, 0
    %s23 = sadd.s32 %s22, 1
    %s24 = scalar_select %p21, %s22, %s23
    %p27 = pneg %p21
    %p28 = scmp.eq.s32.totalorder %s12, 3
    %p29 = por %p27, %p28
    %p30 = scmp.ne.s32.totalorder %s22, %s25
    %p31 = scmp.eq.s32.totalorder %s12, 0
    %p32 = por %p30, %p31
    %p33 = scmp.ne.s32.totalorder %s22, %s25
    %p34 = scmp.eq.s32.totalorder %s17, 3
    %p35 = por %p33, %p34
    %p36 = scmp.ne.s32.totalorder %s25, %s26
    %p37 = scmp.eq.s32.totalorder %s17, 0
    %p38 = por %p36, %p37
    %p39 = scmp.ne.s32.totalorder %s25, %s26
    %p40 = scmp.eq.s32.totalorder %s18, 3
    %p41 = por %p39, %p40
    %p43 = scmp.ne.s32.totalorder %s26, %s42
    %p44 = scmp.eq.s32.totalorder %s18, 0
    %p45 = por %p43, %p44
    %s47 = sadd.s32 %s46, 1
    %p50 = scmp.eq.s32.totalorder %s12, 3
    %p51 = scmp.ne.s32.totalorder %s46, %s48
    %p52 = scmp.eq.s32.totalorder %s12, 0
    %p53 = por %p51, %p52
    %p54 = scmp.ne.s32.totalorder %s46, %s48
    %p55 = scmp.eq.s32.totalorder %s17, 3
    %p56 = por %p54, %p55
    %p57 = scmp.ne.s32.totalorder %s48, %s49
    %p58 = scmp.eq.s32.totalorder %s17, 0
    %p59 = por %p57, %p58
    %p60 = scmp.ne.s32.totalorder %s48, %s49
    %p61 = scmp.eq.s32.totalorder %s18, 3
    %p62 = por %p60, %p61
    %p64 = scmp.ne.s32.totalorder %s49, %s63
    %p65 = scmp.eq.s32.totalorder %s18, 0
    %p66 = por %p64, %p65
    %s68 = sadd.s32 %s67, 1
    %p71 = scmp.eq.s32.totalorder %s12, 3
    %p72 = scmp.ne.s32.totalorder %s67, %s69
    %p73 = scmp.eq.s32.totalorder %s12, 0
    %p74 = por %p72, %p73
    %p75 = scmp.ne.s32.totalorder %s67, %s69
    %p76 = scmp.eq.s32.totalorder %s17, 3
    %p77 = por %p75, %p76
    %p78 = scmp.ne.s32.totalorder %s69, %s70
    %p79 = scmp.eq.s32.totalorder %s17, 0
    %p80 = por %p78, %p79
    %p81 = scmp.ne.s32.totalorder %s69, %s70
    %p82 = scmp.eq.s32.totalorder %s18, 3
    %p83 = por %p81, %p82
    %p85 = scmp.ne.s32.totalorder %s70, %s84
    %p86 = scmp.eq.s32.totalorder %s18, 0
    %p87 = por %p85, %p86
    %s89 = sadd.s32 %s88, 1
    %p92 = scmp.eq.s32.totalorder %s12, 3
    %p93 = scmp.ne.s32.totalorder %s88, %s90
    %p94 = scmp.eq.s32.totalorder %s12, 0
    %p95 = por %p93, %p94
    %p96 = scmp.ne.s32.totalorder %s88, %s90
    %p97 = scmp.eq.s32.totalorder %s17, 3
    %p98 = por %p96, %p97
    %p99 = scmp.ne.s32.totalorder %s90, %s91
    %p100 = scmp.eq.s32.totalorder %s17, 0
    %p101 = por %p99, %p100
    %p102 = scmp.ne.s32.totalorder %s90, %s91
    %p103 = scmp.eq.s32.totalorder %s18, 3
    %p104 = por %p102, %p103
    %p106 = scmp.ne.s32.totalorder %s91, %s105
    %p107 = scmp.eq.s32.totalorder %s18, 0
    %p108 = por %p106, %p107
    %s110 = sadd.s32 %s109, 1
    %p113 = scmp.eq.s32.totalorder %s12, 3
    %p114 = scmp.ne.s32.totalorder %s109, %s111
    %p115 = scmp.eq.s32.totalorder %s12, 0
    %p116 = por %p114, %p115
    %p117 = scmp.ne.s32.totalorder %s109, %s111
    %p118 = scmp.eq.s32.totalorder %s17, 3
    %p119 = por %p117, %p118
    %p120 = scmp.ne.s32.totalorder %s111, %s112
    %p121 = scmp.eq.s32.totalorder %s17, 0
    %p122 = por %p120, %p121
    %p123 = scmp.ne.s32.totalorder %s111, %s112
    %p124 = scmp.eq.s32.totalorder %s18, 3
    %p125 = por %p123, %p124
    %p127 = scmp.ne.s32.totalorder %s112, %s126
    %p128 = scmp.eq.s32.totalorder %s18, 0
    %p129 = por %p127, %p128
    %s131 = sadd.s32 %s130, 1
    %p134 = scmp.eq.s32.totalorder %s12, 3
    %p135 = scmp.ne.s32.totalorder %s130, %s132
    %p136 = scmp.eq.s32.totalorder %s12, 0
    %p137 = por %p135, %p136
    %p138 = scmp.ne.s32.totalorder %s130, %s132
    %p139 = scmp.eq.s32.totalorder %s17, 3
    %p140 = por %p138, %p139
    %p141 = scmp.ne.s32.totalorder %s132, %s133
    %p142 = scmp.eq.s32.totalorder %s17, 0
    %p143 = por %p141, %p142
    %p144 = scmp.ne.s32.totalorder %s132, %s133
    %p145 = scmp.eq.s32.totalorder %s18, 3
    %p146 = por %p144, %p145
    %p148 = scmp.ne.s32.totalorder %s133, %s147
    %p149 = scmp.eq.s32.totalorder %s18, 0
    %p150 = por %p148, %p149
    %s151 = ssub.s32 %s12, %s19
    %p152 = scmp.eq.s32.totalorder %s151, 0
    %s154 = sadd.s32 %s153, 1
    %s155 = scalar_select %p152, %s153, %s154
    %p158 = pneg %p152
    %p159 = scmp.eq.s32.totalorder %s12, 3
    %p160 = por %p158, %p159
    %p161 = scmp.ne.s32.totalorder %s153, %s156
    %p162 = scmp.eq.s32.totalorder %s12, 0
    %p163 = por %p161, %p162
    %p164 = scmp.ne.s32.totalorder %s153, %s156
    %p165 = scmp.eq.s32.totalorder %s17, 3
    %p166 = por %p164, %p165
    %p167 = scmp.ne.s32.totalorder %s156, %s157
    %p168 = scmp.eq.s32.totalorder %s17, 0
    %p169 = por %p167, %p168
    %p170 = scmp.ne.s32.totalorder %s156, %s157
    %p171 = scmp.eq.s32.totalorder %s18, 3
    %p172 = por %p170, %p171
    %p174 = scmp.ne.s32.totalorder %s157, %s173
    %p175 = scmp.eq.s32.totalorder %s18, 0
    %p176 = por %p174, %p175
    %p177 = scmp.le.s32.totalorder 1, %s12
    %p178 = scmp.lt.s32.totalorder %s12, 5
    %p179 = pnand %p177, %p178
    %p180 = pneg %p179
    // Predicated region
    $region9: #{tpu_custom_call.1} parent=5 // pred_check
      _
    $region10: #{tpu_custom_call.1} parent=5 // pred_check_branch
      %182 = sbr.rel (%p179) target = $region12
    $region11: #{tpu_custom_call.1} parent=5 // pred_region
      %s183 = ssub.s32 %s12, 1
      // Predicated region
      $region13: #{tpu_custom_call.1} parent=11 // pred_check
        %p184 = pneg %p59
      $region14: #{tpu_custom_call.1} parent=11 // pred_check_branch
        %186 = sbr.rel (%p184) target = $region16
      $region15: #{tpu_custom_call.1} parent=11 // pred_region
        _
      $region16: #{tpu_custom_call.1} parent=11 // pred_fallthru
        _
      // Predicated region
      $region17: #{tpu_custom_call.1} parent=11 // pred_check
        %p187 = pneg %p80
      $region18: #{tpu_custom_call.1} parent=11 // pred_check_branch
        %189 = sbr.rel (%p187) target = $region20
      $region19: #{tpu_custom_call.1} parent=11 // pred_region
        _
      $region20: #{tpu_custom_call.1} parent=11 // pred_fallthru
        _
      // Predicated region
      $region21: #{tpu_custom_call.1} parent=11 // pred_check
        %p190 = pneg %p101
      $region22: #{tpu_custom_call.1} parent=11 // pred_check_branch
        %192 = sbr.rel (%p190) target = $region24
      $region23: #{tpu_custom_call.1} parent=11 // pred_region
        _
      $region24: #{tpu_custom_call.1} parent=11 // pred_fallthru
        _
      // Predicated region
      $region25: #{tpu_custom_call.1} parent=11 // pred_check
        %p193 = pneg %p122
      $region26: #{tpu_custom_call.1} parent=11 // pred_check_branch
        %195 = sbr.rel (%p193) target = $region28
      $region27: #{tpu_custom_call.1} parent=11 // pred_region
        _
      $region28: #{tpu_custom_call.1} parent=11 // pred_fallthru
        _
      // Predicated region
      $region29: #{tpu_custom_call.1} parent=11 // pred_check
        %p196 = pneg %p143
      $region30: #{tpu_custom_call.1} parent=11 // pred_check_branch
        %198 = sbr.rel (%p196) target = $region32
      $region31: #{tpu_custom_call.1} parent=11 // pred_region
        _
      $region32: #{tpu_custom_call.1} parent=11 // pred_fallthru
        _
    $region12: #{tpu_custom_call.1} parent=5 // pred_fallthru
      _
    %p199 = scmp.lt.s32.totalorder %s12, 4
    // Predicated region
    $region33: #{tpu_custom_call.1} parent=5 // pred_check
      %p200 = pneg %p199
    $region34: #{tpu_custom_call.1} parent=5 // pred_check_branch
      %202 = sbr.rel (%p200) target = $region36
    $region35: #{tpu_custom_call.1} parent=5 // pred_region
      // Predicated region
      $region37: #{tpu_custom_call.1} parent=35 // pred_check
        %p203 = pneg %p32
      $region38: #{tpu_custom_call.1} parent=35 // pred_check_branch
        %205 = sbr.rel (%p203) target = $region40
      $region39: #{tpu_custom_call.1} parent=35 // pred_region
        %s206 = smul.u32 4, %s12
        %p207 = scmp.lt.s32.totalorder %s206, 15
        %s208 = scalar_select %p207, %s206, 15
        %s209 = smul.addr %s208, 4
        %s210 = scalar_lea.vmem %s0, %s209
        %s211 = smul.u32 4, %s12
      $region40: #{tpu_custom_call.1} parent=35 // pred_fallthru
        _
    $region36: #{tpu_custom_call.1} parent=5 // pred_fallthru
      _
    %p212 = scmp.le.s32.totalorder 1, %s12
    %p213 = scmp.lt.s32.totalorder %s12, 5
    %p214 = pnand %p212, %p213
    %p215 = pneg %p214
    // Predicated region
    $region41: #{tpu_custom_call.1} parent=5 // pred_check
      _
    $region42: #{tpu_custom_call.1} parent=5 // pred_check_branch
      %217 = sbr.rel (%p214) target = $region44
    $region43: #{tpu_custom_call.1} parent=5 // pred_region
      %s218 = ssub.s32 %s12, 1
      %s219 = smul.u32 4, %s17
      %p220 = scmp.lt.s32.totalorder %s219, 15
      %s221 = scalar_select %p220, %s219, 15
      %s222 = smul.addr %s221, 4
      %s223 = scalar_lea.vmem %s0, %s222
      %p224 = pneg %p38
      %p225 = pneg %p35
      %p226 = pneg %p59
      %p227 = pneg %p56
      %p228 = pneg %p80
      %p229 = pneg %p77
      %p230 = pneg %p101
      %p231 = pneg %p98
      %p232 = pneg %p122
      %p233 = pneg %p119
      %p234 = pneg %p143
      %p235 = pneg %p140
      %p236 = pneg %p169
      %p237 = pneg %p166
      %s238 = smul.u32 4, %s17
      %p239 = scmp.lt.s32.totalorder %s238, 15
      %s240 = scalar_select %p239, %s238, 15
      %s241 = smul.addr %s240, 8
      %s242 = scalar_lea.vmem %s6, %s241
      %s243 = smul.u32 4, %s17
      %p244 = scmp.lt.s32.totalorder %s243, 15
      %s245 = scalar_select %p244, %s243, 15
      %s246 = smul.addr %s245, 4
      %s247 = scalar_lea.vmem %s0, %s246
      %s248 = smul.u32 4, %s17
      %s249 = smul.u32 4, %s17
      %p250 = scmp.lt.s32.totalorder %s249, 15
      %s251 = scalar_select %p250, %s249, 15
      %s252 = smul.addr %s251, 8
      %s253 = scalar_lea.vmem %s6, %s252
      %s254 = smul.u32 4, %s17
      %v256 = vld [vmem:[%s247] sm:$0xf]
      %v257 = vld [vmem:[%s247 + $0x4] sm:$0xf]
      %v258 = vld [vmem:[%s247 + $0x8] sm:$0xf]
      %v259 = vld [vmem:[%s247 + $0xc] sm:$0xf]
      %v260 = vld [vmem:[%s1] sm:$0xf]
      %v261 = vld [vmem:[%s1 + $0x4] sm:$0xf]
      %v262 = vld [vmem:[%s1 + $0x8] sm:$0xf]
      %v263 = vld [vmem:[%s1 + $0xc] sm:$0xf]
      %v264 = vld [vmem:[%s2] sm:$0x1]
      %v266 = vlaneseq
      %v267 = vshrl.u32 %v266, 7
      %v268 = vsub.s32 0, %v267
      %v269 = vrot.slane %v264, %v268
      %v275 = vunpack.c.l.b16 %v256
      %v276 = vunpack.c.l.b16 %v257
      %v277 = vunpack.c.l.b16 %v258
      %v278 = vunpack.c.l.b16 %v259
      %v279 = vpack.c.b16 %v276, %v275
      %v280 = vpack.c.b16 %v278, %v277
      %v285 = vunpack.c.l.b16 %v260
      %v286 = vunpack.c.l.b16 %v261
      %v287 = vunpack.c.l.b16 %v262
      %v288 = vunpack.c.l.b16 %v263
      %v289 = vpack.c.b16 %v286, %v285
      %v290 = vpack.c.b16 %v288, %v287
      %vm293 = vcmask 261120
      %v295 = vsel %vm293, %v279, 0
      %v298 = vsel %vm293, %v280, 0
      %300 = vmatprep.subr.bf16.mxu0 0
      %301 = vmatpush1.bf16.msra.mxu0 %v289
      %302 = vmatprep.subr.bf16.mxu0 0
      %303 = vmatpush1.bf16.msra.mxu0 %v290
      %304 = vmatprep.subr.bf16.mxu0 0
      %305 = vmatpush1.bf16.msra.mxu0 0
      %306 = vmatprep.subr.bf16.mxu0 0
      %307 = vmatpush1.bf16.msra.mxu0 0
      %308 = vmatprep.subr.bf16.mxu0 0
      %309 = vmatpush1.bf16.msra.mxu0 0
      %310 = vmatprep.subr.bf16.mxu0 0
      %311 = vmatpush1.bf16.msra.mxu0 0
      %312 = vmatprep.subr.bf16.mxu0 0
      %313 = vmatpush1.bf16.msra.mxu0 0
      %314 = vmatprep.subr.bf16.mxu0 0
      %315 = vmatpush1.bf16.msra.mxu0 0
      %316 = vmatprep.subr.bf16.mxu0 0
      %317 = vmatpush1.bf16.msra.mxu0 0
      %318 = vmatprep.subr.bf16.mxu0 0
      %319 = vmatpush1.bf16.msra.mxu0 0
      %320 = vmatprep.subr.bf16.mxu0 0
      %321 = vmatpush1.bf16.msra.mxu0 0
      %322 = vmatprep.subr.bf16.mxu0 0
      %323 = vmatpush1.bf16.msra.mxu0 0
      %324 = vmatprep.subr.bf16.mxu0 0
      %325 = vmatpush1.bf16.msra.mxu0 0
      %326 = vmatprep.subr.bf16.mxu0 0
      %327 = vmatpush1.bf16.msra.mxu0 0
      %328 = vmatprep.subr.bf16.mxu0 0
      %329 = vmatpush1.bf16.msra.mxu0 0
      %330 = vmatprep.subr.bf16.mxu0 0
      %331 = vmatpush1.bf16.msra.mxu0 0
      %332 = vmatprep.mubr.bf16.mxu0 0
      %333 = vmatmul.mubr.bf16.gmra.mrb[0].mxu0 %v295
      %v334 = vpop.f32.mrb[0].mxu0
      %v335 = vadd.f32 %v269, %v334
      %v336 = vpop.f32.mrb[0].mxu0
      %v337 = vpop.f32.mrb[0].mxu0
      %v338 = vadd.f32 %v269, %v337
      %v339 = vpop.f32.mrb[0].mxu0
      %340 = vmatprep.mubr.bf16.mxu0 0
      %341 = vmatmul.mubr.bf16.gmra.mrb[0].mxu0 %v298
      %v342 = vpop.f32.mrb[0].mxu0
      %v343 = vadd.f32 %v269, %v342
      %v344 = vpop.f32.mrb[0].mxu0
      %v345 = vpop.f32.mrb[0].mxu0
      %v346 = vadd.f32 %v269, %v345
      %v347 = vpop.f32.mrb[0].mxu0
      %348 = vdwg.mxu0
      %v349 = vpack.c.bf16 %v338, %v335
      %v350 = vpack.c.bf16 %v346, %v343
      %v351 = vld [vmem:[%s5] sm:$0xff]
      %v352 = vld [vmem:[%s5 + $0x8] sm:$0xff]
      %354 = vrot.lane.b32.xlu0 %v349, 96
      %v355 = vpop.permute.xlu0 %354
      %vm356 = vcmask 64512
      %v358 = vsel %vm356, %v349, 0
      %v361 = vsel %vm356, %v355, 0
      %363 = vmatprep.subr.bf16.mxu0 0
      %364 = vmatpush1.bf16.xpose.msra.mxu0 %v361
      %365 = vmatprep.subr.bf16.mxu0 0
      %366 = vmatpush1.bf16.xpose.msra.mxu0 0
      %367 = vmatprep.subr.bf16.mxu0 0
      %368 = vmatpush1.bf16.xpose.msra.mxu0 0
      %369 = vmatprep.subr.bf16.mxu0 0
      %370 = vmatpush1.bf16.xpose.msra.mxu0 0
      %371 = vmatprep.subr.bf16.mxu0 0
      %372 = vmatpush1.bf16.xpose.msra.mxu0 0
      %373 = vmatprep.subr.bf16.mxu0 0
      %374 = vmatpush1.bf16.xpose.msra.mxu0 0
      %375 = vmatprep.subr.bf16.mxu0 0
      %376 = vmatpush1.bf16.xpose.msra.mxu0 0
      %377 = vmatprep.subr.bf16.mxu0 0
      %378 = vmatpush1.bf16.xpose.msra.mxu0 0
      %379 = vmatprep.subr.bf16.mxu0 0
      %380 = vmatpush1.bf16.xpose.msra.mxu0 0
      %381 = vmatprep.subr.bf16.mxu0 0
      %382 = vmatpush1.bf16.xpose.msra.mxu0 0
      %383 = vmatprep.subr.bf16.mxu0 0
      %384 = vmatpush1.bf16.xpose.msra.mxu0 0
      %385 = vmatprep.subr.bf16.mxu0 0
      %386 = vmatpush1.bf16.xpose.msra.mxu0 0
      %387 = vmatprep.subr.bf16.mxu0 0
      %388 = vmatpush1.bf16.xpose.msra.mxu0 0
      %389 = vmatprep.subr.bf16.mxu0 0
      %390 = vmatpush1.bf16.xpose.msra.mxu0 0
      %391 = vmatprep.subr.bf16.mxu0 0
      %392 = vmatpush1.bf16.xpose.msra.mxu0 0
      %393 = vmatprep.subr.bf16.mxu0 0
      %394 = vmatpush1.bf16.xpose.msra.mxu0 0
      %395 = vmatprep.mubr.bf16.mxu0 0
      %396 = vmatmul.mubr.bf16.gmra.mrb[0].mxu0 %v358
      %v397 = vpop.f32.mrb[0].mxu0
      %v398 = vadd.f32 %v351, %v397
      %v399 = vpop.f32.mrb[0].mxu0
      %v400 = vpop.f32.mrb[0].mxu0
      %v401 = vadd.f32 %v352, %v400
      %v402 = vpop.f32.mrb[0].mxu0
      %403 = vdwg.mxu0
      %405 = vrot.lane.b32.xlu0 %v350, 96
      %v406 = vpop.permute.xlu0 %405
      %v408 = vsel %vm356, %v350, 0
      %v411 = vsel %vm356, %v406, 0
      %413 = vmatprep.subr.bf16.mxu0 0
      %414 = vmatpush1.bf16.xpose.msra.mxu0 %v411
      %415 = vmatprep.subr.bf16.mxu0 0
      %416 = vmatpush1.bf16.xpose.msra.mxu0 0
      %417 = vmatprep.subr.bf16.mxu0 0
      %418 = vmatpush1.bf16.xpose.msra.mxu0 0
      %419 = vmatprep.subr.bf16.mxu0 0
      %420 = vmatpush1.bf16.xpose.msra.mxu0 0
      %421 = vmatprep.subr.bf16.mxu0 0
      %422 = vmatpush1.bf16.xpose.msra.mxu0 0
      %423 = vmatprep.subr.bf16.mxu0 0
      %424 = vmatpush1.bf16.xpose.msra.mxu0 0
      %425 = vmatprep.subr.bf16.mxu0 0
      %426 = vmatpush1.bf16.xpose.msra.mxu0 0
      %427 = vmatprep.subr.bf16.mxu0 0
      %428 = vmatpush1.bf16.xpose.msra.mxu0 0
      %429 = vmatprep.subr.bf16.mxu0 0
      %430 = vmatpush1.bf16.xpose.msra.mxu0 0
      %431 = vmatprep.subr.bf16.mxu0 0
      %432 = vmatpush1.bf16.xpose.msra.mxu0 0
      %433 = vmatprep.subr.bf16.mxu0 0
      %434 = vmatpush1.bf16.xpose.msra.mxu0 0
      %435 = vmatprep.subr.bf16.mxu0 0
      %436 = vmatpush1.bf16.xpose.msra.mxu0 0
      %437 = vmatprep.subr.bf16.mxu0 0
      %438 = vmatpush1.bf16.xpose.msra.mxu0 0
      %439 = vmatprep.subr.bf16.mxu0 0
      %440 = vmatpush1.bf16.xpose.msra.mxu0 0
      %441 = vmatprep.subr.bf16.mxu0 0
      %442 = vmatpush1.bf16.xpose.msra.mxu0 0
      %443 = vmatprep.subr.bf16.mxu0 0
      %444 = vmatpush1.bf16.xpose.msra.mxu0 0
      %445 = vmatprep.mubr.bf16.mxu0 0
      %446 = vmatmul.mubr.bf16.gmra.mrb[0].mxu0 %v408
      %v447 = vpop.f32.mrb[0].mxu0
      %v448 = vadd.f32 %v351, %v447
      %v449 = vpop.f32.mrb[0].mxu0
      %v450 = vpop.f32.mrb[0].mxu0
      %v451 = vadd.f32 %v352, %v450
      %v452 = vpop.f32.mrb[0].mxu0
      %453 = vdwg.mxu0
      %vm454 = vcmask 130048
      %v455 = vsel %vm454, %v398, -inf
      %456 = vmax.xlane.f32.xlu0 %v455
      %v457 = vpop.xlane.xlu0 %456
      %v458 = vsel %vm454, %v401, -inf
      %459 = vmax.xlane.f32.xlu0 %v458
      %v460 = vpop.xlane.xlu0 %459
      %v461 = vsel %vm454, %v448, -inf
      %462 = vmax.xlane.f32.xlu0 %v461
      %v463 = vpop.xlane.xlu0 %462
      %v464 = vsel %vm454, %v451, -inf
      %465 = vmax.xlane.f32.xlu0 %v464
      %v466 = vpop.xlane.xlu0 %465
      %v467 = vsub.f32 %v398, %v457
      %v468 = vsub.f32 %v401, %v460
      %v469 = vsub.f32 %v448, %v463
      %v470 = vsub.f32 %v451, %v466
      %v471 = vmul.f32 %v467, 1.442695
      %v472 = vpow.pop %v471
      %v473 = vmul.f32 %v468, 1.442695
      %v474 = vpow.pop %v473
      %v475 = vmul.f32 %v469, 1.442695
      %v476 = vpow.pop %v475
      %v477 = vmul.f32 %v470, 1.442695
      %v478 = vpow.pop %v477
      %v479 = vsel %vm454, %v472, 0.0
      %480 = vadd.xlane.f32.xlu0 %v479
      %v481 = vpop.xlane.xlu0 %480
      %v482 = vsel %vm454, %v474, 0.0
      %483 = vadd.xlane.f32.xlu0 %v482
      %v484 = vpop.xlane.xlu0 %483
      %v485 = vsel %vm454, %v476, 0.0
      %486 = vadd.xlane.f32.xlu0 %v485
      %v487 = vpop.xlane.xlu0 %486
      %v488 = vsel %vm454, %v478, 0.0
      %489 = vadd.xlane.f32.xlu0 %v488
      %v490 = vpop.xlane.xlu0 %489
      %v491 = vrcp.pop %v481
      %v492 = vrcp.pop %v484
      %v493 = vrcp.pop %v487
      %v494 = vrcp.pop %v490
      %v495 = vmul.f32 %v472, %v491
      %v496 = vmul.f32 %v474, %v492
      %v497 = vmul.f32 %v476, %v493
      %v498 = vmul.f32 %v478, %v494
      %v499 = vpack.c.bf16 %v496, %v495
      %v500 = vpack.c.bf16 %v498, %v497
      %501 = vrot.lane.b32.xlu0 %v349, 64
      %v502 = vpop.permute.xlu0 %501
      %v505 = vsel %vm454, %v499, 0
      %507 = vmatprep.subr.bf16.mxu0 0
      %508 = vmatpush1.bf16.msra.mxu0 %v502
      %509 = vmatprep.subr.bf16.mxu0 0
      %510 = vmatpush1.bf16.msra.mxu0 0
      %511 = vmatprep.subr.bf16.mxu0 0
      %512 = vmatpush1.bf16.msra.mxu0 0
      %513 = vmatprep.subr.bf16.mxu0 0
      %514 = vmatpush1.bf16.msra.mxu0 0
      %515 = vmatprep.subr.bf16.mxu0 0
      %516 = vmatpush1.bf16.msra.mxu0 0
      %517 = vmatprep.subr.bf16.mxu0 0
      %518 = vmatpush1.bf16.msra.mxu0 0
      %519 = vmatprep.subr.bf16.mxu0 0
      %520 = vmatpush1.bf16.msra.mxu0 0
      %521 = vmatprep.subr.bf16.mxu0 0
      %522 = vmatpush1.bf16.msra.mxu0 0
      %523 = vmatprep.subr.bf16.mxu0 0
      %524 = vmatpush1.bf16.msra.mxu0 0
      %525 = vmatprep.subr.bf16.mxu0 0
      %526 = vmatpush1.bf16.msra.mxu0 0
      %527 = vmatprep.subr.bf16.mxu0 0
      %528 = vmatpush1.bf16.msra.mxu0 0
      %529 = vmatprep.subr.bf16.mxu0 0
      %530 = vmatpush1.bf16.msra.mxu0 0
      %531 = vmatprep.subr.bf16.mxu0 0
      %532 = vmatpush1.bf16.msra.mxu0 0
      %533 = vmatprep.subr.bf16.mxu0 0
      %534 = vmatpush1.bf16.msra.mxu0 0
      %535 = vmatprep.subr.bf16.mxu0 0
      %536 = vmatpush1.bf16.msra.mxu0 0
      %537 = vmatprep.subr.bf16.mxu0 0
      %538 = vmatpush1.bf16.msra.mxu0 0
      %539 = vmatprep.mubr.bf16.mxu0 0
      %540 = vmatmul.mubr.bf16.gmra.mrb[0].mxu0 %v505
      %v541 = vpop.f32.mrb[0].mxu0
      %v542 = vadd.f32 0.0, %v541
      %v543 = vpop.f32.mrb[0].mxu0
      %v544 = vpop.f32.mrb[0].mxu0
      %v545 = vadd.f32 0.0, %v544
      %v546 = vpop.f32.mrb[0].mxu0
      %547 = vdwg.mxu0
      %548 = vrot.lane.b32.xlu0 %v350, 64
      %v549 = vpop.permute.xlu0 %548
      %v552 = vsel %vm454, %v500, 0
      %554 = vmatprep.subr.bf16.mxu0 0
      %555 = vmatpush1.bf16.msra.mxu0 %v549
      %556 = vmatprep.subr.bf16.mxu0 0
      %557 = vmatpush1.bf16.msra.mxu0 0
      %558 = vmatprep.subr.bf16.mxu0 0
      %559 = vmatpush1.bf16.msra.mxu0 0
      %560 = vmatprep.subr.bf16.mxu0 0
      %561 = vmatpush1.bf16.msra.mxu0 0
      %562 = vmatprep.subr.bf16.mxu0 0
      %563 = vmatpush1.bf16.msra.mxu0 0
      %564 = vmatprep.subr.bf16.mxu0 0
      %565 = vmatpush1.bf16.msra.mxu0 0
      %566 = vmatprep.subr.bf16.mxu0 0
      %567 = vmatpush1.bf16.msra.mxu0 0
      %568 = vmatprep.subr.bf16.mxu0 0
      %569 = vmatpush1.bf16.msra.mxu0 0
      %570 = vmatprep.subr.bf16.mxu0 0
      %571 = vmatpush1.bf16.msra.mxu0 0
      %572 = vmatprep.subr.bf16.mxu0 0
      %573 = vmatpush1.bf16.msra.mxu0 0
      %574 = vmatprep.subr.bf16.mxu0 0
      %575 = vmatpush1.bf16.msra.mxu0 0
      %576 = vmatprep.subr.bf16.mxu0 0
      %577 = vmatpush1.bf16.msra.mxu0 0
      %578 = vmatprep.subr.bf16.mxu0 0
      %579 = vmatpush1.bf16.msra.mxu0 0
      %580 = vmatprep.subr.bf16.mxu0 0
      %581 = vmatpush1.bf16.msra.mxu0 0
      %582 = vmatprep.subr.bf16.mxu0 0
      %583 = vmatpush1.bf16.msra.mxu0 0
      %584 = vmatprep.subr.bf16.mxu0 0
      %585 = vmatpush1.bf16.msra.mxu0 0
      %586 = vmatprep.mubr.bf16.mxu0 0
      %587 = vmatmul.mubr.bf16.gmra.mrb[0].mxu0 %v552
      %v588 = vpop.f32.mrb[0].mxu0
      %v589 = vadd.f32 0.0, %v588
      %v590 = vpop.f32.mrb[0].mxu0
      %v591 = vpop.f32.mrb[0].mxu0
      %v592 = vadd.f32 0.0, %v591
      %v593 = vpop.f32.mrb[0].mxu0
      %594 = vdwg.mxu0
      %v595 = vpack.c.bf16 %v545, %v542
      %v596 = vpack.c.bf16 %v592, %v589
      %s597 = scalar_lea.vmem %s5, 16
      %v598 = vld [vmem:[%s597] sm:$0xff]
      %v599 = vld [vmem:[%s597 + $0x8] sm:$0xff]
      %600 = vrot.lane.b32.xlu0 %v349, 120
      %v601 = vpop.permute.xlu0 %600
      %602 = vrot.lane.b32.xlu0 %v349, 88
      %v603 = vpop.permute.xlu0 %602
      %v605 = vsel %vm356, %v601, 0
      %v608 = vsel %vm356, %v603, 0
      %610 = vmatprep.subr.bf16.mxu0 0
      %611 = vmatpush1.bf16.xpose.msra.mxu0 %v608
      %612 = vmatprep.subr.bf16.mxu0 0
      %613 = vmatpush1.bf16.xpose.msra.mxu0 0
      %614 = vmatprep.subr.bf16.mxu0 0
      %615 = vmatpush1.bf16.xpose.msra.mxu0 0
      %616 = vmatprep.subr.bf16.mxu0 0
      %617 = vmatpush1.bf16.xpose.msra.mxu0 0
      %618 = vmatprep.subr.bf16.mxu0 0
      %619 = vmatpush1.bf16.xpose.msra.mxu0 0
      %620 = vmatprep.subr.bf16.mxu0 0
      %621 = vmatpush1.bf16.xpose.msra.mxu0 0
      %622 = vmatprep.subr.bf16.mxu0 0
      %623 = vmatpush1.bf16.xpose.msra.mxu0 0
      %624 = vmatprep.subr.bf16.mxu0 0
      %625 = vmatpush1.bf16.xpose.msra.mxu0 0
      %626 = vmatprep.subr.bf16.mxu0 0
      %627 = vmatpush1.bf16.xpose.msra.mxu0 0
      %628 = vmatprep.subr.bf16.mxu0 0
      %629 = vmatpush1.bf16.xpose.msra.mxu0 0
      %630 = vmatprep.subr.bf16.mxu0 0
      %631 = vmatpush1.bf16.xpose.msra.mxu0 0
      %632 = vmatprep.subr.bf16.mxu0 0
      %633 = vmatpush1.bf16.xpose.msra.mxu0 0
      %634 = vmatprep.subr.bf16.mxu0 0
      %635 = vmatpush1.bf16.xpose.msra.mxu0 0
      %636 = vmatprep.subr.bf16.mxu0 0
      %637 = vmatpush1.bf16.xpose.msra.mxu0 0
      %638 = vmatprep.subr.bf16.mxu0 0
      %639 = vmatpush1.bf16.xpose.msra.mxu0 0
      %640 = vmatprep.subr.bf16.mxu0 0
      %641 = vmatpush1.bf16.xpose.msra.mxu0 0
      %642 = vmatprep.mubr.bf16.mxu0 0
      %643 = vmatmul.mubr.bf16.gmra.mrb[0].mxu0 %v605
      %v644 = vpop.f32.mrb[0].mxu0
      %v645 = vadd.f32 %v598, %v644
      %v646 = vpop.f32.mrb[0].mxu0
      %v647 = vpop.f32.mrb[0].mxu0
      %v648 = vadd.f32 %v599, %v647
      %v649 = vpop.f32.mrb[0].mxu0
      %650 = vdwg.mxu0
      %651 = vrot.lane.b32.xlu0 %v350, 120
      %v652 = vpop.permute.xlu0 %651
      %653 = vrot.lane.b32.xlu0 %v350, 88
      %v654 = vpop.permute.xlu0 %653
      %v656 = vsel %vm356, %v652, 0
      %v659 = vsel %vm356, %v654, 0
      %661 = vmatprep.subr.bf16.mxu0 0
      %662 = vmatpush1.bf16.xpose.msra.mxu0 %v659
      %663 = vmatprep.subr.bf16.mxu0 0
      %664 = vmatpush1.bf16.xpose.msra.mxu0 0
      %665 = vmatprep.subr.bf16.mxu0 0
      %666 = vmatpush1.bf16.xpose.msra.mxu0 0
      %667 = vmatprep.subr.bf16.mxu0 0
      %668 = vmatpush1.bf16.xpose.msra.mxu0 0
      %669 = vmatprep.subr.bf16.mxu0 0
      %670 = vmatpush1.bf16.xpose.msra.mxu0 0
      %671 = vmatprep.subr.bf16.mxu0 0
      %672 = vmatpush1.bf16.xpose.msra.mxu0 0
      %673 = vmatprep.subr.bf16.mxu0 0
      %674 = vmatpush1.bf16.xpose.msra.mxu0 0
      %675 = vmatprep.subr.bf16.mxu0 0
      %676 = vmatpush1.bf16.xpose.msra.mxu0 0
      %677 = vmatprep.subr.bf16.mxu0 0
      %678 = vmatpush1.bf16.xpose.msra.mxu0 0
      %679 = vmatprep.subr.bf16.mxu0 0
      %680 = vmatpush1.bf16.xpose.msra.mxu0 0
      %681 = vmatprep.subr.bf16.mxu0 0
      %682 = vmatpush1.bf16.xpose.msra.mxu0 0
      %683 = vmatprep.subr.bf16.mxu0 0
      %684 = vmatpush1.bf16.xpose.msra.mxu0 0
      %685 = vmatprep.subr.bf16.mxu0 0
      %686 = vmatpush1.bf16.xpose.msra.mxu0 0
      %687 = vmatprep.subr.bf16.mxu0 0
      %688 = vmatpush1.bf16.xpose.msra.mxu0 0
      %689 = vmatprep.subr.bf16.mxu0 0
      %690 = vmatpush1.bf16.xpose.msra.mxu0 0
      %691 = vmatprep.subr.bf16.mxu0 0
      %692 = vmatpush1.bf16.xpose.msra.mxu0 0
      %693 = vmatprep.mubr.bf16.mxu0 0
      %694 = vmatmul.mubr.bf16.gmra.mrb[0].mxu0 %v656
      %v695 = vpop.f32.mrb[0].mxu0
      %v696 = vadd.f32 %v598, %v695
      %v697 = vpop.f32.mrb[0].mxu0
      %v698 = vpop.f32.mrb[0].mxu0
      %v699 = vadd.f32 %v599, %v698
      %v700 = vpop.f32.mrb[0].mxu0
      %701 = vdwg.mxu0
      %v702 = vsel %vm454, %v645, -inf
      %703 = vmax.xlane.f32.xlu0 %v702
      %v704 = vpop.xlane.xlu0 %703
      %v705 = vsel %vm454, %v648, -inf
      %706 = vmax.xlane.f32.xlu0 %v705
      %v707 = vpop.xlane.xlu0 %706
      %v708 = vsel %vm454, %v696, -inf
      %709 = vmax.xlane.f32.xlu0 %v708
      %v710 = vpop.xlane.xlu0 %709
      %v711 = vsel %vm454, %v699, -inf
      %712 = vmax.xlane.f32.xlu0 %v711
      %v713 = vpop.xlane.xlu0 %712
      %v714 = vsub.f32 %v645, %v704
      %v715 = vsub.f32 %v648, %v707
      %v716 = vsub.f32 %v696, %v710
      %v717 = vsub.f32 %v699, %v713
      %v718 = vmul.f32 %v714, 1.442695
      %v719 = vpow.pop %v718
      %v720 = vmul.f32 %v715, 1.442695
      %v721 = vpow.pop %v720
      %v722 = vmul.f32 %v716, 1.442695
      %v723 = vpow.pop %v722
      %v724 = vmul.f32 %v717, 1.442695
      %v725 = vpow.pop %v724
      %v726 = vsel %vm454, %v719, 0.0
      %727 = vadd.xlane.f32.xlu0 %v726
      %v728 = vpop.xlane.xlu0 %727
      %v729 = vsel %vm454, %v721, 0.0
      %730 = vadd.xlane.f32.xlu0 %v729
      %v731 = vpop.xlane.xlu0 %730
      %v732 = vsel %vm454, %v723, 0.0
      %733 = vadd.xlane.f32.xlu0 %v732
      %v734 = vpop.xlane.xlu0 %733
      %v735 = vsel %vm454, %v725, 0.0
      %736 = vadd.xlane.f32.xlu0 %v735
      %v737 = vpop.xlane.xlu0 %736
      %v738 = vrcp.pop %v728
      %v739 = vrcp.pop %v731
      %v740 = vrcp.pop %v734
      %v741 = vrcp.pop %v737
      %v742 = vmul.f32 %v719, %v738
      %v743 = vmul.f32 %v721, %v739
      %v744 = vmul.f32 %v723, %v740
      %v745 = vmul.f32 %v725, %v741
      %v746 = vpack.c.bf16 %v743, %v742
      %v747 = vpack.c.bf16 %v745, %v744
      %748 = vrot.lane.b32.xlu0 %v349, 56
      %v749 = vpop.permute.xlu0 %748
      %v752 = vsel %vm454, %v746, 0
      %754 = vmatprep.subr.bf16.mxu0 0
      %755 = vmatpush1.bf16.msra.mxu0 %v749
      %756 = vmatprep.subr.bf16.mxu0 0
      %757 = vmatpush1.bf16.msra.mxu0 0
      %758 = vmatprep.subr.bf16.mxu0 0
      %759 = vmatpush1.bf16.msra.mxu0 0
      %760 = vmatprep.subr.bf16.mxu0 0
      %761 = vmatpush1.bf16.msra.mxu0 0
      %762 = vmatprep.subr.bf16.mxu0 0
      %763 = vmatpush1.bf16.msra.mxu0 0
      %764 = vmatprep.subr.bf16.mxu0 0
      %765 = vmatpush1.bf16.msra.mxu0 0
      %766 = vmatprep.subr.bf16.mxu0 0
      %767 = vmatpush1.bf16.msra.mxu0 0
      %768 = vmatprep.subr.bf16.mxu0 0
      %769 = vmatpush1.bf16.msra.mxu0 0
      %770 = vmatprep.subr.bf16.mxu0 0
      %771 = vmatpush1.bf16.msra.mxu0 0
      %772 = vmatprep.subr.bf16.mxu0 0
      %773 = vmatpush1.bf16.msra.mxu0 0
      %774 = vmatprep.subr.bf16.mxu0 0
      %775 = vmatpush1.bf16.msra.mxu0 0
      %776 = vmatprep.subr.bf16.mxu0 0
      %777 = vmatpush1.bf16.msra.mxu0 0
      %778 = vmatprep.subr.bf16.mxu0 0
      %779 = vmatpush1.bf16.msra.mxu0 0
      %780 = vmatprep.subr.bf16.mxu0 0
      %781 = vmatpush1.bf16.msra.mxu0 0
      %782 = vmatprep.subr.bf16.mxu0 0
      %783 = vmatpush1.bf16.msra.mxu0 0
      %784 = vmatprep.subr.bf16.mxu0 0
      %785 = vmatpush1.bf16.msra.mxu0 0
      %786 = vmatprep.mubr.bf16.mxu0 0
      %787 = vmatmul.mubr.bf16.gmra.mrb[0].mxu0 %v752
      %v788 = vpop.f32.mrb[0].mxu0
      %v789 = vadd.f32 0.0, %v788
      %v790 = vpop.f32.mrb[0].mxu0
      %v791 = vpop.f32.mrb[0].mxu0
      %v792 = vadd.f32 0.0, %v791
      %v793 = vpop.f32.mrb[0].mxu0
      %794 = vdwg.mxu0
      %795 = vrot.lane.b32.xlu0 %v350, 56
      %v796 = vpop.permute.xlu0 %795
      %v799 = vsel %vm454, %v747, 0
      %801 = vmatprep.subr.bf16.mxu0 0
      %802 = vmatpush1.bf16.msra.mxu0 %v796
      %803 = vmatprep.subr.bf16.mxu0 0
      %804 = vmatpush1.bf16.msra.mxu0 0
      %805 = vmatprep.subr.bf16.mxu0 0
      %806 = vmatpush1.bf16.msra.mxu0 0
      %807 = vmatprep.subr.bf16.mxu0 0
      %808 = vmatpush1.bf16.msra.mxu0 0
      %809 = vmatprep.subr.bf16.mxu0 0
      %810 = vmatpush1.bf16.msra.mxu0 0
      %811 = vmatprep.subr.bf16.mxu0 0
      %812 = vmatpush1.bf16.msra.mxu0 0
      %813 = vmatprep.subr.bf16.mxu0 0
      %814 = vmatpush1.bf16.msra.mxu0 0
      %815 = vmatprep.subr.bf16.mxu0 0
      %816 = vmatpush1.bf16.msra.mxu0 0
      %817 = vmatprep.subr.bf16.mxu0 0
      %818 = vmatpush1.bf16.msra.mxu0 0
      %819 = vmatprep.subr.bf16.mxu0 0
      %820 = vmatpush1.bf16.msra.mxu0 0
      %821 = vmatprep.subr.bf16.mxu0 0
      %822 = vmatpush1.bf16.msra.mxu0 0
      %823 = vmatprep.subr.bf16.mxu0 0
      %824 = vmatpush1.bf16.msra.mxu0 0
      %825 = vmatprep.subr.bf16.mxu0 0
      %826 = vmatpush1.bf16.msra.mxu0 0
      %827 = vmatprep.subr.bf16.mxu0 0
      %828 = vmatpush1.bf16.msra.mxu0 0
      %829 = vmatprep.subr.bf16.mxu0 0
      %830 = vmatpush1.bf16.msra.mxu0 0
      %831 = vmatprep.subr.bf16.mxu0 0
      %832 = vmatpush1.bf16.msra.mxu0 0
      %833 = vmatprep.mubr.bf16.mxu0 0
      %834 = vmatmul.mubr.bf16.gmra.mrb[0].mxu0 %v799
      %v835 = vpop.f32.mrb[0].mxu0
      %v836 = vadd.f32 0.0, %v835
      %v837 = vpop.f32.mrb[0].mxu0
      %v838 = vpop.f32.mrb[0].mxu0
      %v839 = vadd.f32 0.0, %v838
      %v840 = vpop.f32.mrb[0].mxu0
      %841 = vdwg.mxu0
      %v842 = vpack.c.bf16 %v792, %v789
      %v843 = vpack.c.bf16 %v839, %v836
      %s844 = scalar_lea.vmem %s5, 32
      %v845 = vld [vmem:[%s844] sm:$0xff]
      %v846 = vld [vmem:[%s844 + $0x8] sm:$0xff]
      %847 = vrot.lane.b32.xlu0 %v349, 112
      %v848 = vpop.permute.xlu0 %847
      %849 = vrot.lane.b32.xlu0 %v349, 80
      %v850 = vpop.permute.xlu0 %849
      %v852 = vsel %vm356, %v848, 0
      %v855 = vsel %vm356, %v850, 0
      %857 = vmatprep.subr.bf16.mxu0 0
      %858 = vmatpush1.bf16.xpose.msra.mxu0 %v855
      %859 = vmatprep.subr.bf16.mxu0 0
      %860 = vmatpush1.bf16.xpose.msra.mxu0 0
      %861 = vmatprep.subr.bf16.mxu0 0
      %862 = vmatpush1.bf16.xpose.msra.mxu0 0
      %863 = vmatprep.subr.bf16.mxu0 0
      %864 = vmatpush1.bf16.xpose.msra.mxu0 0
      %865 = vmatprep.subr.bf16.mxu0 0
      %866 = vmatpush1.bf16.xpose.msra.mxu0 0
      %867 = vmatprep.subr.bf16.mxu0 0
      %868 = vmatpush1.bf16.xpose.msra.mxu0 0
      %869 = vmatprep.subr.bf16.mxu0 0
      %870 = vmatpush1.bf16.xpose.msra.mxu0 0
      %871 = vmatprep.subr.bf16.mxu0 0
      %872 = vmatpush1.bf16.xpose.msra.mxu0 0
      %873 = vmatprep.subr.bf16.mxu0 0
      %874 = vmatpush1.bf16.xpose.msra.mxu0 0
      %875 = vmatprep.subr.bf16.mxu0 0
      %876 = vmatpush1.bf16.xpose.msra.mxu0 0
      %877 = vmatprep.subr.bf16.mxu0 0
      %878 = vmatpush1.bf16.xpose.msra.mxu0 0
      %879 = vmatprep.subr.bf16.mxu0 0
      %880 = vmatpush1.bf16.xpose.msra.mxu0 0
      %881 = vmatprep.subr.bf16.mxu0 0
      %882 = vmatpush1.bf16.xpose.msra.mxu0 0
      %883 = vmatprep.subr.bf16.mxu0 0
      %884 = vmatpush1.bf16.xpose.msra.mxu0 0
      %885 = vmatprep.subr.bf16.mxu0 0
      %886 = vmatpush1.bf16.xpose.msra.mxu0 0
      %887 = vmatprep.subr.bf16.mxu0 0
      %888 = vmatpush1.bf16.xpose.msra.mxu0 0
      %889 = vmatprep.mubr.bf16.mxu0 0
      %890 = vmatmul.mubr.bf16.gmra.mrb[0].mxu0 %v852
      %v891 = vpop.f32.mrb[0].mxu0
      %v892 = vadd.f32 %v845, %v891
      %v893 = vpop.f32.mrb[0].mxu0
      %v894 = vpop.f32.mrb[0].mxu0
      %v895 = vadd.f32 %v846, %v894
      %v896 = vpop.f32.mrb[0].mxu0
      %897 = vdwg.mxu0
      %898 = vrot.lane.b32.xlu0 %v350, 112
      %v899 = vpop.permute.xlu0 %898
      %900 = vrot.lane.b32.xlu0 %v350, 80
      %v901 = vpop.permute.xlu0 %900
      %v903 = vsel %vm356, %v899, 0
      %v906 = vsel %vm356, %v901, 0
      %908 = vmatprep.subr.bf16.mxu0 0
      %909 = vmatpush1.bf16.xpose.msra.mxu0 %v906
      %910 = vmatprep.subr.bf16.mxu0 0
      %911 = vmatpush1.bf16.xpose.msra.mxu0 0
      %912 = vmatprep.subr.bf16.mxu0 0
      %913 = vmatpush1.bf16.xpose.msra.mxu0 0
      %914 = vmatprep.subr.bf16.mxu0 0
      %915 = vmatpush1.bf16.xpose.msra.mxu0 0
      %916 = vmatprep.subr.bf16.mxu0 0
      %917 = vmatpush1.bf16.xpose.msra.mxu0 0
      %918 = vmatprep.subr.bf16.mxu0 0
      %919 = vmatpush1.bf16.xpose.msra.mxu0 0
      %920 = vmatprep.subr.bf16.mxu0 0
      %921 = vmatpush1.bf16.xpose.msra.mxu0 0
      %922 = vmatprep.subr.bf16.mxu0 0
      %923 = vmatpush1.bf16.xpose.msra.mxu0 0
      %924 = vmatprep.subr.bf16.mxu0 0
      %925 = vmatpush1.bf16.xpose.msra.mxu0 0
      %926 = vmatprep.subr.bf16.mxu0 0
      %927 = vmatpush1.bf16.xpose.msra.mxu0 0
      %928 = vmatprep.subr.bf16.mxu0 0
      %929 = vmatpush1.bf16.xpose.msra.mxu0 0
      %930 = vmatprep.subr.bf16.mxu0 0
      %931 = vmatpush1.bf16.xpose.msra.mxu0 0
      %932 = vmatprep.subr.bf16.mxu0 0
      %933 = vmatpush1.bf16.xpose.msra.mxu0 0
      %934 = vmatprep.subr.bf16.mxu0 0
      %935 = vmatpush1.bf16.xpose.msra.mxu0 0
      %936 = vmatprep.subr.bf16.mxu0 0
      %937 = vmatpush1.bf16.xpose.msra.mxu0 0
      %938 = vmatprep.subr.bf16.mxu0 0
      %939 = vmatpush1.bf16.xpose.msra.mxu0 0
      %940 = vmatprep.mubr.bf16.mxu0 0
      %941 = vmatmul.mubr.bf16.gmra.mrb[0].mxu0 %v903
      %v942 = vpop.f32.mrb[0].mxu0
      %v943 = vadd.f32 %v845, %v942
      %v944 = vpop.f32.mrb[0].mxu0
      %v945 = vpop.f32.mrb[0].mxu0
      %v946 = vadd.f32 %v846, %v945
      %v947 = vpop.f32.mrb[0].mxu0
      %948 = vdwg.mxu0
      %v949 = vsel %vm454, %v892, -inf
      %950 = vmax.xlane.f32.xlu0 %v949
      %v951 = vpop.xlane.xlu0 %950
      %v952 = vsel %vm454, %v895, -inf
      %953 = vmax.xlane.f32.xlu0 %v952
      %v954 = vpop.xlane.xlu0 %953
      %v955 = vsel %vm454, %v943, -inf
      %956 = vmax.xlane.f32.xlu0 %v955
      %v957 = vpop.xlane.xlu0 %956
      %v958 = vsel %vm454, %v946, -inf
      %959 = vmax.xlane.f32.xlu0 %v958
      %v960 = vpop.xlane.xlu0 %959
      %v961 = vsub.f32 %v892, %v951
      %v962 = vsub.f32 %v895, %v954
      %v963 = vsub.f32 %v943, %v957
      %v964 = vsub.f32 %v946, %v960
      %v965 = vmul.f32 %v961, 1.442695
      %v966 = vpow.pop %v965
      %v967 = vmul.f32 %v962, 1.442695
      %v968 = vpow.pop %v967
      %v969 = vmul.f32 %v963, 1.442695
      %v970 = vpow.pop %v969
      %v971 = vmul.f32 %v964, 1.442695
      %v972 = vpow.pop %v971
      %v973 = vsel %vm454, %v966, 0.0
      %974 = vadd.xlane.f32.xlu0 %v973
      %v975 = vpop.xlane.xlu0 %974
      %v976 = vsel %vm454, %v968, 0.0
      %977 = vadd.xlane.f32.xlu0 %v976
      %v978 = vpop.xlane.xlu0 %977
      %v979 = vsel %vm454, %v970, 0.0
      %980 = vadd.xlane.f32.xlu0 %v979
      %v981 = vpop.xlane.xlu0 %980
      %v982 = vsel %vm454, %v972, 0.0
      %983 = vadd.xlane.f32.xlu0 %v982
      %v984 = vpop.xlane.xlu0 %983
      %v985 = vrcp.pop %v975
      %v986 = vrcp.pop %v978
      %v987 = vrcp.pop %v981
      %v988 = vrcp.pop %v984
      %v989 = vmul.f32 %v966, %v985
      %v990 = vmul.f32 %v968, %v986
      %v991 = vmul.f32 %v970, %v987
      %v992 = vmul.f32 %v972, %v988
      %v993 = vpack.c.bf16 %v990, %v989
      %v994 = vpack.c.bf16 %v992, %v991
      %995 = vrot.lane.b32.xlu0 %v349, 48
      %v996 = vpop.permute.xlu0 %995
      %v999 = vsel %vm454, %v993, 0
      %1001 = vmatprep.subr.bf16.mxu0 0
      %1002 = vmatpush1.bf16.msra.mxu0 %v996
      %1003 = vmatprep.subr.bf16.mxu0 0
      %1004 = vmatpush1.bf16.msra.mxu0 0
      %1005 = vmatprep.subr.bf16.mxu0 0
      %1006 = vmatpush1.bf16.msra.mxu0 0
      %1007 = vmatprep.subr.bf16.mxu0 0
      %1008 = vmatpush1.bf16.msra.mxu0 0
      %1009 = vmatprep.subr.bf16.mxu0 0
      %1010 = vmatpush1.bf16.msra.mxu0 0
      %1011 = vmatprep.subr.bf16.mxu0 0
      %1012 = vmatpush1.bf16.msra.mxu0 0
      %1013 = vmatprep.subr.bf16.mxu0 0
      %1014 = vmatpush1.bf16.msra.mxu0 0
      %1015 = vmatprep.subr.bf16.mxu0 0
      %1016 = vmatpush1.bf16.msra.mxu0 0
      %1017 = vmatprep.subr.bf16.mxu0 0
      %1018 = vmatpush1.bf16.msra.mxu0 0
      %1019 = vmatprep.subr.bf16.mxu0 0
      %1020 = vmatpush1.bf16.msra.mxu0 0
      %1021 = vmatprep.subr.bf16.mxu0 0
      %1022 = vmatpush1.bf16.msra.mxu0 0
      %1023 = vmatprep.subr.bf16.mxu0 0
      %1024 = vmatpush1.bf16.msra.mxu0 0
      %1025 = vmatprep.subr.bf16.mxu0 0
      %1026 = vmatpush1.bf16.msra.mxu0 0
      %1027 = vmatprep.subr.bf16.mxu0 0
      %1028 = vmatpush1.bf16.msra.mxu0 0
      %1029 = vmatprep.subr.bf16.mxu0 0
      %1030 = vmatpush1.bf16.msra.mxu0 0
      %1031 = vmatprep.subr.bf16.mxu0 0
      %1032 = vmatpush1.bf16.msra.mxu0 0
      %1033 = vmatprep.mubr.bf16.mxu0 0
      %1034 = vmatmul.mubr.bf16.gmra.mrb[0].mxu0 %v999
      %v1035 = vpop.f32.mrb[0].mxu0
      %v1036 = vadd.f32 0.0, %v1035
      %v1037 = vpop.f32.mrb[0].mxu0
      %v1038 = vpop.f32.mrb[0].mxu0
      %v1039 = vadd.f32 0.0, %v1038
      %v1040 = vpop.f32.mrb[0].mxu0
      %1041 = vdwg.mxu0
      %1042 = vrot.lane.b32.xlu0 %v350, 48
      %v1043 = vpop.permute.xlu0 %1042
      %v1046 = vsel %vm454, %v994, 0
      %1048 = vmatprep.subr.bf16.mxu0 0
      %1049 = vmatpush1.bf16.msra.mxu0 %v1043
      %1050 = vmatprep.subr.bf16.mxu0 0
      %1051 = vmatpush1.bf16.msra.mxu0 0
      %1052 = vmatprep.subr.bf16.mxu0 0
      %1053 = vmatpush1.bf16.msra.mxu0 0
      %1054 = vmatprep.subr.bf16.mxu0 0
      %1055 = vmatpush1.bf16.msra.mxu0 0
      %1056 = vmatprep.subr.bf16.mxu0 0
      %1057 = vmatpush1.bf16.msra.mxu0 0
      %1058 = vmatprep.subr.bf16.mxu0 0
      %1059 = vmatpush1.bf16.msra.mxu0 0
      %1060 = vmatprep.subr.bf16.mxu0 0
      %1061 = vmatpush1.bf16.msra.mxu0 0
      %1062 = vmatprep.subr.bf16.mxu0 0
      %1063 = vmatpush1.bf16.msra.mxu0 0
      %1064 = vmatprep.subr.bf16.mxu0 0
      %1065 = vmatpush1.bf16.msra.mxu0 0
      %1066 = vmatprep.subr.bf16.mxu0 0
      %1067 = vmatpush1.bf16.msra.mxu0 0
      %1068 = vmatprep.subr.bf16.mxu0 0
      %1069 = vmatpush1.bf16.msra.mxu0 0
      %1070 = vmatprep.subr.bf16.mxu0 0
      %1071 = vmatpush1.bf16.msra.mxu0 0
      %1072 = vmatprep.subr.bf16.mxu0 0
      %1073 = vmatpush1.bf16.msra.mxu0 0
      %1074 = vmatprep.subr.bf16.mxu0 0
      %1075 = vmatpush1.bf16.msra.mxu0 0
      %1076 = vmatprep.subr.bf16.mxu0 0
      %1077 = vmatpush1.bf16.msra.mxu0 0
      %1078 = vmatprep.subr.bf16.mxu0 0
      %1079 = vmatpush1.bf16.msra.mxu0 0
      %1080 = vmatprep.mubr.bf16.mxu0 0
      %1081 = vmatmul.mubr.bf16.gmra.mrb[0].mxu0 %v1046
      %v1082 = vpop.f32.mrb[0].mxu0
      %v1083 = vadd.f32 0.0, %v1082
      %v1084 = vpop.f32.mrb[0].mxu0
      %v1085 = vpop.f32.mrb[0].mxu0
      %v1086 = vadd.f32 0.0, %v1085
      %v1087 = vpop.f32.mrb[0].mxu0
      %1088 = vdwg.mxu0
      %v1089 = vpack.c.bf16 %v1039, %v1036
      %v1090 = vpack.c.bf16 %v1086, %v1083
      %s1091 = scalar_lea.vmem %s5, 48
      %v1092 = vld [vmem:[%s1091] sm:$0xff]
      %v1093 = vld [vmem:[%s1091 + $0x8] sm:$0xff]
      %1094 = vrot.lane.b32.xlu0 %v349, 104
      %v1095 = vpop.permute.xlu0 %1094
      %1096 = vrot.lane.b32.xlu0 %v349, 72
      %v1097 = vpop.permute.xlu0 %1096
      %v1099 = vsel %vm356, %v1095, 0
      %v1102 = vsel %vm356, %v1097, 0
      %1104 = vmatprep.subr.bf16.mxu0 0
      %1105 = vmatpush1.bf16.xpose.msra.mxu0 %v1102
      %1106 = vmatprep.subr.bf16.mxu0 0
      %1107 = vmatpush1.bf16.xpose.msra.mxu0 0
      %1108 = vmatprep.subr.bf16.mxu0 0
      %1109 = vmatpush1.bf16.xpose.msra.mxu0 0
      %1110 = vmatprep.subr.bf16.mxu0 0
      %1111 = vmatpush1.bf16.xpose.msra.mxu0 0
      %1112 = vmatprep.subr.bf16.mxu0 0
      %1113 = vmatpush1.bf16.xpose.msra.mxu0 0
      %1114 = vmatprep.subr.bf16.mxu0 0
      %1115 = vmatpush1.bf16.xpose.msra.mxu0 0
      %1116 = vmatprep.subr.bf16.mxu0 0
      %1117 = vmatpush1.bf16.xpose.msra.mxu0 0
      %1118 = vmatprep.subr.bf16.mxu0 0
      %1119 = vmatpush1.bf16.xpose.msra.mxu0 0
      %1120 = vmatprep.subr.bf16.mxu0 0
      %1121 = vmatpush1.bf16.xpose.msra.mxu0 0
      %1122 = vmatprep.subr.bf16.mxu0 0
      %1123 = vmatpush1.bf16.xpose.msra.mxu0 0
      %1124 = vmatprep.subr.bf16.mxu0 0
      %1125 = vmatpush1.bf16.xpose.msra.mxu0 0
      %1126 = vmatprep.subr.bf16.mxu0 0
      %1127 = vmatpush1.bf16.xpose.msra.mxu0 0
      %1128 = vmatprep.subr.bf16.mxu0 0
      %1129 = vmatpush1.bf16.xpose.msra.mxu0 0
      %1130 = vmatprep.subr.bf16.mxu0 0
      %1131 = vmatpush1.bf16.xpose.msra.mxu0 0
      %1132 = vmatprep.subr.bf16.mxu0 0
      %1133 = vmatpush1.bf16.xpose.msra.mxu0 0
      %1134 = vmatprep.subr.bf16.mxu0 0
      %1135 = vmatpush1.bf16.xpose.msra.mxu0 0
      %1136 = vmatprep.mubr.bf16.mxu0 0
      %1137 = vmatmul.mubr.bf16.gmra.mrb[0].mxu0 %v1099
      %v1138 = vpop.f32.mrb[0].mxu0
      %v1139 = vadd.f32 %v1092, %v1138
      %v1140 = vpop.f32.mrb[0].mxu0
      %v1141 = vpop.f32.mrb[0].mxu0
      %v1142 = vadd.f32 %v1093, %v1141
      %v1143 = vpop.f32.mrb[0].mxu0
      %1144 = vdwg.mxu0
      %1145 = vrot.lane.b32.xlu0 %v350, 104
      %v1146 = vpop.permute.xlu0 %1145
      %1147 = vrot.lane.b32.xlu0 %v350, 72
      %v1148 = vpop.permute.xlu0 %1147
      %v1150 = vsel %vm356, %v1146, 0
      %v1153 = vsel %vm356, %v1148, 0
      %1155 = vmatprep.subr.bf16.mxu0 0
      %1156 = vmatpush1.bf16.xpose.msra.mxu0 %v1153
      %1157 = vmatprep.subr.bf16.mxu0 0
      %1158 = vmatpush1.bf16.xpose.msra.mxu0 0
      %1159 = vmatprep.subr.bf16.mxu0 0
      %1160 = vmatpush1.bf16.xpose.msra.mxu0 0
      %1161 = vmatprep.subr.bf16.mxu0 0
      %1162 = vmatpush1.bf16.xpose.msra.mxu0 0
      %1163 = vmatprep.subr.bf16.mxu0 0
      %1164 = vmatpush1.bf16.xpose.msra.mxu0 0
      %1165 = vmatprep.subr.bf16.mxu0 0
      %1166 = vmatpush1.bf16.xpose.msra.mxu0 0
      %1167 = vmatprep.subr.bf16.mxu0 0
      %1168 = vmatpush1.bf16.xpose.msra.mxu0 0
      %1169 = vmatprep.subr.bf16.mxu0 0
      %1170 = vmatpush1.bf16.xpose.msra.mxu0 0
      %1171 = vmatprep.subr.bf16.mxu0 0
      %1172 = vmatpush1.bf16.xpose.msra.mxu0 0
      %1173 = vmatprep.subr.bf16.mxu0 0
      %1174 = vmatpush1.bf16.xpose.msra.mxu0 0
      %1175 = vmatprep.subr.bf16.mxu0 0
      %1176 = vmatpush1.bf16.xpose.msra.mxu0 0
      %1177 = vmatprep.subr.bf16.mxu0 0
      %1178 = vmatpush1.bf16.xpose.msra.mxu0 0
      %1179 = vmatprep.subr.bf16.mxu0 0
      %1180 = vmatpush1.bf16.xpose.msra.mxu0 0
      %1181 = vmatprep.subr.bf16.mxu0 0
      %1182 = vmatpush1.bf16.xpose.msra.mxu0 0
      %1183 = vmatprep.subr.bf16.mxu0 0
      %1184 = vmatpush1.bf16.xpose.msra.mxu0 0
      %1185 = vmatprep.subr.bf16.mxu0 0
      %1186 = vmatpush1.bf16.xpose.msra.mxu0 0
      %1187 = vmatprep.mubr.bf16.mxu0 0
      %1188 = vmatmul.mubr.bf16.gmra.mrb[0].mxu0 %v1150
      %v1189 = vpop.f32.mrb[0].mxu0
      %v1190 = vadd.f32 %v1092, %v1189
      %v1191 = vpop.f32.mrb[0].mxu0
      %v1192 = vpop.f32.mrb[0].mxu0
      %v1193 = vadd.f32 %v1093, %v1192
      %v1194 = vpop.f32.mrb[0].mxu0
      %1195 = vdwg.mxu0
      %v1196 = vsel %vm454, %v1139, -inf
      %1197 = vmax.xlane.f32.xlu0 %v1196
      %v1198 = vpop.xlane.xlu0 %1197
      %v1199 = vsel %vm454, %v1142, -inf
      %1200 = vmax.xlane.f32.xlu0 %v1199
      %v1201 = vpop.xlane.xlu0 %1200
      %v1202 = vsel %vm454, %v1190, -inf
      %1203 = vmax.xlane.f32.xlu0 %v1202
      %v1204 = vpop.xlane.xlu0 %1203
      %v1205 = vsel %vm454, %v1193, -inf
      %1206 = vmax.xlane.f32.xlu0 %v1205
      %v1207 = vpop.xlane.xlu0 %1206
      %v1208 = vsub.f32 %v1139, %v1198
      %v1209 = vsub.f32 %v1142, %v1201
      %v1210 = vsub.f32 %v1190, %v1204
      %v1211 = vsub.f32 %v1193, %v1207
      %v1212 = vmul.f32 %v1208, 1.442695
      %v1213 = vpow.pop %v1212
      %v1214 = vmul.f32 %v1209, 1.442695
      %v1215 = vpow.pop %v1214
      %v1216 = vmul.f32 %v1210, 1.442695
      %v1217 = vpow.pop %v1216
      %v1218 = vmul.f32 %v1211, 1.442695
      %v1219 = vpow.pop %v1218
      %v1220 = vsel %vm454, %v1213, 0.0
      %1221 = vadd.xlane.f32.xlu0 %v1220
      %v1222 = vpop.xlane.xlu0 %1221
      %v1223 = vsel %vm454, %v1215, 0.0
      %1224 = vadd.xlane.f32.xlu0 %v1223
      %v1225 = vpop.xlane.xlu0 %1224
      %v1226 = vsel %vm454, %v1217, 0.0
      %1227 = vadd.xlane.f32.xlu0 %v1226
      %v1228 = vpop.xlane.xlu0 %1227
      %v1229 = vsel %vm454, %v1219, 0.0
      %1230 = vadd.xlane.f32.xlu0 %v1229
      %v1231 = vpop.xlane.xlu0 %1230
      %v1232 = vrcp.pop %v1222
      %v1233 = vrcp.pop %v1225
      %v1234 = vrcp.pop %v1228
      %v1235 = vrcp.pop %v1231
      %v1236 = vmul.f32 %v1213, %v1232
      %v1237 = vmul.f32 %v1215, %v1233
      %v1238 = vmul.f32 %v1217, %v1234
      %v1239 = vmul.f32 %v1219, %v1235
      %v1240 = vpack.c.bf16 %v1237, %v1236
      %v1241 = vpack.c.bf16 %v1239, %v1238
      %1242 = vrot.lane.b32.xlu0 %v349, 40
      %v1243 = vpop.permute.xlu0 %1242
      %v1246 = vsel %vm454, %v1240, 0
      %1248 = vmatprep.subr.bf16.mxu0 0
      %1249 = vmatpush1.bf16.msra.mxu0 %v1243
      %1250 = vmatprep.subr.bf16.mxu0 0
      %1251 = vmatpush1.bf16.msra.mxu0 0
      %1252 = vmatprep.subr.bf16.mxu0 0
      %1253 = vmatpush1.bf16.msra.mxu0 0
      %1254 = vmatprep.subr.bf16.mxu0 0
      %1255 = vmatpush1.bf16.msra.mxu0 0
      %1256 = vmatprep.subr.bf16.mxu0 0
      %1257 = vmatpush1.bf16.msra.mxu0 0
      %1258 = vmatprep.subr.bf16.mxu0 0
      %1259 = vmatpush1.bf16.msra.mxu0 0
      %1260 = vmatprep.subr.bf16.mxu0 0
      %1261 = vmatpush1.bf16.msra.mxu0 0
      %1262 = vmatprep.subr.bf16.mxu0 0
      %1263 = vmatpush1.bf16.msra.mxu0 0
      %1264 = vmatprep.subr.bf16.mxu0 0
      %1265 = vmatpush1.bf16.msra.mxu0 0
      %1266 = vmatprep.subr.bf16.mxu0 0
      %1267 = vmatpush1.bf16.msra.mxu0 0
      %1268 = vmatprep.subr.bf16.mxu0 0
      %1269 = vmatpush1.bf16.msra.mxu0 0
      %1270 = vmatprep.subr.bf16.mxu0 0
      %1271 = vmatpush1.bf16.msra.mxu0 0
      %1272 = vmatprep.subr.bf16.mxu0 0
      %1273 = vmatpush1.bf16.msra.mxu0 0
      %1274 = vmatprep.subr.bf16.mxu0 0
      %1275 = vmatpush1.bf16.msra.mxu0 0
      %1276 = vmatprep.subr.bf16.mxu0 0
      %1277 = vmatpush1.bf16.msra.mxu0 0
      %1278 = vmatprep.subr.bf16.mxu0 0
      %1279 = vmatpush1.bf16.msra.mxu0 0
      %1280 = vmatprep.mubr.bf16.mxu0 0
      %1281 = vmatmul.mubr.bf16.gmra.mrb[0].mxu0 %v1246
      %v1282 = vpop.f32.mrb[0].mxu0
      %v1283 = vadd.f32 0.0, %v1282
      %v1284 = vpop.f32.mrb[0].mxu0
      %v1285 = vpop.f32.mrb[0].mxu0
      %v1286 = vadd.f32 0.0, %v1285
      %v1287 = vpop.f32.mrb[0].mxu0
      %1288 = vdwg.mxu0
      %1289 = vrot.lane.b32.xlu0 %v350, 40
      %v1290 = vpop.permute.xlu0 %1289
      %v1293 = vsel %vm454, %v1241, 0
      %1295 = vmatprep.subr.bf16.mxu0 0
      %1296 = vmatpush1.bf16.msra.mxu0 %v1290
      %1297 = vmatprep.subr.bf16.mxu0 0
      %1298 = vmatpush1.bf16.msra.mxu0 0
      %1299 = vmatprep.subr.bf16.mxu0 0
      %1300 = vmatpush1.bf16.msra.mxu0 0
      %1301 = vmatprep.subr.bf16.mxu0 0
      %1302 = vmatpush1.bf16.msra.mxu0 0
      %1303 = vmatprep.subr.bf16.mxu0 0
      %1304 = vmatpush1.bf16.msra.mxu0 0
      %1305 = vmatprep.subr.bf16.mxu0 0
      %1306 = vmatpush1.bf16.msra.mxu0 0
      %1307 = vmatprep.subr.bf16.mxu0 0
      %1308 = vmatpush1.bf16.msra.mxu0 0
      %1309 = vmatprep.subr.bf16.mxu0 0
      %1310 = vmatpush1.bf16.msra.mxu0 0
      %1311 = vmatprep.subr.bf16.mxu0 0
      %1312 = vmatpush1.bf16.msra.mxu0 0
      %1313 = vmatprep.subr.bf16.mxu0 0
      %1314 = vmatpush1.bf16.msra.mxu0 0
      %1315 = vmatprep.subr.bf16.mxu0 0
      %1316 = vmatpush1.bf16.msra.mxu0 0
      %1317 = vmatprep.subr.bf16.mxu0 0
      %1318 = vmatpush1.bf16.msra.mxu0 0
      %1319 = vmatprep.subr.bf16.mxu0 0
      %1320 = vmatpush1.bf16.msra.mxu0 0
      %1321 = vmatprep.subr.bf16.mxu0 0
      %1322 = vmatpush1.bf16.msra.mxu0 0
      %1323 = vmatprep.subr.bf16.mxu0 0
      %1324 = vmatpush1.bf16.msra.mxu0 0
      %1325 = vmatprep.subr.bf16.mxu0 0
      %1326 = vmatpush1.bf16.msra.mxu0 0
      %1327 = vmatprep.mubr.bf16.mxu0 0
      %1328 = vmatmul.mubr.bf16.gmra.mrb[0].mxu0 %v1293
      %v1329 = vpop.f32.mrb[0].mxu0
      %v1330 = vadd.f32 0.0, %v1329
      %v1331 = vpop.f32.mrb[0].mxu0
      %v1332 = vpop.f32.mrb[0].mxu0
      %v1333 = vadd.f32 0.0, %v1332
      %v1334 = vpop.f32.mrb[0].mxu0
      %1335 = vdwg.mxu0
      %v1336 = vpack.c.bf16 %v1286, %v1283
      %v1337 = vpack.c.bf16 %v1333, %v1330
      %1340 = vrot.lane.b32.xlu0 %v842, 8
      %v1341 = vpop.permute.xlu0 %1340
      %1342 = vrot.lane.b32.xlu0 %v843, 8
      %v1343 = vpop.permute.xlu0 %1342
      %1346 = vrot.lane.b32.xlu0 %v1089, 16
      %v1347 = vpop.permute.xlu0 %1346
      %1348 = vrot.lane.b32.xlu0 %v1090, 16
      %v1349 = vpop.permute.xlu0 %1348
      %1352 = vrot.lane.b32.xlu0 %v1336, 24
      %v1353 = vpop.permute.xlu0 %1352
      %1354 = vrot.lane.b32.xlu0 %v1337, 24
      %v1355 = vpop.permute.xlu0 %1354
      %v1358 = vsel %vm356, %v595, %v1341
      %v1361 = vsel %vm356, %v596, %v1343
      %v1363 = vsel %vm454, %v1358, %v1347
      %v1365 = vsel %vm454, %v1361, %v1349
      %vm1366 = vcmask 195584
      %v1368 = vsel %vm1366, %v1363, %v1353
      %v1370 = vsel %vm1366, %v1365, %v1355
      %v1371 = vld [vmem:[%s3] sm:$0xf]
      %v1372 = vld [vmem:[%s3 + $0x4] sm:$0xf]
      %v1373 = vld [vmem:[%s3 + $0x8] sm:$0xf]
      %v1374 = vld [vmem:[%s3 + $0xc] sm:$0xf]
      %v1375 = vld [vmem:[%s4] sm:$0x1]
      %v1377 = vlaneseq
      %v1378 = vshrl.u32 %v1377, 7
      %v1379 = vsub.s32 0, %v1378
      %v1380 = vrot.slane %v1375, %v1379
      %v1386 = vunpack.c.l.b16 %v1371
      %v1387 = vunpack.c.l.b16 %v1372
      %v1388 = vunpack.c.l.b16 %v1373
      %v1389 = vunpack.c.l.b16 %v1374
      %v1390 = vpack.c.b16 %v1387, %v1386
      %v1391 = vpack.c.b16 %v1389, %v1388
      %v1394 = vsel %vm293, %v1368, 0
      %v1396 = vsel %vm293, %v1370, 0
      %1398 = vmatprep.subr.bf16.mxu0 0
      %1399 = vmatpush1.bf16.msra.mxu0 %v1390
      %1400 = vmatprep.subr.bf16.mxu0 0
      %1401 = vmatpush1.bf16.msra.mxu0 %v1391
      %1402 = vmatprep.subr.bf16.mxu0 0
      %1403 = vmatpush1.bf16.msra.mxu0 0
      %1404 = vmatprep.subr.bf16.mxu0 0
      %1405 = vmatpush1.bf16.msra.mxu0 0
      %1406 = vmatprep.subr.bf16.mxu0 0
      %1407 = vmatpush1.bf16.msra.mxu0 0
      %1408 = vmatprep.subr.bf16.mxu0 0
      %1409 = vmatpush1.bf16.msra.mxu0 0
      %1410 = vmatprep.subr.bf16.mxu0 0
      %1411 = vmatpush1.bf16.msra.mxu0 0
      %1412 = vmatprep.subr.bf16.mxu0 0
      %1413 = vmatpush1.bf16.msra.mxu0 0
      %1414 = vmatprep.subr.bf16.mxu0 0
      %1415 = vmatpush1.bf16.msra.mxu0 0
      %1416 = vmatprep.subr.bf16.mxu0 0
      %1417 = vmatpush1.bf16.msra.mxu0 0
      %1418 = vmatprep.subr.bf16.mxu0 0
      %1419 = vmatpush1.bf16.msra.mxu0 0
      %1420 = vmatprep.subr.bf16.mxu0 0
      %1421 = vmatpush1.bf16.msra.mxu0 0
      %1422 = vmatprep.subr.bf16.mxu0 0
      %1423 = vmatpush1.bf16.msra.mxu0 0
      %1424 = vmatprep.subr.bf16.mxu0 0
      %1425 = vmatpush1.bf16.msra.mxu0 0
      %1426 = vmatprep.subr.bf16.mxu0 0
      %1427 = vmatpush1.bf16.msra.mxu0 0
      %1428 = vmatprep.subr.bf16.mxu0 0
      %1429 = vmatpush1.bf16.msra.mxu0 0
      %1430 = vmatprep.mubr.bf16.mxu0 0
      %1431 = vmatmul.mubr.bf16.gmra.mrb[0].mxu0 %v1394
      %v1432 = vpop.f32.mrb[0].mxu0
      %v1433 = vadd.f32 %v1380, %v1432
      %v1434 = vpop.f32.mrb[0].mxu0
      %v1435 = vpop.f32.mrb[0].mxu0
      %v1436 = vadd.f32 %v1380, %v1435
      %v1437 = vpop.f32.mrb[0].mxu0
      %1438 = vmatprep.mubr.bf16.mxu0 0
      %1439 = vmatmul.mubr.bf16.gmra.mrb[0].mxu0 %v1396
      %v1440 = vpop.f32.mrb[0].mxu0
      %v1441 = vadd.f32 %v1380, %v1440
      %v1442 = vpop.f32.mrb[0].mxu0
      %v1443 = vpop.f32.mrb[0].mxu0
      %v1444 = vadd.f32 %v1380, %v1443
      %v1445 = vpop.f32.mrb[0].mxu0
      %1446 = vdwg.mxu0
      %1447 = vst.msk [vmem:[%s253] sm:$0xff] %vm293, %v1433
      %1448 = vst.msk [vmem:[%s253 + $0x8] sm:$0xff] %vm293, %v1436
      %1449 = vst.msk [vmem:[%s253 + $0x10] sm:$0xff] %vm293, %v1441
      %1450 = vst.msk [vmem:[%s253 + $0x18] sm:$0xff] %vm293, %v1444
      %s1451 = smul.u32 4, %s17
      %p1452 = scmp.lt.s32.totalorder %s1451, 15
      %s1453 = scalar_select %p1452, %s1451, 15
      %s1454 = smul.addr %s1453, 8
      %s1455 = scalar_lea.vmem %s6, %s1454
      // Predicated region
      $region45: #{tpu_custom_call.1} parent=43 // pred_check
        %p1456 = pneg %p166
      $region46: #{tpu_custom_call.1} parent=43 // pred_check_branch
        %1458 = sbr.rel (%p1456) target = $region48
      $region47: #{tpu_custom_call.1} parent=43 // pred_region
        %s1459 = smul.u32 4, %s17
      $region48: #{tpu_custom_call.1} parent=43 // pred_fallthru
        _
    $region44: #{tpu_custom_call.1} parent=5 // pred_fallthru
      _
    %p1460 = scmp.le.s32.totalorder 2, %s12
    // Predicated region
    $region49: #{tpu_custom_call.1} parent=5 // pred_check
      %p1461 = pneg %p1460
    $region50: #{tpu_custom_call.1} parent=5 // pred_check_branch
      %1463 = sbr.rel (%p1461) target = $region52
    $region51: #{tpu_custom_call.1} parent=5 // pred_region
      %s1464 = ssub.s32 %s12, 2
      // Predicated region
      $region53: #{tpu_custom_call.1} parent=51 // pred_check
        %p1465 = pneg %p172
      $region54: #{tpu_custom_call.1} parent=51 // pred_check_branch
        %1467 = sbr.rel (%p1465) target = $region56
      $region55: #{tpu_custom_call.1} parent=51 // pred_region
        %s1468 = smul.u32 4, %s18
        %p1469 = scmp.lt.s32.totalorder %s1468, 15
        %s1470 = scalar_select %p1469, %s1468, 15
        %s1471 = smul.addr %s1470, 8
        %s1472 = scalar_lea.vmem %s6, %s1471
      $region56: #{tpu_custom_call.1} parent=51 // pred_fallthru
        _
    $region52: #{tpu_custom_call.1} parent=5 // pred_fallthru
      _
  $region6: #{tpu_custom_call.1} parent=0 // loop_footer
    %s16 = sadd.s32 1, %s12
  $region7: #{tpu_custom_call.1} parent=0 // loop_footer_branch
    %11 = sbr.rel target = $region3
  $region8: #{tpu_custom_call.1} parent=0 // loop_exit
    _

</llo_original>
